<compile_context>
chip_gen: v7x
topology: tpu7x:2x2x1
jax: 0.10.0
libtpu: 0.0.40
codegen_flags: <defaults>
</compile_context>

<pallas_src>
import jax
import jax.numpy as jnp
from jax import lax
from jax.experimental import pallas as pl
from jax.experimental.pallas import tpu as pltpu


# ---------------------------------------------------------------------------
# Fused Pallas kernel
# ---------------------------------------------------------------------------
def _mnist_fused_kernel(x_ref, m1_ref, b1_ref, m2_ref, b2_ref,
                        wf1_ref, bf1_ref, wf2_ref, bf2_ref, o_ref):
    tb = x_ref.shape[1]                               # batch tile (multiple of 16)
    x = x_ref[...]                                    # (28, TB, 28) bf16

    # ---- conv1 (5x5, 1->10): ONE K=140 matmul -----------------------------
    # H-only im2col: LHS lane = kh*28 + w  ->  (24*TB, 140) bf16.
    lhs1 = jnp.concatenate([x[kh:kh + 24] for kh in range(5)], axis=-1)
    lhs1 = lhs1.reshape(24 * tb, 140)
    y1 = jnp.dot(lhs1, m1_ref[...], preferred_element_type=jnp.float32)
    y1 = y1 + b1_ref[...]                             # (24*TB, 256); lane = jc*10+o, 240..255 zero

    # 2x2 maxpool + ReLU. H pairs via leading-axis split; W pairs via a
    # 10-lane circular shift (wraparound lands only in don't-care lanes whose
    # rows are zeroed in the packed conv2 weights).
    y1 = y1.reshape(12, 2, tb, 256)
    hp1 = jnp.maximum(y1[:, 0], y1[:, 1])             # (12, TB, 256)
    h1 = jnp.maximum(jnp.maximum(hp1, jnp.roll(hp1, -10, axis=-1)), 0.0)
    h1 = h1.astype(jnp.bfloat16)                      # single bf16 cast for conv2

    # ---- conv2 (5x5, 10->20): ONE K=1280 matmul ----------------------------
    # LHS lane = kh*256 + (20*q + c); chunks are 256-lane aligned.
    # TODO(synk): Dropout2d(p=0.2) after conv2 is identity (inference mode only).
    lhs2 = jnp.concatenate([h1[kh:kh + 8] for kh in range(5)], axis=-1)
    lhs2 = lhs2.reshape(8 * tb, 1280)
    y2 = jnp.dot(lhs2, m2_ref[...], preferred_element_type=jnp.float32)
    y2 = y2 + b2_ref[...]                             # (8*TB, 256); lane = jc2*20+o, 160..255 zero

    y2 = y2.reshape(4, 2, tb, 256)
    hp2 = jnp.maximum(y2[:, 0], y2[:, 1])             # (4, TB, 256)
    h2 = jnp.maximum(jnp.maximum(hp2, jnp.roll(hp2, -20, axis=-1)), 0.0)
    h2 = h2.astype(jnp.bfloat16)                      # single bf16 cast for fc1

    # ---- fc1 + ReLU: ONE (TB, 1024) x (1024, 128) matmul -------------------
    # (NCHW flatten + even-lane selection folded into the packed wf1.)
    lhsf = jnp.concatenate([h2[s] for s in range(4)], axis=-1)   # (TB, 1024)
    hf = jnp.dot(lhsf, wf1_ref[...], preferred_element_type=jnp.float32)
    hf = jnp.maximum(hf + bf1_ref[...], 0.0)          # (TB, 128); cols 50..127 zero
    # TODO(synk): F.dropout(p=0.2, training=True) not implemented (identity).

    # ---- fc2 + softmax(dim=1); padded class lanes carry a -1e30 bias -------
    logits = jnp.dot(hf.astype(jnp.bfloat16), wf2_ref[...],
                     preferred_element_type=jnp.float32) + bf2_ref[...]
    m = jnp.max(logits, axis=-1, keepdims=True)
    e = jnp.exp(logits - m)                           # padded lanes underflow to 0
    denom = jnp.sum(e, axis=-1, keepdims=True)
    o_ref[...] = e * pl.reciprocal(denom, approx=True)


# ---------------------------------------------------------------------------
# One-time weight packing (outside the per-batch forward path)
# ---------------------------------------------------------------------------
def pack_params(params, dtype=jnp.bfloat16):
    c1w, c1b, c2w, c2b, f1w, f1b, f2w, f2b = params
    NEG = -1e30

    # conv1: m1[kh*28 + w, jc*10 + o] = c1w[o, 0, kh, w - jc] for 0 <= w-jc < 5.
    kh = jnp.arange(5)[:, None, None, None]
    w = jnp.arange(28)[None, :, None, None]
    jc = jnp.arange(24)[None, None, :, None]
    o = jnp.arange(10)[None, None, None, :]
    kw = w - jc
    m1v = jnp.where((kw >= 0) & (kw < 5),
                    c1w[o, 0, kh, jnp.clip(kw, 0, 4)], 0.0)       # (5,28,24,10)
    m1 = jnp.zeros((5, 28, 256), jnp.float32).at[:, :, :240].set(
        m1v.reshape(5, 28, 240))
    m1 = m1.reshape(140, 256).astype(dtype)
    b1 = jnp.zeros((1, 256), jnp.float32).at[0, :240].set(jnp.tile(c1b, 24))

    # conv2: m2[kh*256 + 20q + c, jc2*20 + o2] = c2w[o2, c, kh, q - jc2]
    # for 0 <= q-jc2 < 5; all other rows (odd pooled lanes, padding) are zero.
    kh = jnp.arange(5)[:, None, None, None, None]
    q = jnp.arange(12)[None, :, None, None, None]
    c = jnp.arange(10)[None, None, :, None, None]
    jc2 = jnp.arange(8)[None, None, None, :, None]
    o2 = jnp.arange(20)[None, None, None, None, :]
    kw = q - jc2
    m2v = jnp.where((kw >= 0) & (kw < 5),
                    c2w[o2, c, kh, jnp.clip(kw, 0, 4)], 0.0)      # (5,12,10,8,20)
    m2v = m2v.reshape(5, 120, 160)                                # rows ordered (q, c)
    rows2 = (jnp.arange(12)[:, None] * 20 + jnp.arange(10)[None, :]).reshape(-1)
    m2 = jnp.zeros((5, 256, 256), jnp.float32).at[:, rows2, :160].set(m2v)
    m2 = m2.reshape(1280, 256).astype(dtype)
    b2 = jnp.zeros((1, 256), jnp.float32).at[0, :160].set(jnp.tile(c2b, 8))

    # fc1: torch flat index = o2*16 + s*4 + r; kernel lane = s*256 + 40r + o2.
    f1r = f1w.reshape(50, 20, 4, 4)                               # (n, o2, s, r)
    f1t = jnp.transpose(f1r, (2, 3, 1, 0))                        # (s, r, o2, n)
    rowsf = (jnp.arange(4)[:, None] * 40 + jnp.arange(20)[None, :]).reshape(-1)
    wf1 = jnp.zeros((4, 256, 128), jnp.float32).at[:, rowsf, :50].set(
        f1t.reshape(4, 80, 50))
    wf1 = wf1.reshape(1024, 128).astype(dtype)
    bf1 = jnp.zeros((1, 128), jnp.float32).at[0, :50].set(f1b)

    # fc2: lane-dense 128-wide logits; padded classes get a -1e30 bias so the
    # in-kernel softmax assigns them probability 0.
    wf2 = jnp.zeros((128, 128), jnp.float32).at[:50, :10].set(f2w.T).astype(dtype)
    bf2 = jnp.full((1, 128), NEG, jnp.float32).at[0, :10].set(f2b)

    return (m1, b1, m2, b2, wf1, bf1, wf2, bf2)


# ---------------------------------------------------------------------------
# Forward wrapper: one pallas_call, batch-tiled "parallel" grid
# ---------------------------------------------------------------------------
def mnistnet_forward(x, packed, *, tile_b=None):
    m1, b1, m2, b2, wf1, bf1, wf2, bf2 = packed
    x = x.reshape(-1, 28, 28).astype(jnp.float32)
    b = x.shape[0]

    if tile_b is None:
        # Cap at 256 (fits v7x's 64 MiB VMEM comfortably; also fine on v5e/v6e)
        # and aim for >=2 grid steps so both v7x TensorCores get work.
        half = (b + 1) // 2
        tile_b = max(16, min(256, ((half + 15) // 16) * 16))
    else:
        tile_b = max(16, ((tile_b + 15) // 16) * 16)   # bf16 sublane tiling
    bp = ((b + tile_b - 1) // tile_b) * tile_b

    xt = jnp.transpose(x, (1, 0, 2)).astype(jnp.bfloat16)   # (28, B, 28), cast once
    if bp != b:
        xt = jnp.pad(xt, ((0, 0), (0, bp - b), (0, 0)))

    weight_bytes = sum(int(a.size) * int(a.dtype.itemsize)
                       for a in (m1, b1, m2, b2, wf1, bf1, wf2, bf2))
    cost = pl.CostEstimate(
        flops=int(bp) * 2 * (24 * 140 * 240 + 8 * 1280 * 160 + 1024 * 50 + 50 * 10),
        transcendentals=int(bp) * 128,
        bytes_accessed=int(xt.size) * 2 + int(bp) * 128 * 4 + weight_bytes)

    out = pl.pallas_call(
        _mnist_fused_kernel,
        out_shape=jax.ShapeDtypeStruct((bp, 128), jnp.float32),
        grid=(bp // tile_b,),
        in_specs=[
            pl.BlockSpec((28, tile_b, 28), lambda i: (0, i, 0)),   # image tile
            pl.BlockSpec(m1.shape, lambda i: (0, 0)),              # resident weights
            pl.BlockSpec(b1.shape, lambda i: (0, 0)),
            pl.BlockSpec(m2.shape, lambda i: (0, 0)),
            pl.BlockSpec(b2.shape, lambda i: (0, 0)),
            pl.BlockSpec(wf1.shape, lambda i: (0, 0)),
            pl.BlockSpec(bf1.shape, lambda i: (0, 0)),
            pl.BlockSpec(wf2.shape, lambda i: (0, 0)),
            pl.BlockSpec(bf2.shape, lambda i: (0, 0)),
        ],
        out_specs=pl.BlockSpec((tile_b, 128), lambda i: (i, 0)),   # lane-dense store
        compiler_params=pltpu.CompilerParams(
            dimension_semantics=("parallel",),
            vmem_limit_bytes=48 * 1024 * 1024),
        cost_estimate=cost,
    )(xt, m1, b1, m2, b2, wf1, bf1, wf2, bf2)
    return out[:b, :10]


# ---------------------------------------------------------------------------
# Pure-JAX f32 reference (torch-equivalent ops) for validation
# ---------------------------------------------------------------------------
def reference_forward(x, params):
    c1w, c1b, c2w, c2b, f1w, f1b, f2w, f2b = params
    dn = ("NCHW", "OIHW", "NCHW")
    hp = lax.Precision.HIGHEST
    x = x.reshape(-1, 1, 28, 28).astype(jnp.float32)
    y = lax.conv_general_dilated(x, c1w, (1, 1), "VALID", dimension_numbers=dn,
                                 precision=hp) + c1b[None, :, None, None]
    y = lax.reduce_window(y, -jnp.inf, lax.max, (1, 1, 2, 2), (1, 1, 2, 2), "VALID")
    y = jnp.maximum(y, 0.0)
    y = lax.conv_general_dilated(y, c2w, (1, 1), "VALID", dimension_numbers=dn,
                                 precision=hp) + c2b[None, :, None, None]
    y = lax.reduce_window(y, -jnp.inf, lax.max, (1, 1, 2, 2), (1, 1, 2, 2), "VALID")
    y = jnp.maximum(y, 0.0)
    y = y.reshape(-1, 320)
    y = jnp.maximum(jnp.dot(y, f1w.T, precision=hp) + f1b, 0.0)
    y = jnp.dot(y, f2w.T, precision=hp) + f2b
    return jax.nn.softmax(y, axis=1)


def init_params(key):
    ks = jax.random.split(key, 8)
    c1w = jax.random.normal(ks[0], (10, 1, 5, 5), jnp.float32) * 0.2
    c1b = jax.random.normal(ks[1], (10,), jnp.float32) * 0.05
    c2w = jax.random.normal(ks[2], (20, 10, 5, 5), jnp.float32) * 0.1
    c2b = jax.random.normal(ks[3], (20,), jnp.float32) * 0.05
    f1w = jax.random.normal(ks[4], (50, 320), jnp.float32) * 0.05
    f1b = jax.random.normal(ks[5], (50,), jnp.float32) * 0.05
    f2w = jax.random.normal(ks[6], (10, 50), jnp.float32) * 0.1
    f2b = jax.random.normal(ks[7], (10,), jnp.float32) * 0.05
    return (c1w, c1b, c2w, c2b, f1w, f1b, f2w, f2b)


if __name__ == "__main__":
    key = jax.random.PRNGKey(0)
    kx, kx2, kp = jax.random.split(key, 3)
    params = init_params(kp)
    packed = pack_params(params)          # one-time weight packing

    fwd = jax.jit(mnistnet_forward)

    # batch=2 (single grid step, TB=16 with padding)
    x = jax.random.normal(kx, (2, 1, 28, 28), dtype=jnp.float32)
    out = jax.block_until_ready(fwd(x, packed))
    assert out.shape == (2, 10)
    ref = reference_forward(x, params)
    if not bool(jnp.allclose(out, ref, atol=2e-2, rtol=2e-2)):
        raise SystemExit("mismatch vs reference (batch=2): max abs err = "
                         f"{float(jnp.max(jnp.abs(out - ref)))}")

    # batch=40 exercises the tiled "parallel" grid (TB=32, 2 grid steps)
    x2 = jax.random.normal(kx2, (40, 1, 28, 28), dtype=jnp.float32)
    out2 = jax.block_until_ready(fwd(x2, packed))
    ref2 = reference_forward(x2, params)
    if not bool(jnp.allclose(out2, ref2, atol=2e-2, rtol=2e-2)):
        raise SystemExit("mismatch vs reference (batch=40): max abs err = "
                         f"{float(jnp.max(jnp.abs(out2 - ref2)))}")

    print("KERNEL_OK")
</pallas_src>

<mosaic_0001>
module attributes {stable_mosaic.version = 11 : i64} {
  func.func @_mnist_fused_kernel(%arg0: i32, %arg1: memref<28x16x28xbf16, #tpu.memory_space<vmem>>, %arg2: memref<140x256xbf16, #tpu.memory_space<vmem>>, %arg3: memref<1x256xf32, #tpu.memory_space<vmem>>, %arg4: memref<1280x256xbf16, #tpu.memory_space<vmem>>, %arg5: memref<1x256xf32, #tpu.memory_space<vmem>>, %arg6: memref<1024x128xbf16, #tpu.memory_space<vmem>>, %arg7: memref<1x128xf32, #tpu.memory_space<vmem>>, %arg8: memref<128x128xbf16, #tpu.memory_space<vmem>>, %arg9: memref<1x128xf32, #tpu.memory_space<vmem>>, %arg10: memref<16x128xf32, #tpu.memory_space<vmem>>) attributes {dimension_semantics = [#tpu.dimension_semantics<parallel>], iteration_bounds = array<i64: 1>, scalar_prefetch = 0 : i64, scratch_operands = 0 : i64, tpu.core_type = #tpu.core_type<tc>, window_params = [{transform_indices = @transform_0, window_bounds = array<i64: 28, 16, 28>}, {pipeline_mode = #tpu.pipeline_mode<synchronous>, transform_indices = @transform_1, window_bounds = array<i64: 140, 256>}, {pipeline_mode = #tpu.pipeline_mode<synchronous>, transform_indices = @transform_2, window_bounds = array<i64: 1, 256>}, {pipeline_mode = #tpu.pipeline_mode<synchronous>, transform_indices = @transform_3, window_bounds = array<i64: 1280, 256>}, {pipeline_mode = #tpu.pipeline_mode<synchronous>, transform_indices = @transform_4, window_bounds = array<i64: 1, 256>}, {pipeline_mode = #tpu.pipeline_mode<synchronous>, transform_indices = @transform_5, window_bounds = array<i64: 1024, 128>}, {pipeline_mode = #tpu.pipeline_mode<synchronous>, transform_indices = @transform_6, window_bounds = array<i64: 1, 128>}, {pipeline_mode = #tpu.pipeline_mode<synchronous>, transform_indices = @transform_7, window_bounds = array<i64: 128, 128>}, {pipeline_mode = #tpu.pipeline_mode<synchronous>, transform_indices = @transform_8, window_bounds = array<i64: 1, 128>}, {transform_indices = @transform_9, window_bounds = array<i64: 16, 128>}]} {
    %c0 = arith.constant 0 : index
    %c0_0 = arith.constant 0 : index
    %c0_1 = arith.constant 0 : index
    %0 = vector.load %arg1[%c0, %c0_0, %c0_1] : memref<28x16x28xbf16, #tpu.memory_space<vmem>>, vector<28x16x28xbf16>
    %1 = vector.extract_strided_slice %0 {offsets = [0, 0, 0], sizes = [24, 16, 28], strides = [1, 1, 1]} : vector<28x16x28xbf16> to vector<24x16x28xbf16>
    %2 = vector.extract_strided_slice %0 {offsets = [1, 0, 0], sizes = [24, 16, 28], strides = [1, 1, 1]} : vector<28x16x28xbf16> to vector<24x16x28xbf16>
    %3 = vector.extract_strided_slice %0 {offsets = [2, 0, 0], sizes = [24, 16, 28], strides = [1, 1, 1]} : vector<28x16x28xbf16> to vector<24x16x28xbf16>
    %4 = vector.extract_strided_slice %0 {offsets = [3, 0, 0], sizes = [24, 16, 28], strides = [1, 1, 1]} : vector<28x16x28xbf16> to vector<24x16x28xbf16>
    %5 = vector.extract_strided_slice %0 {offsets = [4, 0, 0], sizes = [24, 16, 28], strides = [1, 1, 1]} : vector<28x16x28xbf16> to vector<24x16x28xbf16>
    %6 = tpu.concatenate %1, %2, %3, %4, %5 in 2 : vector<24x16x28xbf16>, vector<24x16x28xbf16>, vector<24x16x28xbf16>, vector<24x16x28xbf16>, vector<24x16x28xbf16> -> vector<24x16x140xbf16>
    %7 = vector.shape_cast %6 : vector<24x16x140xbf16> to vector<384x140xbf16>
    %c0_2 = arith.constant 0 : index
    %c0_3 = arith.constant 0 : index
    %8 = vector.load %arg2[%c0_2, %c0_3] : memref<140x256xbf16, #tpu.memory_space<vmem>>, vector<140x256xbf16>
    %cst = arith.constant dense<0.000000e+00> : vector<384x256xf32>
    %9 = tpu.matmul %7, %8, %cst {dimension_numbers = #tpu.dot_dimension_numbers<[1], [0], [0], [1], [0, 0, 1, 1], [], []>} : vector<384x140xbf16>, vector<140x256xbf16>, vector<384x256xf32> -> vector<384x256xf32>
    %c0_4 = arith.constant 0 : index
    %c0_5 = arith.constant 0 : index
    %10 = vector.load %arg3[%c0_4, %c0_5] : memref<1x256xf32, #tpu.memory_space<vmem>>, vector<1x256xf32>
    %11 = vector.broadcast %10 : vector<1x256xf32> to vector<384x256xf32>
    %12 = arith.addf %9, %11 : vector<384x256xf32>
    %13 = vector.shape_cast %12 : vector<384x256xf32> to vector<12x2x16x256xf32>
    %14 = vector.extract_strided_slice %13 {offsets = [0, 0, 0, 0], sizes = [12, 1, 16, 256], strides = [1, 1, 1, 1]} : vector<12x2x16x256xf32> to vector<12x1x16x256xf32>
    %15 = vector.shape_cast %14 : vector<12x1x16x256xf32> to vector<12x16x256xf32>
    %16 = vector.extract_strided_slice %13 {offsets = [0, 1, 0, 0], sizes = [12, 1, 16, 256], strides = [1, 1, 1, 1]} : vector<12x2x16x256xf32> to vector<12x1x16x256xf32>
    %17 = vector.shape_cast %16 : vector<12x1x16x256xf32> to vector<12x16x256xf32>
    %18 = arith.maximumf %15, %17 : vector<12x16x256xf32>
    %19 = vector.extract_strided_slice %18 {offsets = [0, 0, 10], sizes = [12, 16, 246], strides = [1, 1, 1]} : vector<12x16x256xf32> to vector<12x16x246xf32>
    %20 = vector.extract_strided_slice %18 {offsets = [0, 0, 0], sizes = [12, 16, 10], strides = [1, 1, 1]} : vector<12x16x256xf32> to vector<12x16x10xf32>
    %21 = tpu.concatenate %19, %20 in 2 : vector<12x16x246xf32>, vector<12x16x10xf32> -> vector<12x16x256xf32>
    %22 = arith.maximumf %18, %21 : vector<12x16x256xf32>
    %cst_6 = arith.constant 0.000000e+00 : f32
    %23 = vector.broadcast %cst_6 : f32 to vector<12x16x256xf32>
    %24 = arith.maximumf %22, %23 : vector<12x16x256xf32>
    %25 = arith.truncf %24 : vector<12x16x256xf32> to vector<12x16x256xbf16>
    %26 = vector.extract_strided_slice %25 {offsets = [0, 0, 0], sizes = [8, 16, 256], strides = [1, 1, 1]} : vector<12x16x256xbf16> to vector<8x16x256xbf16>
    %27 = vector.extract_strided_slice %25 {offsets = [1, 0, 0], sizes = [8, 16, 256], strides = [1, 1, 1]} : vector<12x16x256xbf16> to vector<8x16x256xbf16>
    %28 = vector.extract_strided_slice %25 {offsets = [2, 0, 0], sizes = [8, 16, 256], strides = [1, 1, 1]} : vector<12x16x256xbf16> to vector<8x16x256xbf16>
    %29 = vector.extract_strided_slice %25 {offsets = [3, 0, 0], sizes = [8, 16, 256], strides = [1, 1, 1]} : vector<12x16x256xbf16> to vector<8x16x256xbf16>
    %30 = vector.extract_strided_slice %25 {offsets = [4, 0, 0], sizes = [8, 16, 256], strides = [1, 1, 1]} : vector<12x16x256xbf16> to vector<8x16x256xbf16>
    %31 = tpu.concatenate %26, %27, %28, %29, %30 in 2 : vector<8x16x256xbf16>, vector<8x16x256xbf16>, vector<8x16x256xbf16>, vector<8x16x256xbf16>, vector<8x16x256xbf16> -> vector<8x16x1280xbf16>
    %32 = vector.shape_cast %31 : vector<8x16x1280xbf16> to vector<128x1280xbf16>
    %c0_7 = arith.constant 0 : index
    %c0_8 = arith.constant 0 : index
    %33 = vector.load %arg4[%c0_7, %c0_8] : memref<1280x256xbf16, #tpu.memory_space<vmem>>, vector<1280x256xbf16>
    %cst_9 = arith.constant dense<0.000000e+00> : vector<128x256xf32>
    %34 = tpu.matmul %32, %33, %cst_9 {dimension_numbers = #tpu.dot_dimension_numbers<[1], [0], [0], [1], [0, 0, 1, 1], [], []>} : vector<128x1280xbf16>, vector<1280x256xbf16>, vector<128x256xf32> -> vector<128x256xf32>
    %c0_10 = arith.constant 0 : index
    %c0_11 = arith.constant 0 : index
    %35 = vector.load %arg5[%c0_10, %c0_11] : memref<1x256xf32, #tpu.memory_space<vmem>>, vector<1x256xf32>
    %36 = vector.broadcast %35 : vector<1x256xf32> to vector<128x256xf32>
    %37 = arith.addf %34, %36 : vector<128x256xf32>
    %38 = vector.shape_cast %37 : vector<128x256xf32> to vector<4x2x16x256xf32>
    %39 = vector.extract_strided_slice %38 {offsets = [0, 0, 0, 0], sizes = [4, 1, 16, 256], strides = [1, 1, 1, 1]} : vector<4x2x16x256xf32> to vector<4x1x16x256xf32>
    %40 = vector.shape_cast %39 : vector<4x1x16x256xf32> to vector<4x16x256xf32>
    %41 = vector.extract_strided_slice %38 {offsets = [0, 1, 0, 0], sizes = [4, 1, 16, 256], strides = [1, 1, 1, 1]} : vector<4x2x16x256xf32> to vector<4x1x16x256xf32>
    %42 = vector.shape_cast %41 : vector<4x1x16x256xf32> to vector<4x16x256xf32>
    %43 = arith.maximumf %40, %42 : vector<4x16x256xf32>
    %44 = vector.extract_strided_slice %43 {offsets = [0, 0, 20], sizes = [4, 16, 236], strides = [1, 1, 1]} : vector<4x16x256xf32> to vector<4x16x236xf32>
    %45 = vector.extract_strided_slice %43 {offsets = [0, 0, 0], sizes = [4, 16, 20], strides = [1, 1, 1]} : vector<4x16x256xf32> to vector<4x16x20xf32>
    %46 = tpu.concatenate %44, %45 in 2 : vector<4x16x236xf32>, vector<4x16x20xf32> -> vector<4x16x256xf32>
    %47 = arith.maximumf %43, %46 : vector<4x16x256xf32>
    %cst_12 = arith.constant 0.000000e+00 : f32
    %48 = vector.broadcast %cst_12 : f32 to vector<4x16x256xf32>
    %49 = arith.maximumf %47, %48 : vector<4x16x256xf32>
    %50 = arith.truncf %49 : vector<4x16x256xf32> to vector<4x16x256xbf16>
    %51 = vector.extract_strided_slice %50 {offsets = [0, 0, 0], sizes = [1, 16, 256], strides = [1, 1, 1]} : vector<4x16x256xbf16> to vector<1x16x256xbf16>
    %52 = vector.shape_cast %51 : vector<1x16x256xbf16> to vector<16x256xbf16>
    %53 = vector.extract_strided_slice %50 {offsets = [1, 0, 0], sizes = [1, 16, 256], strides = [1, 1, 1]} : vector<4x16x256xbf16> to vector<1x16x256xbf16>
    %54 = vector.shape_cast %53 : vector<1x16x256xbf16> to vector<16x256xbf16>
    %55 = vector.extract_strided_slice %50 {offsets = [2, 0, 0], sizes = [1, 16, 256], strides = [1, 1, 1]} : vector<4x16x256xbf16> to vector<1x16x256xbf16>
    %56 = vector.shape_cast %55 : vector<1x16x256xbf16> to vector<16x256xbf16>
    %57 = vector.extract_strided_slice %50 {offsets = [3, 0, 0], sizes = [1, 16, 256], strides = [1, 1, 1]} : vector<4x16x256xbf16> to vector<1x16x256xbf16>
    %58 = vector.shape_cast %57 : vector<1x16x256xbf16> to vector<16x256xbf16>
    %59 = tpu.concatenate %52, %54, %56, %58 in 1 : vector<16x256xbf16>, vector<16x256xbf16>, vector<16x256xbf16>, vector<16x256xbf16> -> vector<16x1024xbf16>
    %c0_13 = arith.constant 0 : index
    %c0_14 = arith.constant 0 : index
    %60 = vector.load %arg6[%c0_13, %c0_14] : memref<1024x128xbf16, #tpu.memory_space<vmem>>, vector<1024x128xbf16>
    %cst_15 = arith.constant dense<0.000000e+00> : vector<16x128xf32>
    %61 = tpu.matmul %59, %60, %cst_15 {dimension_numbers = #tpu.dot_dimension_numbers<[1], [0], [0], [1], [0, 0, 1, 1], [], []>} : vector<16x1024xbf16>, vector<1024x128xbf16>, vector<16x128xf32> -> vector<16x128xf32>
    %c0_16 = arith.constant 0 : index
    %c0_17 = arith.constant 0 : index
    %62 = vector.load %arg7[%c0_16, %c0_17] : memref<1x128xf32, #tpu.memory_space<vmem>>, vector<1x128xf32>
    %63 = vector.broadcast %62 : vector<1x128xf32> to vector<16x128xf32>
    %64 = arith.addf %61, %63 : vector<16x128xf32>
    %cst_18 = arith.constant 0.000000e+00 : f32
    %65 = vector.broadcast %cst_18 : f32 to vector<16x128xf32>
    %66 = arith.maximumf %64, %65 : vector<16x128xf32>
    %67 = arith.truncf %66 : vector<16x128xf32> to vector<16x128xbf16>
    %c0_19 = arith.constant 0 : index
    %c0_20 = arith.constant 0 : index
    %68 = vector.load %arg8[%c0_19, %c0_20] : memref<128x128xbf16, #tpu.memory_space<vmem>>, vector<128x128xbf16>
    %cst_21 = arith.constant dense<0.000000e+00> : vector<16x128xf32>
    %69 = tpu.matmul %67, %68, %cst_21 {dimension_numbers = #tpu.dot_dimension_numbers<[1], [0], [0], [1], [0, 0, 1, 1], [], []>} : vector<16x128xbf16>, vector<128x128xbf16>, vector<16x128xf32> -> vector<16x128xf32>
    %c0_22 = arith.constant 0 : index
    %c0_23 = arith.constant 0 : index
    %70 = vector.load %arg9[%c0_22, %c0_23] : memref<1x128xf32, #tpu.memory_space<vmem>>, vector<1x128xf32>
    %71 = vector.broadcast %70 : vector<1x128xf32> to vector<16x128xf32>
    %72 = arith.addf %69, %71 : vector<16x128xf32>
    %cst_24 = arith.constant dense<0xFF800000> : vector<16xf32>
    %73 = vector.multi_reduction <maximumf>, %72, %cst_24 [1] : vector<16x128xf32> to vector<16xf32>
    %74 = vector.shape_cast %73 : vector<16xf32> to vector<16x1xf32>
    %75 = vector.broadcast %74 : vector<16x1xf32> to vector<16x128xf32>
    %76 = arith.subf %72, %75 : vector<16x128xf32>
    %77 = math.exp %76 : vector<16x128xf32>
    %cst_25 = arith.constant dense<0.000000e+00> : vector<16xf32>
    %78 = vector.multi_reduction <add>, %77, %cst_25 [1] : vector<16x128xf32> to vector<16xf32>
    %79 = vector.shape_cast %78 : vector<16xf32> to vector<16x1xf32>
    %80 = tpu.reciprocal %79 {approx = true} : vector<16x1xf32> -> vector<16x1xf32>
    %81 = vector.broadcast %80 : vector<16x1xf32> to vector<16x128xf32>
    %82 = arith.mulf %77, %81 : vector<16x128xf32>
    %c0_26 = arith.constant 0 : index
    %c0_27 = arith.constant 0 : index
    %83 = vector.load %arg10[%c0_26, %c0_27] : memref<16x128xf32, #tpu.memory_space<vmem>>, vector<16x128xf32>
    tpu.vector_store %arg10[%c0_26, %c0_27], %82 {strides = array<i32>} : memref<16x128xf32, #tpu.memory_space<vmem>>, vector<16x128xf32>,
    return
  }
  func.func @transform_0(%arg0: i32) -> (i32, i32, i32) {
    %c0_i32 = arith.constant 0 : i32
    %c0_i32_0 = arith.constant 0 : i32
    %c0_i32_1 = arith.constant 0 : i32
    return %c0_i32, %arg0, %c0_i32_0 : i32, i32, i32
  }
  func.func @transform_1(%arg0: i32) -> (i32, i32) {
    %c0_i32 = arith.constant 0 : i32
    %c0_i32_0 = arith.constant 0 : i32
    %c0_i32_1 = arith.constant 0 : i32
    return %c0_i32, %c0_i32_0 : i32, i32
  }
  func.func @transform_2(%arg0: i32) -> (i32, i32) {
    %c0_i32 = arith.constant 0 : i32
    %c0_i32_0 = arith.constant 0 : i32
    %c0_i32_1 = arith.constant 0 : i32
    return %c0_i32, %c0_i32_0 : i32, i32
  }
  func.func @transform_3(%arg0: i32) -> (i32, i32) {
    %c0_i32 = arith.constant 0 : i32
    %c0_i32_0 = arith.constant 0 : i32
    %c0_i32_1 = arith.constant 0 : i32
    return %c0_i32, %c0_i32_0 : i32, i32
  }
  func.func @transform_4(%arg0: i32) -> (i32, i32) {
    %c0_i32 = arith.constant 0 : i32
    %c0_i32_0 = arith.constant 0 : i32
    %c0_i32_1 = arith.constant 0 : i32
    return %c0_i32, %c0_i32_0 : i32, i32
  }
  func.func @transform_5(%arg0: i32) -> (i32, i32) {
    %c0_i32 = arith.constant 0 : i32
    %c0_i32_0 = arith.constant 0 : i32
    %c0_i32_1 = arith.constant 0 : i32
    return %c0_i32, %c0_i32_0 : i32, i32
  }
  func.func @transform_6(%arg0: i32) -> (i32, i32) {
    %c0_i32 = arith.constant 0 : i32
    %c0_i32_0 = arith.constant 0 : i32
    %c0_i32_1 = arith.constant 0 : i32
    return %c0_i32, %c0_i32_0 : i32, i32
  }
  func.func @transform_7(%arg0: i32) -> (i32, i32) {
    %c0_i32 = arith.constant 0 : i32
    %c0_i32_0 = arith.constant 0 : i32
    %c0_i32_1 = arith.constant 0 : i32
    return %c0_i32, %c0_i32_0 : i32, i32
  }
  func.func @transform_8(%arg0: i32) -> (i32, i32) {
    %c0_i32 = arith.constant 0 : i32
    %c0_i32_0 = arith.constant 0 : i32
    %c0_i32_1 = arith.constant 0 : i32
    return %c0_i32, %c0_i32_0 : i32, i32
  }
  func.func @transform_9(%arg0: i32) -> (i32, i32) {
    %c0_i32 = arith.constant 0 : i32
    %c0_i32_0 = arith.constant 0 : i32
    return %arg0, %c0_i32 : i32, i32
  }
}

</mosaic_0001>

<llo_original>
// kernel: mnistnet_forward.1
$region0: #{mnistnet_forward.1}
  #allocation0 [shape = 'u32[]', space=smem, size = 0x4, offset = 0x4, fixed_abs, tag = 'smem constant byte address 0x4 - core index']
  #allocation1 [shape = 'u32[144,128]{1,0:T(1,128)}', space=vmem, size = 0x12000, scoped, tag = 'internal scratch']
  %s0 = inlined_call_operand.vmem [shape: bf16[28,16,28], index: 0, kind: input, shape index: {}]
  %s1 = inlined_call_operand.vmem [shape: bf16[140,256], index: 1, kind: input, shape index: {}]
  %s2 = inlined_call_operand.vmem [shape: f32[1,256], index: 2, kind: input, shape index: {}]
  %s3 = inlined_call_operand.hbm [shape: bf16[1280,256], index: 3, kind: input, shape index: {}]
  %s4 = inlined_call_operand.vmem [shape: f32[1,256], index: 4, kind: input, shape index: {}]
  %s5 = inlined_call_operand.hbm [shape: bf16[1024,128], index: 5, kind: input, shape index: {}]
  %s6 = inlined_call_operand.vmem [shape: f32[1,128], index: 6, kind: input, shape index: {}]
  %s7 = inlined_call_operand.vmem [shape: bf16[128,128], index: 7, kind: input, shape index: {}]
  %s8 = inlined_call_operand.vmem [shape: f32[1,128], index: 8, kind: input, shape index: {}]
  %s9 = inlined_call_operand.vmem [shape: f32[16,128], index: 9, kind: output, shape index: {}]
  %s10 = sld [smem:[#allocation0]]
  $region54: #{mnistnet_forward.1} parent=0
    _
  %s12 = ssub.s32 1, %s10
  %s13 = scalar_select 0, %s12, %s10
  $region1: #{mnistnet_forward.1} parent=0
    #allocation2 [shape = 'u8[655360]{0}', space=vmem, size = 0xa0000, scoped, tag = 'input window, operand 3, single buffered']
    #allocation3 [shape = 's32[1]{0}', space=sflag, size = 0x4, scoped, tag = 'scoped memory for mnistnet_forward.1']
    #allocation4 [shape = 'u8[262144]{0}', space=vmem, size = 0x40000, scoped, tag = 'input window, operand 5, single buffered']
    #allocation5 [shape = 's32[1]{0}', space=sflag, size = 0x4, scoped, tag = 'scoped memory for mnistnet_forward.1']
    %14 = vsyncpa [#allocation3], 0
    %15 = vsyncpa [#allocation5], 0
    // Predicated region
    $region2: #{mnistnet_forward.1} parent=1 // pred_check
      _
    $region3: #{mnistnet_forward.1} parent=1 // pred_check_branch
      %17 = sbr.rel (0) target = $region5
    $region4: #{mnistnet_forward.1} parent=1 // pred_region
      _
    $region5: #{mnistnet_forward.1} parent=1 // pred_fallthru
      _
    // Predicated region
    $region6: #{mnistnet_forward.1} parent=1 // pred_check
      _
    $region7: #{mnistnet_forward.1} parent=1 // pred_check_branch
      %19 = sbr.rel (0) target = $region9
    $region8: #{mnistnet_forward.1} parent=1 // pred_region
      _
    $region9: #{mnistnet_forward.1} parent=1 // pred_fallthru
      _
    // Predicated region
    $region10: #{mnistnet_forward.1} parent=1 // pred_check
      _
    $region11: #{mnistnet_forward.1} parent=1 // pred_check_branch
      %21 = sbr.rel (0) target = $region13
    $region12: #{mnistnet_forward.1} parent=1 // pred_region
      _
    $region13: #{mnistnet_forward.1} parent=1 // pred_fallthru
      _
    // Predicated region
    $region14: #{mnistnet_forward.1} parent=1 // pred_check
      _
    $region15: #{mnistnet_forward.1} parent=1 // pred_check_branch
      %23 = sbr.rel (0) target = $region17
    $region16: #{mnistnet_forward.1} parent=1 // pred_region
      %s25 = ssub.s32 20480, 20480
      %26 = vsyncadd [#allocation3], %s25
      %s27 = sshll.u32 [#allocation2], 4
      %s28 = int_to_ptr.vmem [resolvable:$true] %s27
      %33 = dma.hbm_to_vmem [thread:$0]  %s3, 20480, %s28, [#allocation3], 128, 128, 8
    $region17: #{mnistnet_forward.1} parent=1 // pred_fallthru
      _
    // Predicated region
    $region18: #{mnistnet_forward.1} parent=1 // pred_check
      _
    $region19: #{mnistnet_forward.1} parent=1 // pred_check_branch
      %35 = sbr.rel (0) target = $region21
    $region20: #{mnistnet_forward.1} parent=1 // pred_region
      _
    $region21: #{mnistnet_forward.1} parent=1 // pred_fallthru
      _
    // Predicated region
    $region22: #{mnistnet_forward.1} parent=1 // pred_check
      _
    $region23: #{mnistnet_forward.1} parent=1 // pred_check_branch
      %37 = sbr.rel (0) target = $region25
    $region24: #{mnistnet_forward.1} parent=1 // pred_region
      %s39 = ssub.s32 8192, 8192
      %40 = vsyncadd [#allocation5], %s39
      %s41 = sshll.u32 [#allocation4], 4
      %s42 = int_to_ptr.vmem [resolvable:$true] %s41
      %47 = dma.hbm_to_vmem [thread:$0]  %s5, 8192, %s42, [#allocation5], 64, 64, 4
    $region25: #{mnistnet_forward.1} parent=1 // pred_fallthru
      _
    // Predicated region
    $region26: #{mnistnet_forward.1} parent=1 // pred_check
      _
    $region27: #{mnistnet_forward.1} parent=1 // pred_check_branch
      %49 = sbr.rel (0) target = $region29
    $region28: #{mnistnet_forward.1} parent=1 // pred_region
      _
    $region29: #{mnistnet_forward.1} parent=1 // pred_fallthru
      _
    // Predicated region
    $region30: #{mnistnet_forward.1} parent=1 // pred_check
      _
    $region31: #{mnistnet_forward.1} parent=1 // pred_check_branch
      %51 = sbr.rel (0) target = $region33
    $region32: #{mnistnet_forward.1} parent=1 // pred_region
      _
    $region33: #{mnistnet_forward.1} parent=1 // pred_fallthru
      _
    // Predicated region
    $region34: #{mnistnet_forward.1} parent=1 // pred_check
      _
    $region35: #{mnistnet_forward.1} parent=1 // pred_check_branch
      %53 = sbr.rel (0) target = $region37
    $region36: #{mnistnet_forward.1} parent=1 // pred_region
      _
    $region37: #{mnistnet_forward.1} parent=1 // pred_fallthru
      _
    // Predicated region
    $region38: #{mnistnet_forward.1} parent=1 // pred_check
      _
    $region39: #{mnistnet_forward.1} parent=1 // pred_check_branch
      %55 = sbr.rel (0) target = $region41
    $region40: #{mnistnet_forward.1} parent=1 // pred_region
      %56 = dma.done [#allocation3], 20480
    $region41: #{mnistnet_forward.1} parent=1 // pred_fallthru
      _
    // Predicated region
    $region42: #{mnistnet_forward.1} parent=1 // pred_check
      _
    $region43: #{mnistnet_forward.1} parent=1 // pred_check_branch
      %58 = sbr.rel (0) target = $region45
    $region44: #{mnistnet_forward.1} parent=1 // pred_region
      %59 = dma.done [#allocation5], 8192
    $region45: #{mnistnet_forward.1} parent=1 // pred_fallthru
      _
    %v61 = vld [vmem:[%s0] sm:$0xf]
    %v62 = vld [vmem:[%s0 + $0x4] sm:$0xf]
    %v63 = vld [vmem:[%s0 + $0x8] sm:$0xf]
    %v64 = vld [vmem:[%s0 + $0xc] sm:$0xf]
    %v65 = vld [vmem:[%s0 + $0x10] sm:$0xf]
    %v66 = vld [vmem:[%s0 + $0x14] sm:$0xf]
    %v67 = vld [vmem:[%s0 + $0x18] sm:$0xf]
    %v68 = vld [vmem:[%s0 + $0x1c] sm:$0xf]
    %v69 = vld [vmem:[%s0 + $0x20] sm:$0xf]
    %v70 = vld [vmem:[%s0 + $0x24] sm:$0xf]
    %v71 = vld [vmem:[%s0 + $0x28] sm:$0xf]
    %v72 = vld [vmem:[%s0 + $0x2c] sm:$0xf]
    %v73 = vld [vmem:[%s0 + $0x30] sm:$0xf]
    %v74 = vld [vmem:[%s0 + $0x34] sm:$0xf]
    %v75 = vld [vmem:[%s0 + $0x38] sm:$0xf]
    %v76 = vld [vmem:[%s0 + $0x3c] sm:$0xf]
    %v77 = vld [vmem:[%s0 + $0x40] sm:$0xf]
    %v78 = vld [vmem:[%s0 + $0x44] sm:$0xf]
    %v79 = vld [vmem:[%s0 + $0x48] sm:$0xf]
    %v80 = vld [vmem:[%s0 + $0x4c] sm:$0xf]
    %v81 = vld [vmem:[%s0 + $0x50] sm:$0xf]
    %v82 = vld [vmem:[%s0 + $0x54] sm:$0xf]
    %v83 = vld [vmem:[%s0 + $0x58] sm:$0xf]
    %v84 = vld [vmem:[%s0 + $0x5c] sm:$0xf]
    %v85 = vld [vmem:[%s0 + $0x60] sm:$0xf]
    %v86 = vld [vmem:[%s0 + $0x64] sm:$0xf]
    %v87 = vld [vmem:[%s0 + $0x68] sm:$0xf]
    %v88 = vld [vmem:[%s0 + $0x6c] sm:$0xf]
    %v89 = vld [vmem:[%s0 + $0x70] sm:$0xf]
    %v90 = vld [vmem:[%s0 + $0x74] sm:$0xf]
    %v91 = vld [vmem:[%s0 + $0x78] sm:$0xf]
    %v92 = vld [vmem:[%s0 + $0x7c] sm:$0xf]
    %v93 = vld [vmem:[%s0 + $0x80] sm:$0xf]
    %v94 = vld [vmem:[%s0 + $0x84] sm:$0xf]
    %v95 = vld [vmem:[%s0 + $0x88] sm:$0xf]
    %v96 = vld [vmem:[%s0 + $0x8c] sm:$0xf]
    %v97 = vld [vmem:[%s0 + $0x90] sm:$0xf]
    %v98 = vld [vmem:[%s0 + $0x94] sm:$0xf]
    %v99 = vld [vmem:[%s0 + $0x98] sm:$0xf]
    %v100 = vld [vmem:[%s0 + $0x9c] sm:$0xf]
    %v101 = vld [vmem:[%s0 + $0xa0] sm:$0xf]
    %v102 = vld [vmem:[%s0 + $0xa4] sm:$0xf]
    %v103 = vld [vmem:[%s0 + $0xa8] sm:$0xf]
    %v104 = vld [vmem:[%s0 + $0xac] sm:$0xf]
    %v105 = vld [vmem:[%s0 + $0xb0] sm:$0xf]
    %v106 = vld [vmem:[%s0 + $0xb4] sm:$0xf]
    %v107 = vld [vmem:[%s0 + $0xb8] sm:$0xf]
    %v108 = vld [vmem:[%s0 + $0xbc] sm:$0xf]
    %v109 = vld [vmem:[%s0 + $0xc0] sm:$0xf]
    %v110 = vld [vmem:[%s0 + $0xc4] sm:$0xf]
    %v111 = vld [vmem:[%s0 + $0xc8] sm:$0xf]
    %v112 = vld [vmem:[%s0 + $0xcc] sm:$0xf]
    %v113 = vld [vmem:[%s0 + $0xd0] sm:$0xf]
    %v114 = vld [vmem:[%s0 + $0xd4] sm:$0xf]
    %v115 = vld [vmem:[%s0 + $0xd8] sm:$0xf]
    %v116 = vld [vmem:[%s0 + $0xdc] sm:$0xf]
    %v165 = vunpack.c.l.b16 %v61
    %v166 = vunpack.c.l.b16 %v62
    %v167 = vunpack.c.l.b16 %v63
    %v168 = vunpack.c.l.b16 %v64
    %v169 = vunpack.c.l.b16 %v65
    %v170 = vunpack.c.l.b16 %v66
    %v171 = vunpack.c.l.b16 %v67
    %v172 = vunpack.c.l.b16 %v68
    %v173 = vunpack.c.l.b16 %v69
    %v174 = vunpack.c.l.b16 %v70
    %v175 = vunpack.c.l.b16 %v71
    %v176 = vunpack.c.l.b16 %v72
    %v177 = vunpack.c.l.b16 %v73
    %v178 = vunpack.c.l.b16 %v74
    %v179 = vunpack.c.l.b16 %v75
    %v180 = vunpack.c.l.b16 %v76
    %v181 = vunpack.c.l.b16 %v77
    %v182 = vunpack.c.l.b16 %v78
    %v183 = vunpack.c.l.b16 %v79
    %v184 = vunpack.c.l.b16 %v80
    %v185 = vunpack.c.l.b16 %v81
    %v186 = vunpack.c.l.b16 %v82
    %v187 = vunpack.c.l.b16 %v83
    %v188 = vunpack.c.l.b16 %v84
    %v189 = vunpack.c.l.b16 %v85
    %v190 = vunpack.c.l.b16 %v86
    %v191 = vunpack.c.l.b16 %v87
    %v192 = vunpack.c.l.b16 %v88
    %v193 = vunpack.c.l.b16 %v89
    %v194 = vunpack.c.l.b16 %v90
    %v195 = vunpack.c.l.b16 %v91
    %v196 = vunpack.c.l.b16 %v92
    %v197 = vunpack.c.l.b16 %v93
    %v198 = vunpack.c.l.b16 %v94
    %v199 = vunpack.c.l.b16 %v95
    %v200 = vunpack.c.l.b16 %v96
    %v201 = vunpack.c.l.b16 %v97
    %v202 = vunpack.c.l.b16 %v98
    %v203 = vunpack.c.l.b16 %v99
    %v204 = vunpack.c.l.b16 %v100
    %v205 = vunpack.c.l.b16 %v101
    %v206 = vunpack.c.l.b16 %v102
    %v207 = vunpack.c.l.b16 %v103
    %v208 = vunpack.c.l.b16 %v104
    %v209 = vunpack.c.l.b16 %v105
    %v210 = vunpack.c.l.b16 %v106
    %v211 = vunpack.c.l.b16 %v107
    %v212 = vunpack.c.l.b16 %v108
    %v213 = vpack.c.b16 %v166, %v165
    %v214 = vpack.c.b16 %v168, %v167
    %v215 = vpack.c.b16 %v170, %v169
    %v216 = vpack.c.b16 %v172, %v171
    %v217 = vpack.c.b16 %v174, %v173
    %v218 = vpack.c.b16 %v176, %v175
    %v219 = vpack.c.b16 %v178, %v177
    %v220 = vpack.c.b16 %v180, %v179
    %v221 = vpack.c.b16 %v182, %v181
    %v222 = vpack.c.b16 %v184, %v183
    %v223 = vpack.c.b16 %v186, %v185
    %v224 = vpack.c.b16 %v188, %v187
    %v225 = vpack.c.b16 %v190, %v189
    %v226 = vpack.c.b16 %v192, %v191
    %v227 = vpack.c.b16 %v194, %v193
    %v228 = vpack.c.b16 %v196, %v195
    %v229 = vpack.c.b16 %v198, %v197
    %v230 = vpack.c.b16 %v200, %v199
    %v231 = vpack.c.b16 %v202, %v201
    %v232 = vpack.c.b16 %v204, %v203
    %v233 = vpack.c.b16 %v206, %v205
    %v234 = vpack.c.b16 %v208, %v207
    %v235 = vpack.c.b16 %v210, %v209
    %v236 = vpack.c.b16 %v212, %v211
    %v239 = vunpack.c.l.b16 %v109
    %v240 = vunpack.c.l.b16 %v110
    %v241 = vpack.c.b16 %v240, %v239
    %242 = vrot.lane.b32.xlu0 %v214, 28
    %v243 = vpop.permute.xlu0 %242
    %244 = vrot.lane.b32.xlu0 %v215, 28
    %v245 = vpop.permute.xlu0 %244
    %246 = vrot.lane.b32.xlu0 %v216, 28
    %v247 = vpop.permute.xlu0 %246
    %248 = vrot.lane.b32.xlu0 %v217, 28
    %v249 = vpop.permute.xlu0 %248
    %250 = vrot.lane.b32.xlu0 %v218, 28
    %v251 = vpop.permute.xlu0 %250
    %252 = vrot.lane.b32.xlu0 %v219, 28
    %v253 = vpop.permute.xlu0 %252
    %254 = vrot.lane.b32.xlu0 %v220, 28
    %v255 = vpop.permute.xlu0 %254
    %256 = vrot.lane.b32.xlu0 %v221, 28
    %v257 = vpop.permute.xlu0 %256
    %258 = vrot.lane.b32.xlu0 %v222, 28
    %v259 = vpop.permute.xlu0 %258
    %260 = vrot.lane.b32.xlu0 %v223, 28
    %v261 = vpop.permute.xlu0 %260
    %262 = vrot.lane.b32.xlu0 %v224, 28
    %v263 = vpop.permute.xlu0 %262
    %264 = vrot.lane.b32.xlu0 %v225, 28
    %v265 = vpop.permute.xlu0 %264
    %266 = vrot.lane.b32.xlu0 %v226, 28
    %v267 = vpop.permute.xlu0 %266
    %268 = vrot.lane.b32.xlu0 %v227, 28
    %v269 = vpop.permute.xlu0 %268
    %270 = vrot.lane.b32.xlu0 %v228, 28
    %v271 = vpop.permute.xlu0 %270
    %272 = vrot.lane.b32.xlu0 %v229, 28
    %v273 = vpop.permute.xlu0 %272
    %274 = vrot.lane.b32.xlu0 %v230, 28
    %v275 = vpop.permute.xlu0 %274
    %276 = vrot.lane.b32.xlu0 %v231, 28
    %v277 = vpop.permute.xlu0 %276
    %278 = vrot.lane.b32.xlu0 %v232, 28
    %v279 = vpop.permute.xlu0 %278
    %280 = vrot.lane.b32.xlu0 %v233, 28
    %v281 = vpop.permute.xlu0 %280
    %282 = vrot.lane.b32.xlu0 %v234, 28
    %v283 = vpop.permute.xlu0 %282
    %284 = vrot.lane.b32.xlu0 %v235, 28
    %v285 = vpop.permute.xlu0 %284
    %286 = vrot.lane.b32.xlu0 %v236, 28
    %v287 = vpop.permute.xlu0 %286
    %288 = vrot.lane.b32.xlu0 %v241, 28
    %v289 = vpop.permute.xlu0 %288
    %v292 = vunpack.c.l.b16 %v111
    %v293 = vunpack.c.l.b16 %v112
    %v294 = vpack.c.b16 %v293, %v292
    %295 = vrot.lane.b32.xlu0 %v215, 56
    %v296 = vpop.permute.xlu0 %295
    %297 = vrot.lane.b32.xlu0 %v216, 56
    %v298 = vpop.permute.xlu0 %297
    %299 = vrot.lane.b32.xlu0 %v217, 56
    %v300 = vpop.permute.xlu0 %299
    %301 = vrot.lane.b32.xlu0 %v218, 56
    %v302 = vpop.permute.xlu0 %301
    %303 = vrot.lane.b32.xlu0 %v219, 56
    %v304 = vpop.permute.xlu0 %303
    %305 = vrot.lane.b32.xlu0 %v220, 56
    %v306 = vpop.permute.xlu0 %305
    %307 = vrot.lane.b32.xlu0 %v221, 56
    %v308 = vpop.permute.xlu0 %307
    %309 = vrot.lane.b32.xlu0 %v222, 56
    %v310 = vpop.permute.xlu0 %309
    %311 = vrot.lane.b32.xlu0 %v223, 56
    %v312 = vpop.permute.xlu0 %311
    %313 = vrot.lane.b32.xlu0 %v224, 56
    %v314 = vpop.permute.xlu0 %313
    %315 = vrot.lane.b32.xlu0 %v225, 56
    %v316 = vpop.permute.xlu0 %315
    %317 = vrot.lane.b32.xlu0 %v226, 56
    %v318 = vpop.permute.xlu0 %317
    %319 = vrot.lane.b32.xlu0 %v227, 56
    %v320 = vpop.permute.xlu0 %319
    %321 = vrot.lane.b32.xlu0 %v228, 56
    %v322 = vpop.permute.xlu0 %321
    %323 = vrot.lane.b32.xlu0 %v229, 56
    %v324 = vpop.permute.xlu0 %323
    %325 = vrot.lane.b32.xlu0 %v230, 56
    %v326 = vpop.permute.xlu0 %325
    %327 = vrot.lane.b32.xlu0 %v231, 56
    %v328 = vpop.permute.xlu0 %327
    %329 = vrot.lane.b32.xlu0 %v232, 56
    %v330 = vpop.permute.xlu0 %329
    %331 = vrot.lane.b32.xlu0 %v233, 56
    %v332 = vpop.permute.xlu0 %331
    %333 = vrot.lane.b32.xlu0 %v234, 56
    %v334 = vpop.permute.xlu0 %333
    %335 = vrot.lane.b32.xlu0 %v235, 56
    %v336 = vpop.permute.xlu0 %335
    %337 = vrot.lane.b32.xlu0 %v236, 56
    %v338 = vpop.permute.xlu0 %337
    %339 = vrot.lane.b32.xlu0 %v241, 56
    %v340 = vpop.permute.xlu0 %339
    %341 = vrot.lane.b32.xlu0 %v294, 56
    %v342 = vpop.permute.xlu0 %341
    %v345 = vunpack.c.l.b16 %v113
    %v346 = vunpack.c.l.b16 %v114
    %v347 = vpack.c.b16 %v346, %v345
    %348 = vrot.lane.b32.xlu0 %v216, 84
    %v349 = vpop.permute.xlu0 %348
    %350 = vrot.lane.b32.xlu0 %v217, 84
    %v351 = vpop.permute.xlu0 %350
    %352 = vrot.lane.b32.xlu0 %v218, 84
    %v353 = vpop.permute.xlu0 %352
    %354 = vrot.lane.b32.xlu0 %v219, 84
    %v355 = vpop.permute.xlu0 %354
    %356 = vrot.lane.b32.xlu0 %v220, 84
    %v357 = vpop.permute.xlu0 %356
    %358 = vrot.lane.b32.xlu0 %v221, 84
    %v359 = vpop.permute.xlu0 %358
    %360 = vrot.lane.b32.xlu0 %v222, 84
    %v361 = vpop.permute.xlu0 %360
    %362 = vrot.lane.b32.xlu0 %v223, 84
    %v363 = vpop.permute.xlu0 %362
    %364 = vrot.lane.b32.xlu0 %v224, 84
    %v365 = vpop.permute.xlu0 %364
    %366 = vrot.lane.b32.xlu0 %v225, 84
    %v367 = vpop.permute.xlu0 %366
    %368 = vrot.lane.b32.xlu0 %v226, 84
    %v369 = vpop.permute.xlu0 %368
    %370 = vrot.lane.b32.xlu0 %v227, 84
    %v371 = vpop.permute.xlu0 %370
    %372 = vrot.lane.b32.xlu0 %v228, 84
    %v373 = vpop.permute.xlu0 %372
    %374 = vrot.lane.b32.xlu0 %v229, 84
    %v375 = vpop.permute.xlu0 %374
    %376 = vrot.lane.b32.xlu0 %v230, 84
    %v377 = vpop.permute.xlu0 %376
    %378 = vrot.lane.b32.xlu0 %v231, 84
    %v379 = vpop.permute.xlu0 %378
    %380 = vrot.lane.b32.xlu0 %v232, 84
    %v381 = vpop.permute.xlu0 %380
    %382 = vrot.lane.b32.xlu0 %v233, 84
    %v383 = vpop.permute.xlu0 %382
    %384 = vrot.lane.b32.xlu0 %v234, 84
    %v385 = vpop.permute.xlu0 %384
    %386 = vrot.lane.b32.xlu0 %v235, 84
    %v387 = vpop.permute.xlu0 %386
    %388 = vrot.lane.b32.xlu0 %v236, 84
    %v389 = vpop.permute.xlu0 %388
    %390 = vrot.lane.b32.xlu0 %v241, 84
    %v391 = vpop.permute.xlu0 %390
    %392 = vrot.lane.b32.xlu0 %v294, 84
    %v393 = vpop.permute.xlu0 %392
    %394 = vrot.lane.b32.xlu0 %v347, 84
    %v395 = vpop.permute.xlu0 %394
    %v398 = vunpack.c.l.b16 %v115
    %v399 = vunpack.c.l.b16 %v116
    %v400 = vpack.c.b16 %v399, %v398
    %401 = vrot.lane.b32.xlu0 %v217, 112
    %v402 = vpop.permute.xlu0 %401
    %403 = vrot.lane.b32.xlu0 %v218, 112
    %v404 = vpop.permute.xlu0 %403
    %405 = vrot.lane.b32.xlu0 %v219, 112
    %v406 = vpop.permute.xlu0 %405
    %407 = vrot.lane.b32.xlu0 %v220, 112
    %v408 = vpop.permute.xlu0 %407
    %409 = vrot.lane.b32.xlu0 %v221, 112
    %v410 = vpop.permute.xlu0 %409
    %411 = vrot.lane.b32.xlu0 %v222, 112
    %v412 = vpop.permute.xlu0 %411
    %413 = vrot.lane.b32.xlu0 %v223, 112
    %v414 = vpop.permute.xlu0 %413
    %415 = vrot.lane.b32.xlu0 %v224, 112
    %v416 = vpop.permute.xlu0 %415
    %417 = vrot.lane.b32.xlu0 %v225, 112
    %v418 = vpop.permute.xlu0 %417
    %419 = vrot.lane.b32.xlu0 %v226, 112
    %v420 = vpop.permute.xlu0 %419
    %421 = vrot.lane.b32.xlu0 %v227, 112
    %v422 = vpop.permute.xlu0 %421
    %423 = vrot.lane.b32.xlu0 %v228, 112
    %v424 = vpop.permute.xlu0 %423
    %425 = vrot.lane.b32.xlu0 %v229, 112
    %v426 = vpop.permute.xlu0 %425
    %427 = vrot.lane.b32.xlu0 %v230, 112
    %v428 = vpop.permute.xlu0 %427
    %429 = vrot.lane.b32.xlu0 %v231, 112
    %v430 = vpop.permute.xlu0 %429
    %431 = vrot.lane.b32.xlu0 %v232, 112
    %v432 = vpop.permute.xlu0 %431
    %433 = vrot.lane.b32.xlu0 %v233, 112
    %v434 = vpop.permute.xlu0 %433
    %435 = vrot.lane.b32.xlu0 %v234, 112
    %v436 = vpop.permute.xlu0 %435
    %437 = vrot.lane.b32.xlu0 %v235, 112
    %v438 = vpop.permute.xlu0 %437
    %439 = vrot.lane.b32.xlu0 %v236, 112
    %v440 = vpop.permute.xlu0 %439
    %441 = vrot.lane.b32.xlu0 %v241, 112
    %v442 = vpop.permute.xlu0 %441
    %443 = vrot.lane.b32.xlu0 %v294, 112
    %v444 = vpop.permute.xlu0 %443
    %445 = vrot.lane.b32.xlu0 %v347, 112
    %v446 = vpop.permute.xlu0 %445
    %447 = vrot.lane.b32.xlu0 %v400, 112
    %v448 = vpop.permute.xlu0 %447
    %vm449 = vcmask 228352
    %v452 = vsel %vm449, %v213, %v243
    %v455 = vsel %vm449, %v214, %v245
    %v458 = vsel %vm449, %v215, %v247
    %v461 = vsel %vm449, %v216, %v249
    %v464 = vsel %vm449, %v217, %v251
    %v467 = vsel %vm449, %v218, %v253
    %v470 = vsel %vm449, %v219, %v255
    %v473 = vsel %vm449, %v220, %v257
    %v476 = vsel %vm449, %v221, %v259
    %v479 = vsel %vm449, %v222, %v261
    %v482 = vsel %vm449, %v223, %v263
    %v485 = vsel %vm449, %v224, %v265
    %v488 = vsel %vm449, %v225, %v267
    %v491 = vsel %vm449, %v226, %v269
    %v494 = vsel %vm449, %v227, %v271
    %v497 = vsel %vm449, %v228, %v273
    %v500 = vsel %vm449, %v229, %v275
    %v503 = vsel %vm449, %v230, %v277
    %v506 = vsel %vm449, %v231, %v279
    %v509 = vsel %vm449, %v232, %v281
    %v512 = vsel %vm449, %v233, %v283
    %v515 = vsel %vm449, %v234, %v285
    %v518 = vsel %vm449, %v235, %v287
    %v521 = vsel %vm449, %v236, %v289
    %vm522 = vcmask 457728
    %v524 = vsel %vm522, %v452, %v296
    %v526 = vsel %vm522, %v455, %v298
    %v528 = vsel %vm522, %v458, %v300
    %v530 = vsel %vm522, %v461, %v302
    %v532 = vsel %vm522, %v464, %v304
    %v534 = vsel %vm522, %v467, %v306
    %v536 = vsel %vm522, %v470, %v308
    %v538 = vsel %vm522, %v473, %v310
    %v540 = vsel %vm522, %v476, %v312
    %v542 = vsel %vm522, %v479, %v314
    %v544 = vsel %vm522, %v482, %v316
    %v546 = vsel %vm522, %v485, %v318
    %v548 = vsel %vm522, %v488, %v320
    %v550 = vsel %vm522, %v491, %v322
    %v552 = vsel %vm522, %v494, %v324
    %v554 = vsel %vm522, %v497, %v326
    %v556 = vsel %vm522, %v500, %v328
    %v558 = vsel %vm522, %v503, %v330
    %v560 = vsel %vm522, %v506, %v332
    %v562 = vsel %vm522, %v509, %v334
    %v564 = vsel %vm522, %v512, %v336
    %v566 = vsel %vm522, %v515, %v338
    %v568 = vsel %vm522, %v518, %v340
    %v570 = vsel %vm522, %v521, %v342
    %vm571 = vcmask 687104
    %v573 = vsel %vm571, %v524, %v349
    %v575 = vsel %vm571, %v526, %v351
    %v577 = vsel %vm571, %v528, %v353
    %v579 = vsel %vm571, %v530, %v355
    %v581 = vsel %vm571, %v532, %v357
    %v583 = vsel %vm571, %v534, %v359
    %v585 = vsel %vm571, %v536, %v361
    %v587 = vsel %vm571, %v538, %v363
    %v589 = vsel %vm571, %v540, %v365
    %v591 = vsel %vm571, %v542, %v367
    %v593 = vsel %vm571, %v544, %v369
    %v595 = vsel %vm571, %v546, %v371
    %v597 = vsel %vm571, %v548, %v373
    %v599 = vsel %vm571, %v550, %v375
    %v601 = vsel %vm571, %v552, %v377
    %v603 = vsel %vm571, %v554, %v379
    %v605 = vsel %vm571, %v556, %v381
    %v607 = vsel %vm571, %v558, %v383
    %v609 = vsel %vm571, %v560, %v385
    %v611 = vsel %vm571, %v562, %v387
    %v613 = vsel %vm571, %v564, %v389
    %v615 = vsel %vm571, %v566, %v391
    %v617 = vsel %vm571, %v568, %v393
    %v619 = vsel %vm571, %v570, %v395
    %vm620 = vcmask 916480
    %v622 = vsel %vm620, %v573, %v402
    %v625 = vsel %vm620, %v575, %v404
    %v628 = vsel %vm620, %v577, %v406
    %v631 = vsel %vm620, %v579, %v408
    %v634 = vsel %vm620, %v581, %v410
    %v637 = vsel %vm620, %v583, %v412
    %v640 = vsel %vm620, %v585, %v414
    %v643 = vsel %vm620, %v587, %v416
    %v646 = vsel %vm620, %v589, %v418
    %v649 = vsel %vm620, %v591, %v420
    %v652 = vsel %vm620, %v593, %v422
    %v655 = vsel %vm620, %v595, %v424
    %v658 = vsel %vm620, %v597, %v426
    %v661 = vsel %vm620, %v599, %v428
    %v664 = vsel %vm620, %v601, %v430
    %v667 = vsel %vm620, %v603, %v432
    %v670 = vsel %vm620, %v605, %v434
    %v673 = vsel %vm620, %v607, %v436
    %v676 = vsel %vm620, %v609, %v438
    %v679 = vsel %vm620, %v611, %v440
    %v682 = vsel %vm620, %v613, %v442
    %v685 = vsel %vm620, %v615, %v444
    %v688 = vsel %vm620, %v617, %v446
    %v691 = vsel %vm620, %v619, %v448
    %v693 = vld [vmem:[%s1] sm:$0xff]
    %v694 = vld [vmem:[%s1 + $0x8] sm:$0xff]
    %v695 = vld [vmem:[%s1 + $0x10] sm:$0xff]
    %v696 = vld [vmem:[%s1 + $0x18] sm:$0xff]
    %v697 = vld [vmem:[%s1 + $0x20] sm:$0xff]
    %v698 = vld [vmem:[%s1 + $0x28] sm:$0xff]
    %v699 = vld [vmem:[%s1 + $0x30] sm:$0xff]
    %v700 = vld [vmem:[%s1 + $0x38] sm:$0xff]
    %v701 = vld [vmem:[%s1 + $0x40] sm:$0xff]
    %v702 = vld [vmem:[%s1 + $0x48] sm:$0xff]
    %v703 = vld [vmem:[%s1 + $0x50] sm:$0xff]
    %v704 = vld [vmem:[%s1 + $0x58] sm:$0xff]
    %v705 = vld [vmem:[%s1 + $0x60] sm:$0xff]
    %v706 = vld [vmem:[%s1 + $0x68] sm:$0xff]
    %v707 = vld [vmem:[%s1 + $0x70] sm:$0xff]
    %v708 = vld [vmem:[%s1 + $0x78] sm:$0xff]
    %v709 = vld [vmem:[%s1 + $0x80] sm:$0xff]
    %v710 = vld [vmem:[%s1 + $0x88] sm:$0x33]
    %v711 = vld [vmem:[%s2] sm:$0x3]
    %v713 = vlaneseq
    %v714 = vshrl.u32 %v713, 7
    %v715 = vsub.s32 0, %v714
    %v716 = vrot.slane %v711, %v715
    %v717 = vlaneseq
    %v718 = vshrl.u32 %v717, 7
    %v719 = vsub.s32 1, %v718
    %v720 = vrot.slane %v711, %v719
    %v741 = vunpack.c.l.b16 %v693
    %v742 = vunpack.c.h.b16 %v693
    %v743 = vunpack.c.l.b16 %v694
    %v744 = vunpack.c.h.b16 %v694
    %v745 = vunpack.c.l.b16 %v695
    %v746 = vunpack.c.h.b16 %v695
    %v747 = vunpack.c.l.b16 %v696
    %v748 = vunpack.c.h.b16 %v696
    %v749 = vunpack.c.l.b16 %v697
    %v750 = vunpack.c.h.b16 %v697
    %v751 = vunpack.c.l.b16 %v698
    %v752 = vunpack.c.h.b16 %v698
    %v753 = vunpack.c.l.b16 %v699
    %v754 = vunpack.c.h.b16 %v699
    %v755 = vunpack.c.l.b16 %v700
    %v756 = vunpack.c.h.b16 %v700
    %v757 = vunpack.c.l.b16 %v701
    %v758 = vunpack.c.h.b16 %v701
    %v759 = vunpack.c.l.b16 %v702
    %v760 = vunpack.c.h.b16 %v702
    %v761 = vunpack.c.l.b16 %v703
    %v762 = vunpack.c.h.b16 %v703
    %v763 = vunpack.c.l.b16 %v704
    %v764 = vunpack.c.h.b16 %v704
    %v765 = vunpack.c.l.b16 %v705
    %v766 = vunpack.c.h.b16 %v705
    %v767 = vunpack.c.l.b16 %v706
    %v768 = vunpack.c.h.b16 %v706
    %v769 = vunpack.c.l.b16 %v707
    %v770 = vunpack.c.h.b16 %v707
    %v771 = vunpack.c.l.b16 %v708
    %v772 = vunpack.c.h.b16 %v708
    %v773 = vunpack.c.l.b16 %v709
    %v774 = vunpack.c.h.b16 %v709
    %v775 = vunpack.c.l.b16 %v710
    %v776 = vunpack.c.h.b16 %v710
    %v777 = vpack.c.b16 %v743, %v741
    %v778 = vpack.c.b16 %v744, %v742
    %v779 = vpack.c.b16 %v747, %v745
    %v780 = vpack.c.b16 %v748, %v746
    %v781 = vpack.c.b16 %v751, %v749
    %v782 = vpack.c.b16 %v752, %v750
    %v783 = vpack.c.b16 %v755, %v753
    %v784 = vpack.c.b16 %v756, %v754
    %v785 = vpack.c.b16 %v759, %v757
    %v786 = vpack.c.b16 %v760, %v758
    %v787 = vpack.c.b16 %v763, %v761
    %v788 = vpack.c.b16 %v764, %v762
    %v789 = vpack.c.b16 %v767, %v765
    %v790 = vpack.c.b16 %v768, %v766
    %v791 = vpack.c.b16 %v771, %v769
    %v792 = vpack.c.b16 %v772, %v770
    %v793 = vpack.c.b16 %v775, %v773
    %v794 = vpack.c.b16 %v776, %v774
    %vm811 = vcmask 97280
    %v812 = vsel %vm811, %v402, 0
    %v814 = vsel %vm811, %v404, 0
    %v816 = vsel %vm811, %v406, 0
    %v818 = vsel %vm811, %v408, 0
    %v820 = vsel %vm811, %v410, 0
    %v822 = vsel %vm811, %v412, 0
    %v824 = vsel %vm811, %v414, 0
    %v826 = vsel %vm811, %v416, 0
    %v828 = vsel %vm811, %v418, 0
    %v830 = vsel %vm811, %v420, 0
    %v832 = vsel %vm811, %v422, 0
    %v834 = vsel %vm811, %v424, 0
    %v836 = vsel %vm811, %v426, 0
    %v838 = vsel %vm811, %v428, 0
    %v840 = vsel %vm811, %v430, 0
    %v842 = vsel %vm811, %v432, 0
    %v844 = vsel %vm811, %v434, 0
    %v846 = vsel %vm811, %v436, 0
    %v848 = vsel %vm811, %v438, 0
    %v850 = vsel %vm811, %v440, 0
    %v852 = vsel %vm811, %v442, 0
    %v854 = vsel %vm811, %v444, 0
    %v856 = vsel %vm811, %v446, 0
    %v858 = vsel %vm811, %v448, 0
    %vm860 = vcmask 1045504
    %v862 = vsel %vm860, %v793, 0
    %v865 = vsel %vm860, %v794, 0
    %867 = vmatprep.subr.bf16.mxu0 %v778
    %868 = vmatpush1.bf16.msra.mxu0 %v777
    %869 = vmatprep.subr.bf16.mxu0 %v780
    %870 = vmatpush1.bf16.msra.mxu0 %v779
    %871 = vmatprep.subr.bf16.mxu0 %v782
    %872 = vmatpush1.bf16.msra.mxu0 %v781
    %873 = vmatprep.subr.bf16.mxu0 %v784
    %874 = vmatpush1.bf16.msra.mxu0 %v783
    %875 = vmatprep.subr.bf16.mxu0 %v786
    %876 = vmatpush1.bf16.msra.mxu0 %v785
    %877 = vmatprep.subr.bf16.mxu0 %v788
    %878 = vmatpush1.bf16.msra.mxu0 %v787
    %879 = vmatprep.subr.bf16.mxu0 %v790
    %880 = vmatpush1.bf16.msra.mxu0 %v789
    %881 = vmatprep.subr.bf16.mxu0 %v792
    %882 = vmatpush1.bf16.msra.mxu0 %v791
    %883 = vmatprep.subr.bf16.mxu0 %v865
    %884 = vmatpush1.bf16.msra.mxu0 %v862
    %885 = vmatprep.subr.bf16.mxu0 0
    %886 = vmatpush1.bf16.msra.mxu0 0
    %887 = vmatprep.subr.bf16.mxu0 0
    %888 = vmatpush1.bf16.msra.mxu0 0
    %889 = vmatprep.subr.bf16.mxu0 0
    %890 = vmatpush1.bf16.msra.mxu0 0
    %891 = vmatprep.subr.bf16.mxu0 0
    %892 = vmatpush1.bf16.msra.mxu0 0
    %893 = vmatprep.subr.bf16.mxu0 0
    %894 = vmatpush1.bf16.msra.mxu0 0
    %895 = vmatprep.subr.bf16.mxu0 0
    %896 = vmatpush1.bf16.msra.mxu0 0
    %897 = vmatprep.subr.bf16.mxu0 0
    %898 = vmatpush1.bf16.msra.mxu0 0
    %899 = vmatprep.mubr.bf16.mxu0 %v812
    %900 = vmatmul.mubr.bf16.gmra.mrb[0].mxu0 %v622
    %v901 = vpop.f32.mrb[0].mxu0
    %v902 = vadd.f32 %v716, %v901
    %v903 = vpop.f32.mrb[0].mxu0
    %v904 = vadd.f32 %v720, %v903
    %v905 = vpop.f32.mrb[0].mxu0
    %v906 = vadd.f32 %v716, %v905
    %v907 = vpop.f32.mrb[0].mxu0
    %v908 = vadd.f32 %v720, %v907
    %909 = vmatprep.mubr.bf16.mxu0 %v814
    %910 = vmatmul.mubr.bf16.gmra.mrb[0].mxu0 %v625
    %v911 = vpop.f32.mrb[0].mxu0
    %v912 = vadd.f32 %v716, %v911
    %v913 = vpop.f32.mrb[0].mxu0
    %v914 = vadd.f32 %v720, %v913
    %v915 = vpop.f32.mrb[0].mxu0
    %v916 = vadd.f32 %v716, %v915
    %v917 = vpop.f32.mrb[0].mxu0
    %v918 = vadd.f32 %v720, %v917
    %919 = vmatprep.mubr.bf16.mxu0 %v816
    %920 = vmatmul.mubr.bf16.gmra.mrb[0].mxu0 %v628
    %v921 = vpop.f32.mrb[0].mxu0
    %v922 = vadd.f32 %v716, %v921
    %v923 = vpop.f32.mrb[0].mxu0
    %v924 = vadd.f32 %v720, %v923
    %v925 = vpop.f32.mrb[0].mxu0
    %v926 = vadd.f32 %v716, %v925
    %v927 = vpop.f32.mrb[0].mxu0
    %v928 = vadd.f32 %v720, %v927
    %929 = vmatprep.mubr.bf16.mxu0 %v818
    %930 = vmatmul.mubr.bf16.gmra.mrb[0].mxu0 %v631
    %v931 = vpop.f32.mrb[0].mxu0
    %v932 = vadd.f32 %v716, %v931
    %v933 = vpop.f32.mrb[0].mxu0
    %v934 = vadd.f32 %v720, %v933
    %v935 = vpop.f32.mrb[0].mxu0
    %v936 = vadd.f32 %v716, %v935
    %v937 = vpop.f32.mrb[0].mxu0
    %v938 = vadd.f32 %v720, %v937
    %939 = vmatprep.mubr.bf16.mxu0 %v820
    %940 = vmatmul.mubr.bf16.gmra.mrb[0].mxu0 %v634
    %v941 = vpop.f32.mrb[0].mxu0
    %v942 = vadd.f32 %v716, %v941
    %v943 = vpop.f32.mrb[0].mxu0
    %v944 = vadd.f32 %v720, %v943
    %v945 = vpop.f32.mrb[0].mxu0
    %v946 = vadd.f32 %v716, %v945
    %v947 = vpop.f32.mrb[0].mxu0
    %v948 = vadd.f32 %v720, %v947
    %949 = vmatprep.mubr.bf16.mxu0 %v822
    %950 = vmatmul.mubr.bf16.gmra.mrb[0].mxu0 %v637
    %v951 = vpop.f32.mrb[0].mxu0
    %v952 = vadd.f32 %v716, %v951
    %v953 = vpop.f32.mrb[0].mxu0
    %v954 = vadd.f32 %v720, %v953
    %v955 = vpop.f32.mrb[0].mxu0
    %v956 = vadd.f32 %v716, %v955
    %v957 = vpop.f32.mrb[0].mxu0
    %v958 = vadd.f32 %v720, %v957
    %959 = vmatprep.mubr.bf16.mxu0 %v824
    %960 = vmatmul.mubr.bf16.gmra.mrb[0].mxu0 %v640
    %v961 = vpop.f32.mrb[0].mxu0
    %v962 = vadd.f32 %v716, %v961
    %v963 = vpop.f32.mrb[0].mxu0
    %v964 = vadd.f32 %v720, %v963
    %v965 = vpop.f32.mrb[0].mxu0
    %v966 = vadd.f32 %v716, %v965
    %v967 = vpop.f32.mrb[0].mxu0
    %v968 = vadd.f32 %v720, %v967
    %969 = vmatprep.mubr.bf16.mxu0 %v826
    %970 = vmatmul.mubr.bf16.gmra.mrb[0].mxu0 %v643
    %v971 = vpop.f32.mrb[0].mxu0
    %v972 = vadd.f32 %v716, %v971
    %v973 = vpop.f32.mrb[0].mxu0
    %v974 = vadd.f32 %v720, %v973
    %v975 = vpop.f32.mrb[0].mxu0
    %v976 = vadd.f32 %v716, %v975
    %v977 = vpop.f32.mrb[0].mxu0
    %v978 = vadd.f32 %v720, %v977
    %979 = vmatprep.mubr.bf16.mxu0 %v828
    %980 = vmatmul.mubr.bf16.gmra.mrb[0].mxu0 %v646
    %v981 = vpop.f32.mrb[0].mxu0
    %v982 = vadd.f32 %v716, %v981
    %v983 = vpop.f32.mrb[0].mxu0
    %v984 = vadd.f32 %v720, %v983
    %v985 = vpop.f32.mrb[0].mxu0
    %v986 = vadd.f32 %v716, %v985
    %v987 = vpop.f32.mrb[0].mxu0
    %v988 = vadd.f32 %v720, %v987
    %989 = vmatprep.mubr.bf16.mxu0 %v830
    %990 = vmatmul.mubr.bf16.gmra.mrb[0].mxu0 %v649
    %v991 = vpop.f32.mrb[0].mxu0
    %v992 = vadd.f32 %v716, %v991
    %v993 = vpop.f32.mrb[0].mxu0
    %v994 = vadd.f32 %v720, %v993
    %v995 = vpop.f32.mrb[0].mxu0
    %v996 = vadd.f32 %v716, %v995
    %v997 = vpop.f32.mrb[0].mxu0
    %v998 = vadd.f32 %v720, %v997
    %999 = vmatprep.mubr.bf16.mxu0 %v832
    %1000 = vmatmul.mubr.bf16.gmra.mrb[0].mxu0 %v652
    %v1001 = vpop.f32.mrb[0].mxu0
    %v1002 = vadd.f32 %v716, %v1001
    %v1003 = vpop.f32.mrb[0].mxu0
    %v1004 = vadd.f32 %v720, %v1003
    %v1005 = vpop.f32.mrb[0].mxu0
    %v1006 = vadd.f32 %v716, %v1005
    %v1007 = vpop.f32.mrb[0].mxu0
    %v1008 = vadd.f32 %v720, %v1007
    %1009 = vmatprep.mubr.bf16.mxu0 %v834
    %1010 = vmatmul.mubr.bf16.gmra.mrb[0].mxu0 %v655
    %v1011 = vpop.f32.mrb[0].mxu0
    %v1012 = vadd.f32 %v716, %v1011
    %v1013 = vpop.f32.mrb[0].mxu0
    %v1014 = vadd.f32 %v720, %v1013
    %v1015 = vpop.f32.mrb[0].mxu0
    %v1016 = vadd.f32 %v716, %v1015
    %v1017 = vpop.f32.mrb[0].mxu0
    %v1018 = vadd.f32 %v720, %v1017
    %1019 = vmatprep.mubr.bf16.mxu0 %v836
    %1020 = vmatmul.mubr.bf16.gmra.mrb[0].mxu0 %v658
    %v1021 = vpop.f32.mrb[0].mxu0
    %v1022 = vadd.f32 %v716, %v1021
    %v1023 = vpop.f32.mrb[0].mxu0
    %v1024 = vadd.f32 %v720, %v1023
    %v1025 = vpop.f32.mrb[0].mxu0
    %v1026 = vadd.f32 %v716, %v1025
    %v1027 = vpop.f32.mrb[0].mxu0
    %v1028 = vadd.f32 %v720, %v1027
    %1029 = vmatprep.mubr.bf16.mxu0 %v838
    %1030 = vmatmul.mubr.bf16.gmra.mrb[0].mxu0 %v661
    %v1031 = vpop.f32.mrb[0].mxu0
    %v1032 = vadd.f32 %v716, %v1031
    %v1033 = vpop.f32.mrb[0].mxu0
    %v1034 = vadd.f32 %v720, %v1033
    %v1035 = vpop.f32.mrb[0].mxu0
    %v1036 = vadd.f32 %v716, %v1035
    %v1037 = vpop.f32.mrb[0].mxu0
    %v1038 = vadd.f32 %v720, %v1037
    %1039 = vmatprep.mubr.bf16.mxu0 %v840
    %1040 = vmatmul.mubr.bf16.gmra.mrb[0].mxu0 %v664
    %v1041 = vpop.f32.mrb[0].mxu0
    %v1042 = vadd.f32 %v716, %v1041
    %v1043 = vpop.f32.mrb[0].mxu0
    %v1044 = vadd.f32 %v720, %v1043
    %v1045 = vpop.f32.mrb[0].mxu0
    %v1046 = vadd.f32 %v716, %v1045
    %v1047 = vpop.f32.mrb[0].mxu0
    %v1048 = vadd.f32 %v720, %v1047
    %1049 = vmatprep.mubr.bf16.mxu0 %v842
    %1050 = vmatmul.mubr.bf16.gmra.mrb[0].mxu0 %v667
    %v1051 = vpop.f32.mrb[0].mxu0
    %v1052 = vadd.f32 %v716, %v1051
    %v1053 = vpop.f32.mrb[0].mxu0
    %v1054 = vadd.f32 %v720, %v1053
    %v1055 = vpop.f32.mrb[0].mxu0
    %v1056 = vadd.f32 %v716, %v1055
    %v1057 = vpop.f32.mrb[0].mxu0
    %v1058 = vadd.f32 %v720, %v1057
    %1059 = vmatprep.mubr.bf16.mxu0 %v844
    %1060 = vmatmul.mubr.bf16.gmra.mrb[0].mxu0 %v670
    %v1061 = vpop.f32.mrb[0].mxu0
    %v1062 = vadd.f32 %v716, %v1061
    %v1063 = vpop.f32.mrb[0].mxu0
    %v1064 = vadd.f32 %v720, %v1063
    %v1065 = vpop.f32.mrb[0].mxu0
    %v1066 = vadd.f32 %v716, %v1065
    %v1067 = vpop.f32.mrb[0].mxu0
    %v1068 = vadd.f32 %v720, %v1067
    %1069 = vmatprep.mubr.bf16.mxu0 %v846
    %1070 = vmatmul.mubr.bf16.gmra.mrb[0].mxu0 %v673
    %v1071 = vpop.f32.mrb[0].mxu0
    %v1072 = vadd.f32 %v716, %v1071
    %v1073 = vpop.f32.mrb[0].mxu0
    %v1074 = vadd.f32 %v720, %v1073
    %v1075 = vpop.f32.mrb[0].mxu0
    %v1076 = vadd.f32 %v716, %v1075
    %v1077 = vpop.f32.mrb[0].mxu0
    %v1078 = vadd.f32 %v720, %v1077
    %1079 = vmatprep.mubr.bf16.mxu0 %v848
    %1080 = vmatmul.mubr.bf16.gmra.mrb[0].mxu0 %v676
    %v1081 = vpop.f32.mrb[0].mxu0
    %v1082 = vadd.f32 %v716, %v1081
    %v1083 = vpop.f32.mrb[0].mxu0
    %v1084 = vadd.f32 %v720, %v1083
    %v1085 = vpop.f32.mrb[0].mxu0
    %v1086 = vadd.f32 %v716, %v1085
    %v1087 = vpop.f32.mrb[0].mxu0
    %v1088 = vadd.f32 %v720, %v1087
    %1089 = vmatprep.mubr.bf16.mxu0 %v850
    %1090 = vmatmul.mubr.bf16.gmra.mrb[0].mxu0 %v679
    %v1091 = vpop.f32.mrb[0].mxu0
    %v1092 = vadd.f32 %v716, %v1091
    %v1093 = vpop.f32.mrb[0].mxu0
    %v1094 = vadd.f32 %v720, %v1093
    %v1095 = vpop.f32.mrb[0].mxu0
    %v1096 = vadd.f32 %v716, %v1095
    %v1097 = vpop.f32.mrb[0].mxu0
    %v1098 = vadd.f32 %v720, %v1097
    %1099 = vmatprep.mubr.bf16.mxu0 %v852
    %1100 = vmatmul.mubr.bf16.gmra.mrb[0].mxu0 %v682
    %v1101 = vpop.f32.mrb[0].mxu0
    %v1102 = vadd.f32 %v716, %v1101
    %v1103 = vpop.f32.mrb[0].mxu0
    %v1104 = vadd.f32 %v720, %v1103
    %v1105 = vpop.f32.mrb[0].mxu0
    %v1106 = vadd.f32 %v716, %v1105
    %v1107 = vpop.f32.mrb[0].mxu0
    %v1108 = vadd.f32 %v720, %v1107
    %1109 = vmatprep.mubr.bf16.mxu0 %v854
    %1110 = vmatmul.mubr.bf16.gmra.mrb[0].mxu0 %v685
    %v1111 = vpop.f32.mrb[0].mxu0
    %v1112 = vadd.f32 %v716, %v1111
    %v1113 = vpop.f32.mrb[0].mxu0
    %v1114 = vadd.f32 %v720, %v1113
    %v1115 = vpop.f32.mrb[0].mxu0
    %v1116 = vadd.f32 %v716, %v1115
    %v1117 = vpop.f32.mrb[0].mxu0
    %v1118 = vadd.f32 %v720, %v1117
    %1119 = vmatprep.mubr.bf16.mxu0 %v856
    %1120 = vmatmul.mubr.bf16.gmra.mrb[0].mxu0 %v688
    %v1121 = vpop.f32.mrb[0].mxu0
    %v1122 = vadd.f32 %v716, %v1121
    %v1123 = vpop.f32.mrb[0].mxu0
    %v1124 = vadd.f32 %v720, %v1123
    %v1125 = vpop.f32.mrb[0].mxu0
    %v1126 = vadd.f32 %v716, %v1125
    %v1127 = vpop.f32.mrb[0].mxu0
    %v1128 = vadd.f32 %v720, %v1127
    %1129 = vmatprep.mubr.bf16.mxu0 %v858
    %1130 = vmatmul.mubr.bf16.gmra.mrb[0].mxu0 %v691
    %v1131 = vpop.f32.mrb[0].mxu0
    %v1132 = vadd.f32 %v716, %v1131
    %v1133 = vpop.f32.mrb[0].mxu0
    %v1134 = vadd.f32 %v720, %v1133
    %v1135 = vpop.f32.mrb[0].mxu0
    %v1136 = vadd.f32 %v716, %v1135
    %v1137 = vpop.f32.mrb[0].mxu0
    %v1138 = vadd.f32 %v720, %v1137
    %1139 = vdwg.mxu0
    %v1140 = vmax.f32 %v902, %v912
    %v1141 = vmax.f32 %v904, %v914
    %v1142 = vmax.f32 %v906, %v916
    %v1143 = vmax.f32 %v908, %v918
    %v1144 = vmax.f32 %v922, %v932
    %v1145 = vmax.f32 %v924, %v934
    %v1146 = vmax.f32 %v926, %v936
    %v1147 = vmax.f32 %v928, %v938
    %v1148 = vmax.f32 %v942, %v952
    %v1149 = vmax.f32 %v944, %v954
    %v1150 = vmax.f32 %v946, %v956
    %v1151 = vmax.f32 %v948, %v958
    %v1152 = vmax.f32 %v962, %v972
    %v1153 = vmax.f32 %v964, %v974
    %v1154 = vmax.f32 %v966, %v976
    %v1155 = vmax.f32 %v968, %v978
    %v1156 = vmax.f32 %v982, %v992
    %v1157 = vmax.f32 %v984, %v994
    %v1158 = vmax.f32 %v986, %v996
    %v1159 = vmax.f32 %v988, %v998
    %v1160 = vmax.f32 %v1002, %v1012
    %v1161 = vmax.f32 %v1004, %v1014
    %v1162 = vmax.f32 %v1006, %v1016
    %v1163 = vmax.f32 %v1008, %v1018
    %v1164 = vmax.f32 %v1022, %v1032
    %v1165 = vmax.f32 %v1024, %v1034
    %v1166 = vmax.f32 %v1026, %v1036
    %v1167 = vmax.f32 %v1028, %v1038
    %v1168 = vmax.f32 %v1042, %v1052
    %v1169 = vmax.f32 %v1044, %v1054
    %v1170 = vmax.f32 %v1046, %v1056
    %v1171 = vmax.f32 %v1048, %v1058
    %v1172 = vmax.f32 %v1062, %v1072
    %v1173 = vmax.f32 %v1064, %v1074
    %v1174 = vmax.f32 %v1066, %v1076
    %v1175 = vmax.f32 %v1068, %v1078
    %v1176 = vmax.f32 %v1082, %v1092
    %v1177 = vmax.f32 %v1084, %v1094
    %v1178 = vmax.f32 %v1086, %v1096
    %v1179 = vmax.f32 %v1088, %v1098
    %v1180 = vmax.f32 %v1102, %v1112
    %v1181 = vmax.f32 %v1104, %v1114
    %v1182 = vmax.f32 %v1106, %v1116
    %v1183 = vmax.f32 %v1108, %v1118
    %v1184 = vmax.f32 %v1122, %v1132
    %v1185 = vmax.f32 %v1124, %v1134
    %v1186 = vmax.f32 %v1126, %v1136
    %v1187 = vmax.f32 %v1128, %v1138
    %1236 = vrot.lane.b32.xlu0 %v1140, 118
    %v1237 = vpop.permute.xlu0 %1236
    %1238 = vrot.lane.b32.xlu0 %v1141, 118
    %v1239 = vpop.permute.xlu0 %1238
    %1240 = vrot.lane.b32.xlu0 %v1142, 118
    %v1241 = vpop.permute.xlu0 %1240
    %1242 = vrot.lane.b32.xlu0 %v1143, 118
    %v1243 = vpop.permute.xlu0 %1242
    %1244 = vrot.lane.b32.xlu0 %v1144, 118
    %v1245 = vpop.permute.xlu0 %1244
    %1246 = vrot.lane.b32.xlu0 %v1145, 118
    %v1247 = vpop.permute.xlu0 %1246
    %1248 = vrot.lane.b32.xlu0 %v1146, 118
    %v1249 = vpop.permute.xlu0 %1248
    %1250 = vrot.lane.b32.xlu0 %v1147, 118
    %v1251 = vpop.permute.xlu0 %1250
    %1252 = vrot.lane.b32.xlu0 %v1148, 118
    %v1253 = vpop.permute.xlu0 %1252
    %1254 = vrot.lane.b32.xlu0 %v1149, 118
    %v1255 = vpop.permute.xlu0 %1254
    %1256 = vrot.lane.b32.xlu0 %v1150, 118
    %v1257 = vpop.permute.xlu0 %1256
    %1258 = vrot.lane.b32.xlu0 %v1151, 118
    %v1259 = vpop.permute.xlu0 %1258
    %1260 = vrot.lane.b32.xlu0 %v1152, 118
    %v1261 = vpop.permute.xlu0 %1260
    %1262 = vrot.lane.b32.xlu0 %v1153, 118
    %v1263 = vpop.permute.xlu0 %1262
    %1264 = vrot.lane.b32.xlu0 %v1154, 118
    %v1265 = vpop.permute.xlu0 %1264
    %1266 = vrot.lane.b32.xlu0 %v1155, 118
    %v1267 = vpop.permute.xlu0 %1266
    %1268 = vrot.lane.b32.xlu0 %v1156, 118
    %v1269 = vpop.permute.xlu0 %1268
    %1270 = vrot.lane.b32.xlu0 %v1157, 118
    %v1271 = vpop.permute.xlu0 %1270
    %1272 = vrot.lane.b32.xlu0 %v1158, 118
    %v1273 = vpop.permute.xlu0 %1272
    %1274 = vrot.lane.b32.xlu0 %v1159, 118
    %v1275 = vpop.permute.xlu0 %1274
    %1276 = vrot.lane.b32.xlu0 %v1160, 118
    %v1277 = vpop.permute.xlu0 %1276
    %1278 = vrot.lane.b32.xlu0 %v1161, 118
    %v1279 = vpop.permute.xlu0 %1278
    %1280 = vrot.lane.b32.xlu0 %v1162, 118
    %v1281 = vpop.permute.xlu0 %1280
    %1282 = vrot.lane.b32.xlu0 %v1163, 118
    %v1283 = vpop.permute.xlu0 %1282
    %1284 = vrot.lane.b32.xlu0 %v1164, 118
    %v1285 = vpop.permute.xlu0 %1284
    %1286 = vrot.lane.b32.xlu0 %v1165, 118
    %v1287 = vpop.permute.xlu0 %1286
    %1288 = vrot.lane.b32.xlu0 %v1166, 118
    %v1289 = vpop.permute.xlu0 %1288
    %1290 = vrot.lane.b32.xlu0 %v1167, 118
    %v1291 = vpop.permute.xlu0 %1290
    %1292 = vrot.lane.b32.xlu0 %v1168, 118
    %v1293 = vpop.permute.xlu0 %1292
    %1294 = vrot.lane.b32.xlu0 %v1169, 118
    %v1295 = vpop.permute.xlu0 %1294
    %1296 = vrot.lane.b32.xlu0 %v1170, 118
    %v1297 = vpop.permute.xlu0 %1296
    %1298 = vrot.lane.b32.xlu0 %v1171, 118
    %v1299 = vpop.permute.xlu0 %1298
    %1300 = vrot.lane.b32.xlu0 %v1172, 118
    %v1301 = vpop.permute.xlu0 %1300
    %1302 = vrot.lane.b32.xlu0 %v1173, 118
    %v1303 = vpop.permute.xlu0 %1302
    %1304 = vrot.lane.b32.xlu0 %v1174, 118
    %v1305 = vpop.permute.xlu0 %1304
    %1306 = vrot.lane.b32.xlu0 %v1175, 118
    %v1307 = vpop.permute.xlu0 %1306
    %1308 = vrot.lane.b32.xlu0 %v1176, 118
    %v1309 = vpop.permute.xlu0 %1308
    %1310 = vrot.lane.b32.xlu0 %v1177, 118
    %v1311 = vpop.permute.xlu0 %1310
    %1312 = vrot.lane.b32.xlu0 %v1178, 118
    %v1313 = vpop.permute.xlu0 %1312
    %1314 = vrot.lane.b32.xlu0 %v1179, 118
    %v1315 = vpop.permute.xlu0 %1314
    %1316 = vrot.lane.b32.xlu0 %v1180, 118
    %v1317 = vpop.permute.xlu0 %1316
    %1318 = vrot.lane.b32.xlu0 %v1181, 118
    %v1319 = vpop.permute.xlu0 %1318
    %1320 = vrot.lane.b32.xlu0 %v1182, 118
    %v1321 = vpop.permute.xlu0 %1320
    %1322 = vrot.lane.b32.xlu0 %v1183, 118
    %v1323 = vpop.permute.xlu0 %1322
    %1324 = vrot.lane.b32.xlu0 %v1184, 118
    %v1325 = vpop.permute.xlu0 %1324
    %1326 = vrot.lane.b32.xlu0 %v1185, 118
    %v1327 = vpop.permute.xlu0 %1326
    %1328 = vrot.lane.b32.xlu0 %v1186, 118
    %v1329 = vpop.permute.xlu0 %1328
    %1330 = vrot.lane.b32.xlu0 %v1187, 118
    %v1331 = vpop.permute.xlu0 %1330
    %vm1332 = vcmask 965632
    %v1333 = vsel %vm1332, %v1237, %v1239
    %v1334 = vsel %vm1332, %v1241, %v1243
    %v1335 = vsel %vm1332, %v1245, %v1247
    %v1336 = vsel %vm1332, %v1249, %v1251
    %v1337 = vsel %vm1332, %v1253, %v1255
    %v1338 = vsel %vm1332, %v1257, %v1259
    %v1339 = vsel %vm1332, %v1261, %v1263
    %v1340 = vsel %vm1332, %v1265, %v1267
    %v1341 = vsel %vm1332, %v1269, %v1271
    %v1342 = vsel %vm1332, %v1273, %v1275
    %v1343 = vsel %vm1332, %v1277, %v1279
    %v1344 = vsel %vm1332, %v1281, %v1283
    %v1345 = vsel %vm1332, %v1285, %v1287
    %v1346 = vsel %vm1332, %v1289, %v1291
    %v1347 = vsel %vm1332, %v1293, %v1295
    %v1348 = vsel %vm1332, %v1297, %v1299
    %v1349 = vsel %vm1332, %v1301, %v1303
    %v1350 = vsel %vm1332, %v1305, %v1307
    %v1351 = vsel %vm1332, %v1309, %v1311
    %v1352 = vsel %vm1332, %v1313, %v1315
    %v1353 = vsel %vm1332, %v1317, %v1319
    %v1354 = vsel %vm1332, %v1321, %v1323
    %v1355 = vsel %vm1332, %v1325, %v1327
    %v1356 = vsel %vm1332, %v1329, %v1331
    %v1429 = vsel %vm1332, %v1239, %v1237
    %v1430 = vsel %vm1332, %v1243, %v1241
    %v1431 = vsel %vm1332, %v1247, %v1245
    %v1432 = vsel %vm1332, %v1251, %v1249
    %v1433 = vsel %vm1332, %v1255, %v1253
    %v1434 = vsel %vm1332, %v1259, %v1257
    %v1435 = vsel %vm1332, %v1263, %v1261
    %v1436 = vsel %vm1332, %v1267, %v1265
    %v1437 = vsel %vm1332, %v1271, %v1269
    %v1438 = vsel %vm1332, %v1275, %v1273
    %v1439 = vsel %vm1332, %v1279, %v1277
    %v1440 = vsel %vm1332, %v1283, %v1281
    %v1441 = vsel %vm1332, %v1287, %v1285
    %v1442 = vsel %vm1332, %v1291, %v1289
    %v1443 = vsel %vm1332, %v1295, %v1293
    %v1444 = vsel %vm1332, %v1299, %v1297
    %v1445 = vsel %vm1332, %v1303, %v1301
    %v1446 = vsel %vm1332, %v1307, %v1305
    %v1447 = vsel %vm1332, %v1311, %v1309
    %v1448 = vsel %vm1332, %v1315, %v1313
    %v1449 = vsel %vm1332, %v1319, %v1317
    %v1450 = vsel %vm1332, %v1323, %v1321
    %v1451 = vsel %vm1332, %v1327, %v1325
    %v1452 = vsel %vm1332, %v1331, %v1329
    %v1453 = vmax.f32 %v1140, %v1333
    %v1454 = vmax.f32 %v1141, %v1429
    %v1455 = vmax.f32 %v1142, %v1334
    %v1456 = vmax.f32 %v1143, %v1430
    %v1457 = vmax.f32 %v1144, %v1335
    %v1458 = vmax.f32 %v1145, %v1431
    %v1459 = vmax.f32 %v1146, %v1336
    %v1460 = vmax.f32 %v1147, %v1432
    %v1461 = vmax.f32 %v1148, %v1337
    %v1462 = vmax.f32 %v1149, %v1433
    %v1463 = vmax.f32 %v1150, %v1338
    %v1464 = vmax.f32 %v1151, %v1434
    %v1465 = vmax.f32 %v1152, %v1339
    %v1466 = vmax.f32 %v1153, %v1435
    %v1467 = vmax.f32 %v1154, %v1340
    %v1468 = vmax.f32 %v1155, %v1436
    %v1469 = vmax.f32 %v1156, %v1341
    %v1470 = vmax.f32 %v1157, %v1437
    %v1471 = vmax.f32 %v1158, %v1342
    %v1472 = vmax.f32 %v1159, %v1438
    %v1473 = vmax.f32 %v1160, %v1343
    %v1474 = vmax.f32 %v1161, %v1439
    %v1475 = vmax.f32 %v1162, %v1344
    %v1476 = vmax.f32 %v1163, %v1440
    %v1477 = vmax.f32 %v1164, %v1345
    %v1478 = vmax.f32 %v1165, %v1441
    %v1479 = vmax.f32 %v1166, %v1346
    %v1480 = vmax.f32 %v1167, %v1442
    %v1481 = vmax.f32 %v1168, %v1347
    %v1482 = vmax.f32 %v1169, %v1443
    %v1483 = vmax.f32 %v1170, %v1348
    %v1484 = vmax.f32 %v1171, %v1444
    %v1485 = vmax.f32 %v1172, %v1349
    %v1486 = vmax.f32 %v1173, %v1445
    %v1487 = vmax.f32 %v1174, %v1350
    %v1488 = vmax.f32 %v1175, %v1446
    %v1489 = vmax.f32 %v1176, %v1351
    %v1490 = vmax.f32 %v1177, %v1447
    %v1491 = vmax.f32 %v1178, %v1352
    %v1492 = vmax.f32 %v1179, %v1448
    %v1493 = vmax.f32 %v1180, %v1353
    %v1494 = vmax.f32 %v1181, %v1449
    %v1495 = vmax.f32 %v1182, %v1354
    %v1496 = vmax.f32 %v1183, %v1450
    %v1497 = vmax.f32 %v1184, %v1355
    %v1498 = vmax.f32 %v1185, %v1451
    %v1499 = vmax.f32 %v1186, %v1356
    %v1500 = vmax.f32 %v1187, %v1452
    %v1501 = vmax.f32 %v1453, 0.0
    %v1502 = vmax.f32 %v1454, 0.0
    %v1503 = vmax.f32 %v1455, 0.0
    %v1504 = vmax.f32 %v1456, 0.0
    %v1505 = vmax.f32 %v1457, 0.0
    %v1506 = vmax.f32 %v1458, 0.0
    %v1507 = vmax.f32 %v1459, 0.0
    %v1508 = vmax.f32 %v1460, 0.0
    %v1509 = vmax.f32 %v1461, 0.0
    %v1510 = vmax.f32 %v1462, 0.0
    %v1511 = vmax.f32 %v1463, 0.0
    %v1512 = vmax.f32 %v1464, 0.0
    %v1513 = vmax.f32 %v1465, 0.0
    %v1514 = vmax.f32 %v1466, 0.0
    %v1515 = vmax.f32 %v1467, 0.0
    %v1516 = vmax.f32 %v1468, 0.0
    %v1517 = vmax.f32 %v1469, 0.0
    %v1518 = vmax.f32 %v1470, 0.0
    %v1519 = vmax.f32 %v1471, 0.0
    %v1520 = vmax.f32 %v1472, 0.0
    %v1521 = vmax.f32 %v1473, 0.0
    %v1522 = vmax.f32 %v1474, 0.0
    %v1523 = vmax.f32 %v1475, 0.0
    %v1524 = vmax.f32 %v1476, 0.0
    %v1525 = vmax.f32 %v1477, 0.0
    %v1526 = vmax.f32 %v1478, 0.0
    %v1527 = vmax.f32 %v1479, 0.0
    %v1528 = vmax.f32 %v1480, 0.0
    %v1529 = vmax.f32 %v1481, 0.0
    %v1530 = vmax.f32 %v1482, 0.0
    %v1531 = vmax.f32 %v1483, 0.0
    %v1532 = vmax.f32 %v1484, 0.0
    %v1533 = vmax.f32 %v1485, 0.0
    %v1534 = vmax.f32 %v1486, 0.0
    %v1535 = vmax.f32 %v1487, 0.0
    %v1536 = vmax.f32 %v1488, 0.0
    %v1537 = vmax.f32 %v1489, 0.0
    %v1538 = vmax.f32 %v1490, 0.0
    %v1539 = vmax.f32 %v1491, 0.0
    %v1540 = vmax.f32 %v1492, 0.0
    %v1541 = vmax.f32 %v1493, 0.0
    %v1542 = vmax.f32 %v1494, 0.0
    %v1543 = vmax.f32 %v1495, 0.0
    %v1544 = vmax.f32 %v1496, 0.0
    %v1545 = vmax.f32 %v1497, 0.0
    %v1546 = vmax.f32 %v1498, 0.0
    %v1547 = vmax.f32 %v1499, 0.0
    %v1548 = vmax.f32 %v1500, 0.0
    %v1549 = vpack.c.bf16 %v1503, %v1501
    %v1550 = vpack.c.bf16 %v1504, %v1502
    %v1551 = vpack.c.bf16 %v1507, %v1505
    %v1552 = vpack.c.bf16 %v1508, %v1506
    %v1553 = vpack.c.bf16 %v1511, %v1509
    %v1554 = vpack.c.bf16 %v1512, %v1510
    %v1555 = vpack.c.bf16 %v1515, %v1513
    %v1556 = vpack.c.bf16 %v1516, %v1514
    %v1557 = vpack.c.bf16 %v1519, %v1517
    %v1558 = vpack.c.bf16 %v1520, %v1518
    %v1559 = vpack.c.bf16 %v1523, %v1521
    %v1560 = vpack.c.bf16 %v1524, %v1522
    %v1561 = vpack.c.bf16 %v1527, %v1525
    %v1562 = vpack.c.bf16 %v1528, %v1526
    %v1563 = vpack.c.bf16 %v1531, %v1529
    %v1564 = vpack.c.bf16 %v1532, %v1530
    %v1565 = vpack.c.bf16 %v1535, %v1533
    %v1566 = vpack.c.bf16 %v1536, %v1534
    %v1567 = vpack.c.bf16 %v1539, %v1537
    %v1568 = vpack.c.bf16 %v1540, %v1538
    %v1569 = vpack.c.bf16 %v1543, %v1541
    %v1570 = vpack.c.bf16 %v1544, %v1542
    %v1571 = vpack.c.bf16 %v1547, %v1545
    %v1572 = vpack.c.bf16 %v1548, %v1546
    %v1573 = vld [vmem:[#allocation2] sm:$0xff]
    %v1574 = vld [vmem:[#allocation2 + $0x8] sm:$0xff]
    %v1575 = vld [vmem:[#allocation2 + $0x10] sm:$0xff]
    %v1576 = vld [vmem:[#allocation2 + $0x18] sm:$0xff]
    %v1577 = vld [vmem:[#allocation2 + $0x20] sm:$0xff]
    %v1578 = vld [vmem:[#allocation2 + $0x28] sm:$0xff]
    %v1579 = vld [vmem:[#allocation2 + $0x30] sm:$0xff]
    %v1580 = vld [vmem:[#allocation2 + $0x38] sm:$0xff]
    %v1581 = vld [vmem:[#allocation2 + $0x40] sm:$0xff]
    %v1582 = vld [vmem:[#allocation2 + $0x48] sm:$0xff]
    %v1583 = vld [vmem:[#allocation2 + $0x50] sm:$0xff]
    %v1584 = vld [vmem:[#allocation2 + $0x58] sm:$0xff]
    %v1585 = vld [vmem:[#allocation2 + $0x60] sm:$0xff]
    %v1586 = vld [vmem:[#allocation2 + $0x68] sm:$0xff]
    %v1587 = vld [vmem:[#allocation2 + $0x70] sm:$0xff]
    %v1588 = vld [vmem:[#allocation2 + $0x78] sm:$0xff]
    %v1589 = vld [vmem:[#allocation2 + $0x80] sm:$0xff]
    %v1590 = vld [vmem:[#allocation2 + $0x88] sm:$0xff]
    %v1591 = vld [vmem:[#allocation2 + $0x90] sm:$0xff]
    %v1592 = vld [vmem:[#allocation2 + $0x98] sm:$0xff]
    %v1593 = vld [vmem:[#allocation2 + $0xa0] sm:$0xff]
    %v1594 = vld [vmem:[#allocation2 + $0xa8] sm:$0xff]
    %v1595 = vld [vmem:[#allocation2 + $0xb0] sm:$0xff]
    %v1596 = vld [vmem:[#allocation2 + $0xb8] sm:$0xff]
    %v1597 = vld [vmem:[#allocation2 + $0xc0] sm:$0xff]
    %v1598 = vld [vmem:[#allocation2 + $0xc8] sm:$0xff]
    %v1599 = vld [vmem:[#allocation2 + $0xd0] sm:$0xff]
    %v1600 = vld [vmem:[#allocation2 + $0xd8] sm:$0xff]
    %v1601 = vld [vmem:[#allocation2 + $0xe0] sm:$0xff]
    %v1602 = vld [vmem:[#allocation2 + $0xe8] sm:$0xff]
    %v1603 = vld [vmem:[#allocation2 + $0xf0] sm:$0xff]
    %v1604 = vld [vmem:[#allocation2 + $0xf8] sm:$0xff]
    %v1605 = vld [vmem:[#allocation2 + $0x100] sm:$0xff]
    %v1606 = vld [vmem:[#allocation2 + $0x108] sm:$0xff]
    %v1607 = vld [vmem:[#allocation2 + $0x110] sm:$0xff]
    %v1608 = vld [vmem:[#allocation2 + $0x118] sm:$0xff]
    %v1609 = vld [vmem:[#allocation2 + $0x120] sm:$0xff]
    %v1610 = vld [vmem:[#allocation2 + $0x128] sm:$0xff]
    %v1611 = vld [vmem:[#allocation2 + $0x130] sm:$0xff]
    %v1612 = vld [vmem:[#allocation2 + $0x138] sm:$0xff]
    %v1613 = vld [vmem:[#allocation2 + $0x140] sm:$0xff]
    %v1614 = vld [vmem:[#allocation2 + $0x148] sm:$0xff]
    %v1615 = vld [vmem:[#allocation2 + $0x150] sm:$0xff]
    %v1616 = vld [vmem:[#allocation2 + $0x158] sm:$0xff]
    %v1617 = vld [vmem:[#allocation2 + $0x160] sm:$0xff]
    %v1618 = vld [vmem:[#allocation2 + $0x168] sm:$0xff]
    %v1619 = vld [vmem:[#allocation2 + $0x170] sm:$0xff]
    %v1620 = vld [vmem:[#allocation2 + $0x178] sm:$0xff]
    %v1621 = vld [vmem:[#allocation2 + $0x180] sm:$0xff]
    %v1622 = vld [vmem:[#allocation2 + $0x188] sm:$0xff]
    %v1623 = vld [vmem:[#allocation2 + $0x190] sm:$0xff]
    %v1624 = vld [vmem:[#allocation2 + $0x198] sm:$0xff]
    %v1625 = vld [vmem:[#allocation2 + $0x1a0] sm:$0xff]
    %v1626 = vld [vmem:[#allocation2 + $0x1a8] sm:$0xff]
    %v1627 = vld [vmem:[#allocation2 + $0x1b0] sm:$0xff]
    %v1628 = vld [vmem:[#allocation2 + $0x1b8] sm:$0xff]
    %v1629 = vld [vmem:[#allocation2 + $0x1c0] sm:$0xff]
    %v1630 = vld [vmem:[#allocation2 + $0x1c8] sm:$0xff]
    %v1631 = vld [vmem:[#allocation2 + $0x1d0] sm:$0xff]
    %v1632 = vld [vmem:[#allocation2 + $0x1d8] sm:$0xff]
    %v1633 = vld [vmem:[#allocation2 + $0x1e0] sm:$0xff]
    %v1634 = vld [vmem:[#allocation2 + $0x1e8] sm:$0xff]
    %v1635 = vld [vmem:[#allocation2 + $0x1f0] sm:$0xff]
    %v1636 = vld [vmem:[#allocation2 + $0x1f8] sm:$0xff]
    %v1637 = vld [vmem:[#allocation2 + $0x200] sm:$0xff]
    %v1638 = vld [vmem:[#allocation2 + $0x208] sm:$0xff]
    %v1639 = vld [vmem:[#allocation2 + $0x210] sm:$0xff]
    %v1640 = vld [vmem:[#allocation2 + $0x218] sm:$0xff]
    %v1641 = vld [vmem:[#allocation2 + $0x220] sm:$0xff]
    %v1642 = vld [vmem:[#allocation2 + $0x228] sm:$0xff]
    %v1643 = vld [vmem:[#allocation2 + $0x230] sm:$0xff]
    %v1644 = vld [vmem:[#allocation2 + $0x238] sm:$0xff]
    %v1645 = vld [vmem:[#allocation2 + $0x240] sm:$0xff]
    %v1646 = vld [vmem:[#allocation2 + $0x248] sm:$0xff]
    %v1647 = vld [vmem:[#allocation2 + $0x250] sm:$0xff]
    %v1648 = vld [vmem:[#allocation2 + $0x258] sm:$0xff]
    %v1649 = vld [vmem:[#allocation2 + $0x260] sm:$0xff]
    %v1650 = vld [vmem:[#allocation2 + $0x268] sm:$0xff]
    %v1651 = vld [vmem:[#allocation2 + $0x270] sm:$0xff]
    %v1652 = vld [vmem:[#allocation2 + $0x278] sm:$0xff]
    %v1653 = vld [vmem:[#allocation2 + $0x280] sm:$0xff]
    %v1654 = vld [vmem:[#allocation2 + $0x288] sm:$0xff]
    %v1655 = vld [vmem:[#allocation2 + $0x290] sm:$0xff]
    %v1656 = vld [vmem:[#allocation2 + $0x298] sm:$0xff]
    %v1657 = vld [vmem:[#allocation2 + $0x2a0] sm:$0xff]
    %v1658 = vld [vmem:[#allocation2 + $0x2a8] sm:$0xff]
    %v1659 = vld [vmem:[#allocation2 + $0x2b0] sm:$0xff]
    %v1660 = vld [vmem:[#allocation2 + $0x2b8] sm:$0xff]
    %v1661 = vld [vmem:[#allocation2 + $0x2c0] sm:$0xff]
    %v1662 = vld [vmem:[#allocation2 + $0x2c8] sm:$0xff]
    %v1663 = vld [vmem:[#allocation2 + $0x2d0] sm:$0xff]
    %v1664 = vld [vmem:[#allocation2 + $0x2d8] sm:$0xff]
    %v1665 = vld [vmem:[#allocation2 + $0x2e0] sm:$0xff]
    %v1666 = vld [vmem:[#allocation2 + $0x2e8] sm:$0xff]
    %v1667 = vld [vmem:[#allocation2 + $0x2f0] sm:$0xff]
    %v1668 = vld [vmem:[#allocation2 + $0x2f8] sm:$0xff]
    %v1669 = vld [vmem:[#allocation2 + $0x300] sm:$0xff]
    %v1670 = vld [vmem:[#allocation2 + $0x308] sm:$0xff]
    %v1671 = vld [vmem:[#allocation2 + $0x310] sm:$0xff]
    %v1672 = vld [vmem:[#allocation2 + $0x318] sm:$0xff]
    %v1673 = vld [vmem:[#allocation2 + $0x320] sm:$0xff]
    %v1674 = vld [vmem:[#allocation2 + $0x328] sm:$0xff]
    %v1675 = vld [vmem:[#allocation2 + $0x330] sm:$0xff]
    %v1676 = vld [vmem:[#allocation2 + $0x338] sm:$0xff]
    %v1677 = vld [vmem:[#allocation2 + $0x340] sm:$0xff]
    %v1678 = vld [vmem:[#allocation2 + $0x348] sm:$0xff]
    %v1679 = vld [vmem:[#allocation2 + $0x350] sm:$0xff]
    %v1680 = vld [vmem:[#allocation2 + $0x358] sm:$0xff]
    %v1681 = vld [vmem:[#allocation2 + $0x360] sm:$0xff]
    %v1682 = vld [vmem:[#allocation2 + $0x368] sm:$0xff]
    %v1683 = vld [vmem:[#allocation2 + $0x370] sm:$0xff]
    %v1684 = vld [vmem:[#allocation2 + $0x378] sm:$0xff]
    %v1685 = vld [vmem:[#allocation2 + $0x380] sm:$0xff]
    %v1686 = vld [vmem:[#allocation2 + $0x388] sm:$0xff]
    %v1687 = vld [vmem:[#allocation2 + $0x390] sm:$0xff]
    %v1688 = vld [vmem:[#allocation2 + $0x398] sm:$0xff]
    %v1689 = vld [vmem:[#allocation2 + $0x3a0] sm:$0xff]
    %v1690 = vld [vmem:[#allocation2 + $0x3a8] sm:$0xff]
    %v1691 = vld [vmem:[#allocation2 + $0x3b0] sm:$0xff]
    %v1692 = vld [vmem:[#allocation2 + $0x3b8] sm:$0xff]
    %v1693 = vld [vmem:[#allocation2 + $0x3c0] sm:$0xff]
    %v1694 = vld [vmem:[#allocation2 + $0x3c8] sm:$0xff]
    %v1695 = vld [vmem:[#allocation2 + $0x3d0] sm:$0xff]
    %v1696 = vld [vmem:[#allocation2 + $0x3d8] sm:$0xff]
    %v1697 = vld [vmem:[#allocation2 + $0x3e0] sm:$0xff]
    %v1698 = vld [vmem:[#allocation2 + $0x3e8] sm:$0xff]
    %v1699 = vld [vmem:[#allocation2 + $0x3f0] sm:$0xff]
    %v1700 = vld [vmem:[#allocation2 + $0x3f8] sm:$0xff]
    %v1701 = vld [vmem:[#allocation2 + $0x400] sm:$0xff]
    %v1702 = vld [vmem:[#allocation2 + $0x408] sm:$0xff]
    %v1703 = vld [vmem:[#allocation2 + $0x410] sm:$0xff]
    %v1704 = vld [vmem:[#allocation2 + $0x418] sm:$0xff]
    %v1705 = vld [vmem:[#allocation2 + $0x420] sm:$0xff]
    %v1706 = vld [vmem:[#allocation2 + $0x428] sm:$0xff]
    %v1707 = vld [vmem:[#allocation2 + $0x430] sm:$0xff]
    %v1708 = vld [vmem:[#allocation2 + $0x438] sm:$0xff]
    %v1709 = vld [vmem:[#allocation2 + $0x440] sm:$0xff]
    %v1710 = vld [vmem:[#allocation2 + $0x448] sm:$0xff]
    %v1711 = vld [vmem:[#allocation2 + $0x450] sm:$0xff]
    %v1712 = vld [vmem:[#allocation2 + $0x458] sm:$0xff]
    %v1713 = vld [vmem:[#allocation2 + $0x460] sm:$0xff]
    %v1714 = vld [vmem:[#allocation2 + $0x468] sm:$0xff]
    %v1715 = vld [vmem:[#allocation2 + $0x470] sm:$0xff]
    %v1716 = vld [vmem:[#allocation2 + $0x478] sm:$0xff]
    %v1717 = vld [vmem:[#allocation2 + $0x480] sm:$0xff]
    %v1718 = vld [vmem:[#allocation2 + $0x488] sm:$0xff]
    %v1719 = vld [vmem:[#allocation2 + $0x490] sm:$0xff]
    %v1720 = vld [vmem:[#allocation2 + $0x498] sm:$0xff]
    %v1721 = vld [vmem:[#allocation2 + $0x4a0] sm:$0xff]
    %v1722 = vld [vmem:[#allocation2 + $0x4a8] sm:$0xff]
    %v1723 = vld [vmem:[#allocation2 + $0x4b0] sm:$0xff]
    %v1724 = vld [vmem:[#allocation2 + $0x4b8] sm:$0xff]
    %v1725 = vld [vmem:[#allocation2 + $0x4c0] sm:$0xff]
    %v1726 = vld [vmem:[#allocation2 + $0x4c8] sm:$0xff]
    %v1727 = vld [vmem:[#allocation2 + $0x4d0] sm:$0xff]
    %v1728 = vld [vmem:[#allocation2 + $0x4d8] sm:$0xff]
    %v1729 = vld [vmem:[#allocation2 + $0x4e0] sm:$0xff]
    %v1730 = vld [vmem:[#allocation2 + $0x4e8] sm:$0xff]
    %v1731 = vld [vmem:[#allocation2 + $0x4f0] sm:$0xff]
    %v1732 = vld [vmem:[#allocation2 + $0x4f8] sm:$0xff]
    %v1733 = vld [vmem:[%s4] sm:$0x3]
    %v1735 = vlaneseq
    %v1736 = vshrl.u32 %v1735, 7
    %v1737 = vsub.s32 0, %v1736
    %v1738 = vrot.slane %v1733, %v1737
    %v1739 = vlaneseq
    %v1740 = vshrl.u32 %v1739, 7
    %v1741 = vsub.s32 1, %v1740
    %v1742 = vrot.slane %v1733, %v1741
    %v1905 = vunpack.c.l.b16 %v1573
    %v1906 = vunpack.c.h.b16 %v1573
    %v1907 = vunpack.c.l.b16 %v1574
    %v1908 = vunpack.c.h.b16 %v1574
    %v1909 = vunpack.c.l.b16 %v1575
    %v1910 = vunpack.c.h.b16 %v1575
    %v1911 = vunpack.c.l.b16 %v1576
    %v1912 = vunpack.c.h.b16 %v1576
    %v1913 = vunpack.c.l.b16 %v1577
    %v1914 = vunpack.c.h.b16 %v1577
    %v1915 = vunpack.c.l.b16 %v1578
    %v1916 = vunpack.c.h.b16 %v1578
    %v1917 = vunpack.c.l.b16 %v1579
    %v1918 = vunpack.c.h.b16 %v1579
    %v1919 = vunpack.c.l.b16 %v1580
    %v1920 = vunpack.c.h.b16 %v1580
    %v1921 = vunpack.c.l.b16 %v1581
    %v1922 = vunpack.c.h.b16 %v1581
    %v1923 = vunpack.c.l.b16 %v1582
    %v1924 = vunpack.c.h.b16 %v1582
    %v1925 = vunpack.c.l.b16 %v1583
    %v1926 = vunpack.c.h.b16 %v1583
    %v1927 = vunpack.c.l.b16 %v1584
    %v1928 = vunpack.c.h.b16 %v1584
    %v1929 = vunpack.c.l.b16 %v1585
    %v1930 = vunpack.c.h.b16 %v1585
    %v1931 = vunpack.c.l.b16 %v1586
    %v1932 = vunpack.c.h.b16 %v1586
    %v1933 = vunpack.c.l.b16 %v1587
    %v1934 = vunpack.c.h.b16 %v1587
    %v1935 = vunpack.c.l.b16 %v1588
    %v1936 = vunpack.c.h.b16 %v1588
    %v1937 = vunpack.c.l.b16 %v1589
    %v1938 = vunpack.c.h.b16 %v1589
    %v1939 = vunpack.c.l.b16 %v1590
    %v1940 = vunpack.c.h.b16 %v1590
    %v1941 = vunpack.c.l.b16 %v1591
    %v1942 = vunpack.c.h.b16 %v1591
    %v1943 = vunpack.c.l.b16 %v1592
    %v1944 = vunpack.c.h.b16 %v1592
    %v1945 = vunpack.c.l.b16 %v1593
    %v1946 = vunpack.c.h.b16 %v1593
    %v1947 = vunpack.c.l.b16 %v1594
    %v1948 = vunpack.c.h.b16 %v1594
    %v1949 = vunpack.c.l.b16 %v1595
    %v1950 = vunpack.c.h.b16 %v1595
    %v1951 = vunpack.c.l.b16 %v1596
    %v1952 = vunpack.c.h.b16 %v1596
    %v1953 = vunpack.c.l.b16 %v1597
    %v1954 = vunpack.c.h.b16 %v1597
    %v1955 = vunpack.c.l.b16 %v1598
    %v1956 = vunpack.c.h.b16 %v1598
    %v1957 = vunpack.c.l.b16 %v1599
    %v1958 = vunpack.c.h.b16 %v1599
    %v1959 = vunpack.c.l.b16 %v1600
    %v1960 = vunpack.c.h.b16 %v1600
    %v1961 = vunpack.c.l.b16 %v1601
    %v1962 = vunpack.c.h.b16 %v1601
    %v1963 = vunpack.c.l.b16 %v1602
    %v1964 = vunpack.c.h.b16 %v1602
    %v1965 = vunpack.c.l.b16 %v1603
    %v1966 = vunpack.c.h.b16 %v1603
    %v1967 = vunpack.c.l.b16 %v1604
    %v1968 = vunpack.c.h.b16 %v1604
    %v1969 = vunpack.c.l.b16 %v1605
    %v1970 = vunpack.c.h.b16 %v1605
    %v1971 = vunpack.c.l.b16 %v1606
    %v1972 = vunpack.c.h.b16 %v1606
    %v1973 = vunpack.c.l.b16 %v1607
    %v1974 = vunpack.c.h.b16 %v1607
    %v1975 = vunpack.c.l.b16 %v1608
    %v1976 = vunpack.c.h.b16 %v1608
    %v1977 = vunpack.c.l.b16 %v1609
    %v1978 = vunpack.c.h.b16 %v1609
    %v1979 = vunpack.c.l.b16 %v1610
    %v1980 = vunpack.c.h.b16 %v1610
    %v1981 = vunpack.c.l.b16 %v1611
    %v1982 = vunpack.c.h.b16 %v1611
    %v1983 = vunpack.c.l.b16 %v1612
    %v1984 = vunpack.c.h.b16 %v1612
    %v1985 = vunpack.c.l.b16 %v1613
    %v1986 = vunpack.c.h.b16 %v1613
    %v1987 = vunpack.c.l.b16 %v1614
    %v1988 = vunpack.c.h.b16 %v1614
    %v1989 = vunpack.c.l.b16 %v1615
    %v1990 = vunpack.c.h.b16 %v1615
    %v1991 = vunpack.c.l.b16 %v1616
    %v1992 = vunpack.c.h.b16 %v1616
    %v1993 = vunpack.c.l.b16 %v1617
    %v1994 = vunpack.c.h.b16 %v1617
    %v1995 = vunpack.c.l.b16 %v1618
    %v1996 = vunpack.c.h.b16 %v1618
    %v1997 = vunpack.c.l.b16 %v1619
    %v1998 = vunpack.c.h.b16 %v1619
    %v1999 = vunpack.c.l.b16 %v1620
    %v2000 = vunpack.c.h.b16 %v1620
    %v2001 = vunpack.c.l.b16 %v1621
    %v2002 = vunpack.c.h.b16 %v1621
    %v2003 = vunpack.c.l.b16 %v1622
    %v2004 = vunpack.c.h.b16 %v1622
    %v2005 = vunpack.c.l.b16 %v1623
    %v2006 = vunpack.c.h.b16 %v1623
    %v2007 = vunpack.c.l.b16 %v1624
    %v2008 = vunpack.c.h.b16 %v1624
    %v2009 = vunpack.c.l.b16 %v1625
    %v2010 = vunpack.c.h.b16 %v1625
    %v2011 = vunpack.c.l.b16 %v1626
    %v2012 = vunpack.c.h.b16 %v1626
    %v2013 = vunpack.c.l.b16 %v1627
    %v2014 = vunpack.c.h.b16 %v1627
    %v2015 = vunpack.c.l.b16 %v1628
    %v2016 = vunpack.c.h.b16 %v1628
    %v2017 = vunpack.c.l.b16 %v1629
    %v2018 = vunpack.c.h.b16 %v1629
    %v2019 = vunpack.c.l.b16 %v1630
    %v2020 = vunpack.c.h.b16 %v1630
    %v2021 = vunpack.c.l.b16 %v1631
    %v2022 = vunpack.c.h.b16 %v1631
    %v2023 = vunpack.c.l.b16 %v1632
    %v2024 = vunpack.c.h.b16 %v1632
    %v2025 = vunpack.c.l.b16 %v1633
    %v2026 = vunpack.c.h.b16 %v1633
    %v2027 = vunpack.c.l.b16 %v1634
    %v2028 = vunpack.c.h.b16 %v1634
    %v2029 = vunpack.c.l.b16 %v1635
    %v2030 = vunpack.c.h.b16 %v1635
    %v2031 = vunpack.c.l.b16 %v1636
    %v2032 = vunpack.c.h.b16 %v1636
    %v2033 = vunpack.c.l.b16 %v1637
    %v2034 = vunpack.c.h.b16 %v1637
    %v2035 = vunpack.c.l.b16 %v1638
    %v2036 = vunpack.c.h.b16 %v1638
    %v2037 = vunpack.c.l.b16 %v1639
    %v2038 = vunpack.c.h.b16 %v1639
    %v2039 = vunpack.c.l.b16 %v1640
    %v2040 = vunpack.c.h.b16 %v1640
    %v2041 = vunpack.c.l.b16 %v1641
    %v2042 = vunpack.c.h.b16 %v1641
    %v2043 = vunpack.c.l.b16 %v1642
    %v2044 = vunpack.c.h.b16 %v1642
    %v2045 = vunpack.c.l.b16 %v1643
    %v2046 = vunpack.c.h.b16 %v1643
    %v2047 = vunpack.c.l.b16 %v1644
    %v2048 = vunpack.c.h.b16 %v1644
    %v2049 = vunpack.c.l.b16 %v1645
    %v2050 = vunpack.c.h.b16 %v1645
    %v2051 = vunpack.c.l.b16 %v1646
    %v2052 = vunpack.c.h.b16 %v1646
    %v2053 = vunpack.c.l.b16 %v1647
    %v2054 = vunpack.c.h.b16 %v1647
    %v2055 = vunpack.c.l.b16 %v1648
    %v2056 = vunpack.c.h.b16 %v1648
    %v2057 = vunpack.c.l.b16 %v1649
    %v2058 = vunpack.c.h.b16 %v1649
    %v2059 = vunpack.c.l.b16 %v1650
    %v2060 = vunpack.c.h.b16 %v1650
    %v2061 = vunpack.c.l.b16 %v1651
    %v2062 = vunpack.c.h.b16 %v1651
    %v2063 = vunpack.c.l.b16 %v1652
    %v2064 = vunpack.c.h.b16 %v1652
    %v2065 = vunpack.c.l.b16 %v1653
    %v2066 = vunpack.c.h.b16 %v1653
    %v2067 = vunpack.c.l.b16 %v1654
    %v2068 = vunpack.c.h.b16 %v1654
    %v2069 = vunpack.c.l.b16 %v1655
    %v2070 = vunpack.c.h.b16 %v1655
    %v2071 = vunpack.c.l.b16 %v1656
    %v2072 = vunpack.c.h.b16 %v1656
    %v2073 = vunpack.c.l.b16 %v1657
    %v2074 = vunpack.c.h.b16 %v1657
    %v2075 = vunpack.c.l.b16 %v1658
    %v2076 = vunpack.c.h.b16 %v1658
    %v2077 = vunpack.c.l.b16 %v1659
    %v2078 = vunpack.c.h.b16 %v1659
    %v2079 = vunpack.c.l.b16 %v1660
    %v2080 = vunpack.c.h.b16 %v1660
    %v2081 = vunpack.c.l.b16 %v1661
    %v2082 = vunpack.c.h.b16 %v1661
    %v2083 = vunpack.c.l.b16 %v1662
    %v2084 = vunpack.c.h.b16 %v1662
    %v2085 = vunpack.c.l.b16 %v1663
    %v2086 = vunpack.c.h.b16 %v1663
    %v2087 = vunpack.c.l.b16 %v1664
    %v2088 = vunpack.c.h.b16 %v1664
    %v2089 = vunpack.c.l.b16 %v1665
    %v2090 = vunpack.c.h.b16 %v1665
    %v2091 = vunpack.c.l.b16 %v1666
    %v2092 = vunpack.c.h.b16 %v1666
    %v2093 = vunpack.c.l.b16 %v1667
    %v2094 = vunpack.c.h.b16 %v1667
    %v2095 = vunpack.c.l.b16 %v1668
    %v2096 = vunpack.c.h.b16 %v1668
    %v2097 = vunpack.c.l.b16 %v1669
    %v2098 = vunpack.c.h.b16 %v1669
    %v2099 = vunpack.c.l.b16 %v1670
    %v2100 = vunpack.c.h.b16 %v1670
    %v2101 = vunpack.c.l.b16 %v1671
    %v2102 = vunpack.c.h.b16 %v1671
    %v2103 = vunpack.c.l.b16 %v1672
    %v2104 = vunpack.c.h.b16 %v1672
    %v2105 = vunpack.c.l.b16 %v1673
    %v2106 = vunpack.c.h.b16 %v1673
    %v2107 = vunpack.c.l.b16 %v1674
    %v2108 = vunpack.c.h.b16 %v1674
    %v2109 = vunpack.c.l.b16 %v1675
    %v2110 = vunpack.c.h.b16 %v1675
    %v2111 = vunpack.c.l.b16 %v1676
    %v2112 = vunpack.c.h.b16 %v1676
    %v2113 = vunpack.c.l.b16 %v1677
    %v2114 = vunpack.c.h.b16 %v1677
    %v2115 = vunpack.c.l.b16 %v1678
    %v2116 = vunpack.c.h.b16 %v1678
    %v2117 = vunpack.c.l.b16 %v1679
    %v2118 = vunpack.c.h.b16 %v1679
    %v2119 = vunpack.c.l.b16 %v1680
    %v2120 = vunpack.c.h.b16 %v1680
    %v2121 = vunpack.c.l.b16 %v1681
    %v2122 = vunpack.c.h.b16 %v1681
    %v2123 = vunpack.c.l.b16 %v1682
    %v2124 = vunpack.c.h.b16 %v1682
    %v2125 = vunpack.c.l.b16 %v1683
    %v2126 = vunpack.c.h.b16 %v1683
    %v2127 = vunpack.c.l.b16 %v1684
    %v2128 = vunpack.c.h.b16 %v1684
    %v2129 = vunpack.c.l.b16 %v1685
    %v2130 = vunpack.c.h.b16 %v1685
    %v2131 = vunpack.c.l.b16 %v1686
    %v2132 = vunpack.c.h.b16 %v1686
    %v2133 = vunpack.c.l.b16 %v1687
    %v2134 = vunpack.c.h.b16 %v1687
    %v2135 = vunpack.c.l.b16 %v1688
    %v2136 = vunpack.c.h.b16 %v1688
    %v2137 = vunpack.c.l.b16 %v1689
    %v2138 = vunpack.c.h.b16 %v1689
    %v2139 = vunpack.c.l.b16 %v1690
    %v2140 = vunpack.c.h.b16 %v1690
    %v2141 = vunpack.c.l.b16 %v1691
    %v2142 = vunpack.c.h.b16 %v1691
    %v2143 = vunpack.c.l.b16 %v1692
    %v2144 = vunpack.c.h.b16 %v1692
    %v2145 = vunpack.c.l.b16 %v1693
    %v2146 = vunpack.c.h.b16 %v1693
    %v2147 = vunpack.c.l.b16 %v1694
    %v2148 = vunpack.c.h.b16 %v1694
    %v2149 = vunpack.c.l.b16 %v1695
    %v2150 = vunpack.c.h.b16 %v1695
    %v2151 = vunpack.c.l.b16 %v1696
    %v2152 = vunpack.c.h.b16 %v1696
    %v2153 = vunpack.c.l.b16 %v1697
    %v2154 = vunpack.c.h.b16 %v1697
    %v2155 = vunpack.c.l.b16 %v1698
    %v2156 = vunpack.c.h.b16 %v1698
    %v2157 = vunpack.c.l.b16 %v1699
    %v2158 = vunpack.c.h.b16 %v1699
    %v2159 = vunpack.c.l.b16 %v1700
    %v2160 = vunpack.c.h.b16 %v1700
    %v2161 = vunpack.c.l.b16 %v1701
    %v2162 = vunpack.c.h.b16 %v1701
    %v2163 = vunpack.c.l.b16 %v1702
    %v2164 = vunpack.c.h.b16 %v1702
    %v2165 = vunpack.c.l.b16 %v1703
    %v2166 = vunpack.c.h.b16 %v1703
    %v2167 = vunpack.c.l.b16 %v1704
    %v2168 = vunpack.c.h.b16 %v1704
    %v2169 = vunpack.c.l.b16 %v1705
    %v2170 = vunpack.c.h.b16 %v1705
    %v2171 = vunpack.c.l.b16 %v1706
    %v2172 = vunpack.c.h.b16 %v1706
    %v2173 = vunpack.c.l.b16 %v1707
    %v2174 = vunpack.c.h.b16 %v1707
    %v2175 = vunpack.c.l.b16 %v1708
    %v2176 = vunpack.c.h.b16 %v1708
    %v2177 = vunpack.c.l.b16 %v1709
    %v2178 = vunpack.c.h.b16 %v1709
    %v2179 = vunpack.c.l.b16 %v1710
    %v2180 = vunpack.c.h.b16 %v1710
    %v2181 = vunpack.c.l.b16 %v1711
    %v2182 = vunpack.c.h.b16 %v1711
    %v2183 = vunpack.c.l.b16 %v1712
    %v2184 = vunpack.c.h.b16 %v1712
    %v2185 = vunpack.c.l.b16 %v1713
    %v2186 = vunpack.c.h.b16 %v1713
    %v2187 = vunpack.c.l.b16 %v1714
    %v2188 = vunpack.c.h.b16 %v1714
    %v2189 = vunpack.c.l.b16 %v1715
    %v2190 = vunpack.c.h.b16 %v1715
    %v2191 = vunpack.c.l.b16 %v1716
    %v2192 = vunpack.c.h.b16 %v1716
    %v2193 = vunpack.c.l.b16 %v1717
    %v2194 = vunpack.c.h.b16 %v1717
    %v2195 = vunpack.c.l.b16 %v1718
    %v2196 = vunpack.c.h.b16 %v1718
    %v2197 = vunpack.c.l.b16 %v1719
    %v2198 = vunpack.c.h.b16 %v1719
    %v2199 = vunpack.c.l.b16 %v1720
    %v2200 = vunpack.c.h.b16 %v1720
    %v2201 = vunpack.c.l.b16 %v1721
    %v2202 = vunpack.c.h.b16 %v1721
    %v2203 = vunpack.c.l.b16 %v1722
    %v2204 = vunpack.c.h.b16 %v1722
    %v2205 = vunpack.c.l.b16 %v1723
    %v2206 = vunpack.c.h.b16 %v1723
    %v2207 = vunpack.c.l.b16 %v1724
    %v2208 = vunpack.c.h.b16 %v1724
    %v2209 = vunpack.c.l.b16 %v1725
    %v2210 = vunpack.c.h.b16 %v1725
    %v2211 = vunpack.c.l.b16 %v1726
    %v2212 = vunpack.c.h.b16 %v1726
    %v2213 = vunpack.c.l.b16 %v1727
    %v2214 = vunpack.c.h.b16 %v1727
    %v2215 = vunpack.c.l.b16 %v1728
    %v2216 = vunpack.c.h.b16 %v1728
    %v2217 = vunpack.c.l.b16 %v1729
    %v2218 = vunpack.c.h.b16 %v1729
    %v2219 = vunpack.c.l.b16 %v1730
    %v2220 = vunpack.c.h.b16 %v1730
    %v2221 = vunpack.c.l.b16 %v1731
    %v2222 = vunpack.c.h.b16 %v1731
    %v2223 = vunpack.c.l.b16 %v1732
    %v2224 = vunpack.c.h.b16 %v1732
    %v2225 = vpack.c.b16 %v1907, %v1905
    %v2226 = vpack.c.b16 %v1908, %v1906
    %v2227 = vpack.c.b16 %v1911, %v1909
    %v2228 = vpack.c.b16 %v1912, %v1910
    %v2229 = vpack.c.b16 %v1915, %v1913
    %v2230 = vpack.c.b16 %v1916, %v1914
    %v2231 = vpack.c.b16 %v1919, %v1917
    %v2232 = vpack.c.b16 %v1920, %v1918
    %v2233 = vpack.c.b16 %v1923, %v1921
    %v2234 = vpack.c.b16 %v1924, %v1922
    %v2235 = vpack.c.b16 %v1927, %v1925
    %v2236 = vpack.c.b16 %v1928, %v1926
    %v2237 = vpack.c.b16 %v1931, %v1929
    %v2238 = vpack.c.b16 %v1932, %v1930
    %v2239 = vpack.c.b16 %v1935, %v1933
    %v2240 = vpack.c.b16 %v1936, %v1934
    %v2241 = vpack.c.b16 %v1939, %v1937
    %v2242 = vpack.c.b16 %v1940, %v1938
    %v2243 = vpack.c.b16 %v1943, %v1941
    %v2244 = vpack.c.b16 %v1944, %v1942
    %v2245 = vpack.c.b16 %v1947, %v1945
    %v2246 = vpack.c.b16 %v1948, %v1946
    %v2247 = vpack.c.b16 %v1951, %v1949
    %v2248 = vpack.c.b16 %v1952, %v1950
    %v2249 = vpack.c.b16 %v1955, %v1953
    %v2250 = vpack.c.b16 %v1956, %v1954
    %v2251 = vpack.c.b16 %v1959, %v1957
    %v2252 = vpack.c.b16 %v1960, %v1958
    %v2253 = vpack.c.b16 %v1963, %v1961
    %v2254 = vpack.c.b16 %v1964, %v1962
    %v2255 = vpack.c.b16 %v1967, %v1965
    %v2256 = vpack.c.b16 %v1968, %v1966
    %v2257 = vpack.c.b16 %v1971, %v1969
    %v2258 = vpack.c.b16 %v1972, %v1970
    %v2259 = vpack.c.b16 %v1975, %v1973
    %v2260 = vpack.c.b16 %v1976, %v1974
    %v2261 = vpack.c.b16 %v1979, %v1977
    %v2262 = vpack.c.b16 %v1980, %v1978
    %v2263 = vpack.c.b16 %v1983, %v1981
    %v2264 = vpack.c.b16 %v1984, %v1982
    %v2265 = vpack.c.b16 %v1987, %v1985
    %v2266 = vpack.c.b16 %v1988, %v1986
    %v2267 = vpack.c.b16 %v1991, %v1989
    %v2268 = vpack.c.b16 %v1992, %v1990
    %v2269 = vpack.c.b16 %v1995, %v1993
    %v2270 = vpack.c.b16 %v1996, %v1994
    %v2271 = vpack.c.b16 %v1999, %v1997
    %v2272 = vpack.c.b16 %v2000, %v1998
    %v2273 = vpack.c.b16 %v2003, %v2001
    %v2274 = vpack.c.b16 %v2004, %v2002
    %v2275 = vpack.c.b16 %v2007, %v2005
    %v2276 = vpack.c.b16 %v2008, %v2006
    %v2277 = vpack.c.b16 %v2011, %v2009
    %v2278 = vpack.c.b16 %v2012, %v2010
    %v2279 = vpack.c.b16 %v2015, %v2013
    %v2280 = vpack.c.b16 %v2016, %v2014
    %v2281 = vpack.c.b16 %v2019, %v2017
    %v2282 = vpack.c.b16 %v2020, %v2018
    %v2283 = vpack.c.b16 %v2023, %v2021
    %v2284 = vpack.c.b16 %v2024, %v2022
    %v2285 = vpack.c.b16 %v2027, %v2025
    %v2286 = vpack.c.b16 %v2028, %v2026
    %v2287 = vpack.c.b16 %v2031, %v2029
    %v2288 = vpack.c.b16 %v2032, %v2030
    %v2289 = vpack.c.b16 %v2035, %v2033
    %v2290 = vpack.c.b16 %v2036, %v2034
    %v2291 = vpack.c.b16 %v2039, %v2037
    %v2292 = vpack.c.b16 %v2040, %v2038
    %v2293 = vpack.c.b16 %v2043, %v2041
    %v2294 = vpack.c.b16 %v2044, %v2042
    %v2295 = vpack.c.b16 %v2047, %v2045
    %v2296 = vpack.c.b16 %v2048, %v2046
    %v2297 = vpack.c.b16 %v2051, %v2049
    %v2298 = vpack.c.b16 %v2052, %v2050
    %v2299 = vpack.c.b16 %v2055, %v2053
    %v2300 = vpack.c.b16 %v2056, %v2054
    %v2301 = vpack.c.b16 %v2059, %v2057
    %v2302 = vpack.c.b16 %v2060, %v2058
    %v2303 = vpack.c.b16 %v2063, %v2061
    %v2304 = vpack.c.b16 %v2064, %v2062
    %v2305 = vpack.c.b16 %v2067, %v2065
    %v2306 = vpack.c.b16 %v2068, %v2066
    %v2307 = vpack.c.b16 %v2071, %v2069
    %v2308 = vpack.c.b16 %v2072, %v2070
    %v2309 = vpack.c.b16 %v2075, %v2073
    %v2310 = vpack.c.b16 %v2076, %v2074
    %v2311 = vpack.c.b16 %v2079, %v2077
    %v2312 = vpack.c.b16 %v2080, %v2078
    %v2313 = vpack.c.b16 %v2083, %v2081
    %v2314 = vpack.c.b16 %v2084, %v2082
    %v2315 = vpack.c.b16 %v2087, %v2085
    %v2316 = vpack.c.b16 %v2088, %v2086
    %v2317 = vpack.c.b16 %v2091, %v2089
    %v2318 = vpack.c.b16 %v2092, %v2090
    %v2319 = vpack.c.b16 %v2095, %v2093
    %v2320 = vpack.c.b16 %v2096, %v2094
    %v2321 = vpack.c.b16 %v2099, %v2097
    %v2322 = vpack.c.b16 %v2100, %v2098
    %v2323 = vpack.c.b16 %v2103, %v2101
    %v2324 = vpack.c.b16 %v2104, %v2102
    %v2325 = vpack.c.b16 %v2107, %v2105
    %v2326 = vpack.c.b16 %v2108, %v2106
    %v2327 = vpack.c.b16 %v2111, %v2109
    %v2328 = vpack.c.b16 %v2112, %v2110
    %v2329 = vpack.c.b16 %v2115, %v2113
    %v2330 = vpack.c.b16 %v2116, %v2114
    %v2331 = vpack.c.b16 %v2119, %v2117
    %v2332 = vpack.c.b16 %v2120, %v2118
    %v2333 = vpack.c.b16 %v2123, %v2121
    %v2334 = vpack.c.b16 %v2124, %v2122
    %v2335 = vpack.c.b16 %v2127, %v2125
    %v2336 = vpack.c.b16 %v2128, %v2126
    %v2337 = vpack.c.b16 %v2131, %v2129
    %v2338 = vpack.c.b16 %v2132, %v2130
    %v2339 = vpack.c.b16 %v2135, %v2133
    %v2340 = vpack.c.b16 %v2136, %v2134
    %v2341 = vpack.c.b16 %v2139, %v2137
    %v2342 = vpack.c.b16 %v2140, %v2138
    %v2343 = vpack.c.b16 %v2143, %v2141
    %v2344 = vpack.c.b16 %v2144, %v2142
    %v2345 = vpack.c.b16 %v2147, %v2145
    %v2346 = vpack.c.b16 %v2148, %v2146
    %v2347 = vpack.c.b16 %v2151, %v2149
    %v2348 = vpack.c.b16 %v2152, %v2150
    %v2349 = vpack.c.b16 %v2155, %v2153
    %v2350 = vpack.c.b16 %v2156, %v2154
    %v2351 = vpack.c.b16 %v2159, %v2157
    %v2352 = vpack.c.b16 %v2160, %v2158
    %v2353 = vpack.c.b16 %v2163, %v2161
    %v2354 = vpack.c.b16 %v2164, %v2162
    %v2355 = vpack.c.b16 %v2167, %v2165
    %v2356 = vpack.c.b16 %v2168, %v2166
    %v2357 = vpack.c.b16 %v2171, %v2169
    %v2358 = vpack.c.b16 %v2172, %v2170
    %v2359 = vpack.c.b16 %v2175, %v2173
    %v2360 = vpack.c.b16 %v2176, %v2174
    %v2361 = vpack.c.b16 %v2179, %v2177
    %v2362 = vpack.c.b16 %v2180, %v2178
    %v2363 = vpack.c.b16 %v2183, %v2181
    %v2364 = vpack.c.b16 %v2184, %v2182
    %v2365 = vpack.c.b16 %v2187, %v2185
    %v2366 = vpack.c.b16 %v2188, %v2186
    %v2367 = vpack.c.b16 %v2191, %v2189
    %v2368 = vpack.c.b16 %v2192, %v2190
    %v2369 = vpack.c.b16 %v2195, %v2193
    %v2370 = vpack.c.b16 %v2196, %v2194
    %v2371 = vpack.c.b16 %v2199, %v2197
    %v2372 = vpack.c.b16 %v2200, %v2198
    %v2373 = vpack.c.b16 %v2203, %v2201
    %v2374 = vpack.c.b16 %v2204, %v2202
    %v2375 = vpack.c.b16 %v2207, %v2205
    %v2376 = vpack.c.b16 %v2208, %v2206
    %v2377 = vpack.c.b16 %v2211, %v2209
    %v2378 = vpack.c.b16 %v2212, %v2210
    %v2379 = vpack.c.b16 %v2215, %v2213
    %v2380 = vpack.c.b16 %v2216, %v2214
    %v2381 = vpack.c.b16 %v2219, %v2217
    %v2382 = vpack.c.b16 %v2220, %v2218
    %v2383 = vpack.c.b16 %v2223, %v2221
    %v2384 = vpack.c.b16 %v2224, %v2222
    %2545 = vmatprep.subr.bf16.mxu0 %v2226
    %2546 = vmatpush1.bf16.msra.mxu0 %v2225
    %2547 = vmatprep.subr.bf16.mxu0 %v2228
    %2548 = vmatpush1.bf16.msra.mxu0 %v2227
    %2549 = vmatprep.subr.bf16.mxu0 %v2230
    %2550 = vmatpush1.bf16.msra.mxu0 %v2229
    %2551 = vmatprep.subr.bf16.mxu0 %v2232
    %2552 = vmatpush1.bf16.msra.mxu0 %v2231
    %2553 = vmatprep.subr.bf16.mxu0 %v2234
    %2554 = vmatpush1.bf16.msra.mxu0 %v2233
    %2555 = vmatprep.subr.bf16.mxu0 %v2236
    %2556 = vmatpush1.bf16.msra.mxu0 %v2235
    %2557 = vmatprep.subr.bf16.mxu0 %v2238
    %2558 = vmatpush1.bf16.msra.mxu0 %v2237
    %2559 = vmatprep.subr.bf16.mxu0 %v2240
    %2560 = vmatpush1.bf16.msra.mxu0 %v2239
    %2561 = vmatprep.subr.bf16.mxu0 %v2242
    %2562 = vmatpush1.bf16.msra.mxu0 %v2241
    %2563 = vmatprep.subr.bf16.mxu0 %v2244
    %2564 = vmatpush1.bf16.msra.mxu0 %v2243
    %2565 = vmatprep.subr.bf16.mxu0 %v2246
    %2566 = vmatpush1.bf16.msra.mxu0 %v2245
    %2567 = vmatprep.subr.bf16.mxu0 %v2248
    %2568 = vmatpush1.bf16.msra.mxu0 %v2247
    %2569 = vmatprep.subr.bf16.mxu0 %v2250
    %2570 = vmatpush1.bf16.msra.mxu0 %v2249
    %2571 = vmatprep.subr.bf16.mxu0 %v2252
    %2572 = vmatpush1.bf16.msra.mxu0 %v2251
    %2573 = vmatprep.subr.bf16.mxu0 %v2254
    %2574 = vmatpush1.bf16.msra.mxu0 %v2253
    %2575 = vmatprep.subr.bf16.mxu0 %v2256
    %2576 = vmatpush1.bf16.msra.mxu0 %v2255
    %2577 = vmatprep.mubr.bf16.mxu0 %v1550
    %2578 = vmatmul.mubr.bf16.gmra.mrb[0].mxu0 %v1549
    %v2579 = vpop.f32.mrb[0].mxu0
    %v2580 = vadd.f32 %v1738, %v2579
    %v2581 = vpop.f32.mrb[0].mxu0
    %v2582 = vadd.f32 %v1742, %v2581
    %v2583 = vpop.f32.mrb[0].mxu0
    %v2584 = vadd.f32 %v1738, %v2583
    %v2585 = vpop.f32.mrb[0].mxu0
    %v2586 = vadd.f32 %v1742, %v2585
    %2587 = vmatprep.mubr.bf16.mxu0 %v1552
    %2588 = vmatmul.mubr.bf16.gmra.mrb[0].mxu0 %v1551
    %v2589 = vpop.f32.mrb[0].mxu0
    %v2590 = vadd.f32 %v1738, %v2589
    %v2591 = vpop.f32.mrb[0].mxu0
    %v2592 = vadd.f32 %v1742, %v2591
    %v2593 = vpop.f32.mrb[0].mxu0
    %v2594 = vadd.f32 %v1738, %v2593
    %v2595 = vpop.f32.mrb[0].mxu0
    %v2596 = vadd.f32 %v1742, %v2595
    %2597 = vmatprep.mubr.bf16.mxu0 %v1554
    %2598 = vmatmul.mubr.bf16.gmra.mrb[0].mxu0 %v1553
    %v2599 = vpop.f32.mrb[0].mxu0
    %v2600 = vadd.f32 %v1738, %v2599
    %v2601 = vpop.f32.mrb[0].mxu0
    %v2602 = vadd.f32 %v1742, %v2601
    %v2603 = vpop.f32.mrb[0].mxu0
    %v2604 = vadd.f32 %v1738, %v2603
    %v2605 = vpop.f32.mrb[0].mxu0
    %v2606 = vadd.f32 %v1742, %v2605
    %2607 = vmatprep.mubr.bf16.mxu0 %v1556
    %2608 = vmatmul.mubr.bf16.gmra.mrb[0].mxu0 %v1555
    %v2609 = vpop.f32.mrb[0].mxu0
    %v2610 = vadd.f32 %v1738, %v2609
    %v2611 = vpop.f32.mrb[0].mxu0
    %v2612 = vadd.f32 %v1742, %v2611
    %v2613 = vpop.f32.mrb[0].mxu0
    %v2614 = vadd.f32 %v1738, %v2613
    %v2615 = vpop.f32.mrb[0].mxu0
    %v2616 = vadd.f32 %v1742, %v2615
    %2617 = vmatprep.mubr.bf16.mxu0 %v1558
    %2618 = vmatmul.mubr.bf16.gmra.mrb[0].mxu0 %v1557
    %v2619 = vpop.f32.mrb[0].mxu0
    %v2620 = vadd.f32 %v1738, %v2619
    %v2621 = vpop.f32.mrb[0].mxu0
    %v2622 = vadd.f32 %v1742, %v2621
    %v2623 = vpop.f32.mrb[0].mxu0
    %v2624 = vadd.f32 %v1738, %v2623
    %v2625 = vpop.f32.mrb[0].mxu0
    %v2626 = vadd.f32 %v1742, %v2625
    %2627 = vmatprep.mubr.bf16.mxu0 %v1560
    %2628 = vmatmul.mubr.bf16.gmra.mrb[0].mxu0 %v1559
    %v2629 = vpop.f32.mrb[0].mxu0
    %v2630 = vadd.f32 %v1738, %v2629
    %v2631 = vpop.f32.mrb[0].mxu0
    %v2632 = vadd.f32 %v1742, %v2631
    %v2633 = vpop.f32.mrb[0].mxu0
    %v2634 = vadd.f32 %v1738, %v2633
    %v2635 = vpop.f32.mrb[0].mxu0
    %v2636 = vadd.f32 %v1742, %v2635
    %2637 = vmatprep.mubr.bf16.mxu0 %v1562
    %2638 = vmatmul.mubr.bf16.gmra.mrb[0].mxu0 %v1561
    %v2639 = vpop.f32.mrb[0].mxu0
    %v2640 = vadd.f32 %v1738, %v2639
    %v2641 = vpop.f32.mrb[0].mxu0
    %v2642 = vadd.f32 %v1742, %v2641
    %v2643 = vpop.f32.mrb[0].mxu0
    %v2644 = vadd.f32 %v1738, %v2643
    %v2645 = vpop.f32.mrb[0].mxu0
    %v2646 = vadd.f32 %v1742, %v2645
    %2647 = vmatprep.mubr.bf16.mxu0 %v1564
    %2648 = vmatmul.mubr.bf16.gmra.mrb[0].mxu0 %v1563
    %v2649 = vpop.f32.mrb[0].mxu0
    %v2650 = vadd.f32 %v1738, %v2649
    %v2651 = vpop.f32.mrb[0].mxu0
    %v2652 = vadd.f32 %v1742, %v2651
    %v2653 = vpop.f32.mrb[0].mxu0
    %v2654 = vadd.f32 %v1738, %v2653
    %v2655 = vpop.f32.mrb[0].mxu0
    %v2656 = vadd.f32 %v1742, %v2655
    %2657 = vdwg.mxu0
    %2658 = vmatprep.subr.bf16.mxu0 %v2258
    %2659 = vmatpush1.bf16.msra.mxu0 %v2257
    %2660 = vmatprep.subr.bf16.mxu0 %v2260
    %2661 = vmatpush1.bf16.msra.mxu0 %v2259
    %2662 = vmatprep.subr.bf16.mxu0 %v2262
    %2663 = vmatpush1.bf16.msra.mxu0 %v2261
    %2664 = vmatprep.subr.bf16.mxu0 %v2264
    %2665 = vmatpush1.bf16.msra.mxu0 %v2263
    %2666 = vmatprep.subr.bf16.mxu0 %v2266
    %2667 = vmatpush1.bf16.msra.mxu0 %v2265
    %2668 = vmatprep.subr.bf16.mxu0 %v2268
    %2669 = vmatpush1.bf16.msra.mxu0 %v2267
    %2670 = vmatprep.subr.bf16.mxu0 %v2270
    %2671 = vmatpush1.bf16.msra.mxu0 %v2269
    %2672 = vmatprep.subr.bf16.mxu0 %v2272
    %2673 = vmatpush1.bf16.msra.mxu0 %v2271
    %2674 = vmatprep.subr.bf16.mxu0 %v2274
    %2675 = vmatpush1.bf16.msra.mxu0 %v2273
    %2676 = vmatprep.subr.bf16.mxu0 %v2276
    %2677 = vmatpush1.bf16.msra.mxu0 %v2275
    %2678 = vmatprep.subr.bf16.mxu0 %v2278
    %2679 = vmatpush1.bf16.msra.mxu0 %v2277
    %2680 = vmatprep.subr.bf16.mxu0 %v2280
    %2681 = vmatpush1.bf16.msra.mxu0 %v2279
    %2682 = vmatprep.subr.bf16.mxu0 %v2282
    %2683 = vmatpush1.bf16.msra.mxu0 %v2281
    %2684 = vmatprep.subr.bf16.mxu0 %v2284
    %2685 = vmatpush1.bf16.msra.mxu0 %v2283
    %2686 = vmatprep.subr.bf16.mxu0 %v2286
    %2687 = vmatpush1.bf16.msra.mxu0 %v2285
    %2688 = vmatprep.subr.bf16.mxu0 %v2288
    %2689 = vmatpush1.bf16.msra.mxu0 %v2287
    %2690 = vmatprep.mubr.bf16.mxu0 %v1552
    %2691 = vmatmul.mubr.bf16.gmra.mrb[0].mxu0 %v1551
    %v2692 = vpop.f32.mrb[0].mxu0
    %v2693 = vadd.f32 %v2580, %v2692
    %v2694 = vpop.f32.mrb[0].mxu0
    %v2695 = vadd.f32 %v2582, %v2694
    %v2696 = vpop.f32.mrb[0].mxu0
    %v2697 = vadd.f32 %v2584, %v2696
    %v2698 = vpop.f32.mrb[0].mxu0
    %v2699 = vadd.f32 %v2586, %v2698
    %2700 = vmatprep.mubr.bf16.mxu0 %v1554
    %2701 = vmatmul.mubr.bf16.gmra.mrb[0].mxu0 %v1553
    %v2702 = vpop.f32.mrb[0].mxu0
    %v2703 = vadd.f32 %v2590, %v2702
    %v2704 = vpop.f32.mrb[0].mxu0
    %v2705 = vadd.f32 %v2592, %v2704
    %v2706 = vpop.f32.mrb[0].mxu0
    %v2707 = vadd.f32 %v2594, %v2706
    %v2708 = vpop.f32.mrb[0].mxu0
    %v2709 = vadd.f32 %v2596, %v2708
    %2710 = vmatprep.mubr.bf16.mxu0 %v1556
    %2711 = vmatmul.mubr.bf16.gmra.mrb[0].mxu0 %v1555
    %v2712 = vpop.f32.mrb[0].mxu0
    %v2713 = vadd.f32 %v2600, %v2712
    %v2714 = vpop.f32.mrb[0].mxu0
    %v2715 = vadd.f32 %v2602, %v2714
    %v2716 = vpop.f32.mrb[0].mxu0
    %v2717 = vadd.f32 %v2604, %v2716
    %v2718 = vpop.f32.mrb[0].mxu0
    %v2719 = vadd.f32 %v2606, %v2718
    %2720 = vmatprep.mubr.bf16.mxu0 %v1558
    %2721 = vmatmul.mubr.bf16.gmra.mrb[0].mxu0 %v1557
    %v2722 = vpop.f32.mrb[0].mxu0
    %v2723 = vadd.f32 %v2610, %v2722
    %v2724 = vpop.f32.mrb[0].mxu0
    %v2725 = vadd.f32 %v2612, %v2724
    %v2726 = vpop.f32.mrb[0].mxu0
    %v2727 = vadd.f32 %v2614, %v2726
    %v2728 = vpop.f32.mrb[0].mxu0
    %v2729 = vadd.f32 %v2616, %v2728
    %2730 = vmatprep.mubr.bf16.mxu0 %v1560
    %2731 = vmatmul.mubr.bf16.gmra.mrb[0].mxu0 %v1559
    %v2732 = vpop.f32.mrb[0].mxu0
    %v2733 = vadd.f32 %v2620, %v2732
    %v2734 = vpop.f32.mrb[0].mxu0
    %v2735 = vadd.f32 %v2622, %v2734
    %v2736 = vpop.f32.mrb[0].mxu0
    %v2737 = vadd.f32 %v2624, %v2736
    %v2738 = vpop.f32.mrb[0].mxu0
    %v2739 = vadd.f32 %v2626, %v2738
    %2740 = vmatprep.mubr.bf16.mxu0 %v1562
    %2741 = vmatmul.mubr.bf16.gmra.mrb[0].mxu0 %v1561
    %v2742 = vpop.f32.mrb[0].mxu0
    %v2743 = vadd.f32 %v2630, %v2742
    %v2744 = vpop.f32.mrb[0].mxu0
    %v2745 = vadd.f32 %v2632, %v2744
    %v2746 = vpop.f32.mrb[0].mxu0
    %v2747 = vadd.f32 %v2634, %v2746
    %v2748 = vpop.f32.mrb[0].mxu0
    %v2749 = vadd.f32 %v2636, %v2748
    %2750 = vmatprep.mubr.bf16.mxu0 %v1564
    %2751 = vmatmul.mubr.bf16.gmra.mrb[0].mxu0 %v1563
    %v2752 = vpop.f32.mrb[0].mxu0
    %v2753 = vadd.f32 %v2640, %v2752
    %v2754 = vpop.f32.mrb[0].mxu0
    %v2755 = vadd.f32 %v2642, %v2754
    %v2756 = vpop.f32.mrb[0].mxu0
    %v2757 = vadd.f32 %v2644, %v2756
    %v2758 = vpop.f32.mrb[0].mxu0
    %v2759 = vadd.f32 %v2646, %v2758
    %2760 = vmatprep.mubr.bf16.mxu0 %v1566
    %2761 = vmatmul.mubr.bf16.gmra.mrb[0].mxu0 %v1565
    %v2762 = vpop.f32.mrb[0].mxu0
    %v2763 = vadd.f32 %v2650, %v2762
    %v2764 = vpop.f32.mrb[0].mxu0
    %v2765 = vadd.f32 %v2652, %v2764
    %v2766 = vpop.f32.mrb[0].mxu0
    %v2767 = vadd.f32 %v2654, %v2766
    %v2768 = vpop.f32.mrb[0].mxu0
    %v2769 = vadd.f32 %v2656, %v2768
    %2770 = vdwg.mxu0
    %2771 = vmatprep.subr.bf16.mxu0 %v2290
    %2772 = vmatpush1.bf16.msra.mxu0 %v2289
    %2773 = vmatprep.subr.bf16.mxu0 %v2292
    %2774 = vmatpush1.bf16.msra.mxu0 %v2291
    %2775 = vmatprep.subr.bf16.mxu0 %v2294
    %2776 = vmatpush1.bf16.msra.mxu0 %v2293
    %2777 = vmatprep.subr.bf16.mxu0 %v2296
    %2778 = vmatpush1.bf16.msra.mxu0 %v2295
    %2779 = vmatprep.subr.bf16.mxu0 %v2298
    %2780 = vmatpush1.bf16.msra.mxu0 %v2297
    %2781 = vmatprep.subr.bf16.mxu0 %v2300
    %2782 = vmatpush1.bf16.msra.mxu0 %v2299
    %2783 = vmatprep.subr.bf16.mxu0 %v2302
    %2784 = vmatpush1.bf16.msra.mxu0 %v2301
    %2785 = vmatprep.subr.bf16.mxu0 %v2304
    %2786 = vmatpush1.bf16.msra.mxu0 %v2303
    %2787 = vmatprep.subr.bf16.mxu0 %v2306
    %2788 = vmatpush1.bf16.msra.mxu0 %v2305
    %2789 = vmatprep.subr.bf16.mxu0 %v2308
    %2790 = vmatpush1.bf16.msra.mxu0 %v2307
    %2791 = vmatprep.subr.bf16.mxu0 %v2310
    %2792 = vmatpush1.bf16.msra.mxu0 %v2309
    %2793 = vmatprep.subr.bf16.mxu0 %v2312
    %2794 = vmatpush1.bf16.msra.mxu0 %v2311
    %2795 = vmatprep.subr.bf16.mxu0 %v2314
    %2796 = vmatpush1.bf16.msra.mxu0 %v2313
    %2797 = vmatprep.subr.bf16.mxu0 %v2316
    %2798 = vmatpush1.bf16.msra.mxu0 %v2315
    %2799 = vmatprep.subr.bf16.mxu0 %v2318
    %2800 = vmatpush1.bf16.msra.mxu0 %v2317
    %2801 = vmatprep.subr.bf16.mxu0 %v2320
    %2802 = vmatpush1.bf16.msra.mxu0 %v2319
    %2803 = vmatprep.mubr.bf16.mxu0 %v1554
    %2804 = vmatmul.mubr.bf16.gmra.mrb[0].mxu0 %v1553
    %v2805 = vpop.f32.mrb[0].mxu0
    %v2806 = vadd.f32 %v2693, %v2805
    %v2807 = vpop.f32.mrb[0].mxu0
    %v2808 = vadd.f32 %v2695, %v2807
    %v2809 = vpop.f32.mrb[0].mxu0
    %v2810 = vadd.f32 %v2697, %v2809
    %v2811 = vpop.f32.mrb[0].mxu0
    %v2812 = vadd.f32 %v2699, %v2811
    %2813 = vmatprep.mubr.bf16.mxu0 %v1556
    %2814 = vmatmul.mubr.bf16.gmra.mrb[0].mxu0 %v1555
    %v2815 = vpop.f32.mrb[0].mxu0
    %v2816 = vadd.f32 %v2703, %v2815
    %v2817 = vpop.f32.mrb[0].mxu0
    %v2818 = vadd.f32 %v2705, %v2817
    %v2819 = vpop.f32.mrb[0].mxu0
    %v2820 = vadd.f32 %v2707, %v2819
    %v2821 = vpop.f32.mrb[0].mxu0
    %v2822 = vadd.f32 %v2709, %v2821
    %2823 = vmatprep.mubr.bf16.mxu0 %v1558
    %2824 = vmatmul.mubr.bf16.gmra.mrb[0].mxu0 %v1557
    %v2825 = vpop.f32.mrb[0].mxu0
    %v2826 = vadd.f32 %v2713, %v2825
    %v2827 = vpop.f32.mrb[0].mxu0
    %v2828 = vadd.f32 %v2715, %v2827
    %v2829 = vpop.f32.mrb[0].mxu0
    %v2830 = vadd.f32 %v2717, %v2829
    %v2831 = vpop.f32.mrb[0].mxu0
    %v2832 = vadd.f32 %v2719, %v2831
    %2833 = vmatprep.mubr.bf16.mxu0 %v1560
    %2834 = vmatmul.mubr.bf16.gmra.mrb[0].mxu0 %v1559
    %v2835 = vpop.f32.mrb[0].mxu0
    %v2836 = vadd.f32 %v2723, %v2835
    %v2837 = vpop.f32.mrb[0].mxu0
    %v2838 = vadd.f32 %v2725, %v2837
    %v2839 = vpop.f32.mrb[0].mxu0
    %v2840 = vadd.f32 %v2727, %v2839
    %v2841 = vpop.f32.mrb[0].mxu0
    %v2842 = vadd.f32 %v2729, %v2841
    %2843 = vmatprep.mubr.bf16.mxu0 %v1562
    %2844 = vmatmul.mubr.bf16.gmra.mrb[0].mxu0 %v1561
    %v2845 = vpop.f32.mrb[0].mxu0
    %v2846 = vadd.f32 %v2733, %v2845
    %v2847 = vpop.f32.mrb[0].mxu0
    %v2848 = vadd.f32 %v2735, %v2847
    %v2849 = vpop.f32.mrb[0].mxu0
    %v2850 = vadd.f32 %v2737, %v2849
    %v2851 = vpop.f32.mrb[0].mxu0
    %v2852 = vadd.f32 %v2739, %v2851
    %2853 = vmatprep.mubr.bf16.mxu0 %v1564
    %2854 = vmatmul.mubr.bf16.gmra.mrb[0].mxu0 %v1563
    %v2855 = vpop.f32.mrb[0].mxu0
    %v2856 = vadd.f32 %v2743, %v2855
    %v2857 = vpop.f32.mrb[0].mxu0
    %v2858 = vadd.f32 %v2745, %v2857
    %v2859 = vpop.f32.mrb[0].mxu0
    %v2860 = vadd.f32 %v2747, %v2859
    %v2861 = vpop.f32.mrb[0].mxu0
    %v2862 = vadd.f32 %v2749, %v2861
    %2863 = vmatprep.mubr.bf16.mxu0 %v1566
    %2864 = vmatmul.mubr.bf16.gmra.mrb[0].mxu0 %v1565
    %v2865 = vpop.f32.mrb[0].mxu0
    %v2866 = vadd.f32 %v2753, %v2865
    %v2867 = vpop.f32.mrb[0].mxu0
    %v2868 = vadd.f32 %v2755, %v2867
    %v2869 = vpop.f32.mrb[0].mxu0
    %v2870 = vadd.f32 %v2757, %v2869
    %v2871 = vpop.f32.mrb[0].mxu0
    %v2872 = vadd.f32 %v2759, %v2871
    %2873 = vmatprep.mubr.bf16.mxu0 %v1568
    %2874 = vmatmul.mubr.bf16.gmra.mrb[0].mxu0 %v1567
    %v2875 = vpop.f32.mrb[0].mxu0
    %v2876 = vadd.f32 %v2763, %v2875
    %v2877 = vpop.f32.mrb[0].mxu0
    %v2878 = vadd.f32 %v2765, %v2877
    %v2879 = vpop.f32.mrb[0].mxu0
    %v2880 = vadd.f32 %v2767, %v2879
    %v2881 = vpop.f32.mrb[0].mxu0
    %v2882 = vadd.f32 %v2769, %v2881
    %2883 = vdwg.mxu0
    %2884 = vmatprep.subr.bf16.mxu0 %v2322
    %2885 = vmatpush1.bf16.msra.mxu0 %v2321
    %2886 = vmatprep.subr.bf16.mxu0 %v2324
    %2887 = vmatpush1.bf16.msra.mxu0 %v2323
    %2888 = vmatprep.subr.bf16.mxu0 %v2326
    %2889 = vmatpush1.bf16.msra.mxu0 %v2325
    %2890 = vmatprep.subr.bf16.mxu0 %v2328
    %2891 = vmatpush1.bf16.msra.mxu0 %v2327
    %2892 = vmatprep.subr.bf16.mxu0 %v2330
    %2893 = vmatpush1.bf16.msra.mxu0 %v2329
    %2894 = vmatprep.subr.bf16.mxu0 %v2332
    %2895 = vmatpush1.bf16.msra.mxu0 %v2331
    %2896 = vmatprep.subr.bf16.mxu0 %v2334
    %2897 = vmatpush1.bf16.msra.mxu0 %v2333
    %2898 = vmatprep.subr.bf16.mxu0 %v2336
    %2899 = vmatpush1.bf16.msra.mxu0 %v2335
    %2900 = vmatprep.subr.bf16.mxu0 %v2338
    %2901 = vmatpush1.bf16.msra.mxu0 %v2337
    %2902 = vmatprep.subr.bf16.mxu0 %v2340
    %2903 = vmatpush1.bf16.msra.mxu0 %v2339
    %2904 = vmatprep.subr.bf16.mxu0 %v2342
    %2905 = vmatpush1.bf16.msra.mxu0 %v2341
    %2906 = vmatprep.subr.bf16.mxu0 %v2344
    %2907 = vmatpush1.bf16.msra.mxu0 %v2343
    %2908 = vmatprep.subr.bf16.mxu0 %v2346
    %2909 = vmatpush1.bf16.msra.mxu0 %v2345
    %2910 = vmatprep.subr.bf16.mxu0 %v2348
    %2911 = vmatpush1.bf16.msra.mxu0 %v2347
    %2912 = vmatprep.subr.bf16.mxu0 %v2350
    %2913 = vmatpush1.bf16.msra.mxu0 %v2349
    %2914 = vmatprep.subr.bf16.mxu0 %v2352
    %2915 = vmatpush1.bf16.msra.mxu0 %v2351
    %2916 = vmatprep.mubr.bf16.mxu0 %v1556
    %2917 = vmatmul.mubr.bf16.gmra.mrb[0].mxu0 %v1555
    %v2918 = vpop.f32.mrb[0].mxu0
    %v2919 = vadd.f32 %v2806, %v2918
    %v2920 = vpop.f32.mrb[0].mxu0
    %v2921 = vadd.f32 %v2808, %v2920
    %v2922 = vpop.f32.mrb[0].mxu0
    %v2923 = vadd.f32 %v2810, %v2922
    %v2924 = vpop.f32.mrb[0].mxu0
    %v2925 = vadd.f32 %v2812, %v2924
    %2926 = vmatprep.mubr.bf16.mxu0 %v1558
    %2927 = vmatmul.mubr.bf16.gmra.mrb[0].mxu0 %v1557
    %v2928 = vpop.f32.mrb[0].mxu0
    %v2929 = vadd.f32 %v2816, %v2928
    %v2930 = vpop.f32.mrb[0].mxu0
    %v2931 = vadd.f32 %v2818, %v2930
    %v2932 = vpop.f32.mrb[0].mxu0
    %v2933 = vadd.f32 %v2820, %v2932
    %v2934 = vpop.f32.mrb[0].mxu0
    %v2935 = vadd.f32 %v2822, %v2934
    %2936 = vmatprep.mubr.bf16.mxu0 %v1560
    %2937 = vmatmul.mubr.bf16.gmra.mrb[0].mxu0 %v1559
    %v2938 = vpop.f32.mrb[0].mxu0
    %v2939 = vadd.f32 %v2826, %v2938
    %v2940 = vpop.f32.mrb[0].mxu0
    %v2941 = vadd.f32 %v2828, %v2940
    %v2942 = vpop.f32.mrb[0].mxu0
    %v2943 = vadd.f32 %v2830, %v2942
    %v2944 = vpop.f32.mrb[0].mxu0
    %v2945 = vadd.f32 %v2832, %v2944
    %2946 = vmatprep.mubr.bf16.mxu0 %v1562
    %2947 = vmatmul.mubr.bf16.gmra.mrb[0].mxu0 %v1561
    %v2948 = vpop.f32.mrb[0].mxu0
    %v2949 = vadd.f32 %v2836, %v2948
    %v2950 = vpop.f32.mrb[0].mxu0
    %v2951 = vadd.f32 %v2838, %v2950
    %v2952 = vpop.f32.mrb[0].mxu0
    %v2953 = vadd.f32 %v2840, %v2952
    %v2954 = vpop.f32.mrb[0].mxu0
    %v2955 = vadd.f32 %v2842, %v2954
    %2956 = vmatprep.mubr.bf16.mxu0 %v1564
    %2957 = vmatmul.mubr.bf16.gmra.mrb[0].mxu0 %v1563
    %v2958 = vpop.f32.mrb[0].mxu0
    %v2959 = vadd.f32 %v2846, %v2958
    %v2960 = vpop.f32.mrb[0].mxu0
    %v2961 = vadd.f32 %v2848, %v2960
    %v2962 = vpop.f32.mrb[0].mxu0
    %v2963 = vadd.f32 %v2850, %v2962
    %v2964 = vpop.f32.mrb[0].mxu0
    %v2965 = vadd.f32 %v2852, %v2964
    %2966 = vmatprep.mubr.bf16.mxu0 %v1566
    %2967 = vmatmul.mubr.bf16.gmra.mrb[0].mxu0 %v1565
    %v2968 = vpop.f32.mrb[0].mxu0
    %v2969 = vadd.f32 %v2856, %v2968
    %v2970 = vpop.f32.mrb[0].mxu0
    %v2971 = vadd.f32 %v2858, %v2970
    %v2972 = vpop.f32.mrb[0].mxu0
    %v2973 = vadd.f32 %v2860, %v2972
    %v2974 = vpop.f32.mrb[0].mxu0
    %v2975 = vadd.f32 %v2862, %v2974
    %2976 = vmatprep.mubr.bf16.mxu0 %v1568
    %2977 = vmatmul.mubr.bf16.gmra.mrb[0].mxu0 %v1567
    %v2978 = vpop.f32.mrb[0].mxu0
    %v2979 = vadd.f32 %v2866, %v2978
    %v2980 = vpop.f32.mrb[0].mxu0
    %v2981 = vadd.f32 %v2868, %v2980
    %v2982 = vpop.f32.mrb[0].mxu0
    %v2983 = vadd.f32 %v2870, %v2982
    %v2984 = vpop.f32.mrb[0].mxu0
    %v2985 = vadd.f32 %v2872, %v2984
    %2986 = vmatprep.mubr.bf16.mxu0 %v1570
    %2987 = vmatmul.mubr.bf16.gmra.mrb[0].mxu0 %v1569
    %v2988 = vpop.f32.mrb[0].mxu0
    %v2989 = vadd.f32 %v2876, %v2988
    %v2990 = vpop.f32.mrb[0].mxu0
    %v2991 = vadd.f32 %v2878, %v2990
    %v2992 = vpop.f32.mrb[0].mxu0
    %v2993 = vadd.f32 %v2880, %v2992
    %v2994 = vpop.f32.mrb[0].mxu0
    %v2995 = vadd.f32 %v2882, %v2994
    %2996 = vdwg.mxu0
    %2997 = vmatprep.subr.bf16.mxu0 %v2354
    %2998 = vmatpush1.bf16.msra.mxu0 %v2353
    %2999 = vmatprep.subr.bf16.mxu0 %v2356
    %3000 = vmatpush1.bf16.msra.mxu0 %v2355
    %3001 = vmatprep.subr.bf16.mxu0 %v2358
    %3002 = vmatpush1.bf16.msra.mxu0 %v2357
    %3003 = vmatprep.subr.bf16.mxu0 %v2360
    %3004 = vmatpush1.bf16.msra.mxu0 %v2359
    %3005 = vmatprep.subr.bf16.mxu0 %v2362
    %3006 = vmatpush1.bf16.msra.mxu0 %v2361
    %3007 = vmatprep.subr.bf16.mxu0 %v2364
    %3008 = vmatpush1.bf16.msra.mxu0 %v2363
    %3009 = vmatprep.subr.bf16.mxu0 %v2366
    %3010 = vmatpush1.bf16.msra.mxu0 %v2365
    %3011 = vmatprep.subr.bf16.mxu0 %v2368
    %3012 = vmatpush1.bf16.msra.mxu0 %v2367
    %3013 = vmatprep.subr.bf16.mxu0 %v2370
    %3014 = vmatpush1.bf16.msra.mxu0 %v2369
    %3015 = vmatprep.subr.bf16.mxu0 %v2372
    %3016 = vmatpush1.bf16.msra.mxu0 %v2371
    %3017 = vmatprep.subr.bf16.mxu0 %v2374
    %3018 = vmatpush1.bf16.msra.mxu0 %v2373
    %3019 = vmatprep.subr.bf16.mxu0 %v2376
    %3020 = vmatpush1.bf16.msra.mxu0 %v2375
    %3021 = vmatprep.subr.bf16.mxu0 %v2378
    %3022 = vmatpush1.bf16.msra.mxu0 %v2377
    %3023 = vmatprep.subr.bf16.mxu0 %v2380
    %3024 = vmatpush1.bf16.msra.mxu0 %v2379
    %3025 = vmatprep.subr.bf16.mxu0 %v2382
    %3026 = vmatpush1.bf16.msra.mxu0 %v2381
    %3027 = vmatprep.subr.bf16.mxu0 %v2384
    %3028 = vmatpush1.bf16.msra.mxu0 %v2383
    %3029 = vmatprep.mubr.bf16.mxu0 %v1558
    %3030 = vmatmul.mubr.bf16.gmra.mrb[0].mxu0 %v1557
    %v3031 = vpop.f32.mrb[0].mxu0
    %v3032 = vadd.f32 %v2919, %v3031
    %v3033 = vpop.f32.mrb[0].mxu0
    %v3034 = vadd.f32 %v2921, %v3033
    %v3035 = vpop.f32.mrb[0].mxu0
    %v3036 = vadd.f32 %v2923, %v3035
    %v3037 = vpop.f32.mrb[0].mxu0
    %v3038 = vadd.f32 %v2925, %v3037
    %3039 = vmatprep.mubr.bf16.mxu0 %v1560
    %3040 = vmatmul.mubr.bf16.gmra.mrb[0].mxu0 %v1559
    %v3041 = vpop.f32.mrb[0].mxu0
    %v3042 = vadd.f32 %v2929, %v3041
    %v3043 = vpop.f32.mrb[0].mxu0
    %v3044 = vadd.f32 %v2931, %v3043
    %v3045 = vpop.f32.mrb[0].mxu0
    %v3046 = vadd.f32 %v2933, %v3045
    %v3047 = vpop.f32.mrb[0].mxu0
    %v3048 = vadd.f32 %v2935, %v3047
    %3049 = vmatprep.mubr.bf16.mxu0 %v1562
    %3050 = vmatmul.mubr.bf16.gmra.mrb[0].mxu0 %v1561
    %v3051 = vpop.f32.mrb[0].mxu0
    %v3052 = vadd.f32 %v2939, %v3051
    %v3053 = vpop.f32.mrb[0].mxu0
    %v3054 = vadd.f32 %v2941, %v3053
    %v3055 = vpop.f32.mrb[0].mxu0
    %v3056 = vadd.f32 %v2943, %v3055
    %v3057 = vpop.f32.mrb[0].mxu0
    %v3058 = vadd.f32 %v2945, %v3057
    %3059 = vmatprep.mubr.bf16.mxu0 %v1564
    %3060 = vmatmul.mubr.bf16.gmra.mrb[0].mxu0 %v1563
    %v3061 = vpop.f32.mrb[0].mxu0
    %v3062 = vadd.f32 %v2949, %v3061
    %v3063 = vpop.f32.mrb[0].mxu0
    %v3064 = vadd.f32 %v2951, %v3063
    %v3065 = vpop.f32.mrb[0].mxu0
    %v3066 = vadd.f32 %v2953, %v3065
    %v3067 = vpop.f32.mrb[0].mxu0
    %v3068 = vadd.f32 %v2955, %v3067
    %3069 = vmatprep.mubr.bf16.mxu0 %v1566
    %3070 = vmatmul.mubr.bf16.gmra.mrb[0].mxu0 %v1565
    %v3071 = vpop.f32.mrb[0].mxu0
    %v3072 = vadd.f32 %v2959, %v3071
    %v3073 = vpop.f32.mrb[0].mxu0
    %v3074 = vadd.f32 %v2961, %v3073
    %v3075 = vpop.f32.mrb[0].mxu0
    %v3076 = vadd.f32 %v2963, %v3075
    %v3077 = vpop.f32.mrb[0].mxu0
    %v3078 = vadd.f32 %v2965, %v3077
    %3079 = vmatprep.mubr.bf16.mxu0 %v1568
    %3080 = vmatmul.mubr.bf16.gmra.mrb[0].mxu0 %v1567
    %v3081 = vpop.f32.mrb[0].mxu0
    %v3082 = vadd.f32 %v2969, %v3081
    %v3083 = vpop.f32.mrb[0].mxu0
    %v3084 = vadd.f32 %v2971, %v3083
    %v3085 = vpop.f32.mrb[0].mxu0
    %v3086 = vadd.f32 %v2973, %v3085
    %v3087 = vpop.f32.mrb[0].mxu0
    %v3088 = vadd.f32 %v2975, %v3087
    %3089 = vmatprep.mubr.bf16.mxu0 %v1570
    %3090 = vmatmul.mubr.bf16.gmra.mrb[0].mxu0 %v1569
    %v3091 = vpop.f32.mrb[0].mxu0
    %v3092 = vadd.f32 %v2979, %v3091
    %v3093 = vpop.f32.mrb[0].mxu0
    %v3094 = vadd.f32 %v2981, %v3093
    %v3095 = vpop.f32.mrb[0].mxu0
    %v3096 = vadd.f32 %v2983, %v3095
    %v3097 = vpop.f32.mrb[0].mxu0
    %v3098 = vadd.f32 %v2985, %v3097
    %3099 = vmatprep.mubr.bf16.mxu0 %v1572
    %3100 = vmatmul.mubr.bf16.gmra.mrb[0].mxu0 %v1571
    %v3101 = vpop.f32.mrb[0].mxu0
    %v3102 = vadd.f32 %v2989, %v3101
    %v3103 = vpop.f32.mrb[0].mxu0
    %v3104 = vadd.f32 %v2991, %v3103
    %v3105 = vpop.f32.mrb[0].mxu0
    %v3106 = vadd.f32 %v2993, %v3105
    %v3107 = vpop.f32.mrb[0].mxu0
    %v3108 = vadd.f32 %v2995, %v3107
    %3109 = vdwg.mxu0
    %v3110 = vmax.f32 %v3032, %v3042
    %v3111 = vmax.f32 %v3034, %v3044
    %v3112 = vmax.f32 %v3036, %v3046
    %v3113 = vmax.f32 %v3038, %v3048
    %v3114 = vmax.f32 %v3052, %v3062
    %v3115 = vmax.f32 %v3054, %v3064
    %v3116 = vmax.f32 %v3056, %v3066
    %v3117 = vmax.f32 %v3058, %v3068
    %v3118 = vmax.f32 %v3072, %v3082
    %v3119 = vmax.f32 %v3074, %v3084
    %v3120 = vmax.f32 %v3076, %v3086
    %v3121 = vmax.f32 %v3078, %v3088
    %v3122 = vmax.f32 %v3092, %v3102
    %v3123 = vmax.f32 %v3094, %v3104
    %v3124 = vmax.f32 %v3096, %v3106
    %v3125 = vmax.f32 %v3098, %v3108
    %3142 = vrot.lane.b32.xlu0 %v3110, 108
    %v3143 = vpop.permute.xlu0 %3142
    %3144 = vrot.lane.b32.xlu0 %v3111, 108
    %v3145 = vpop.permute.xlu0 %3144
    %3146 = vrot.lane.b32.xlu0 %v3112, 108
    %v3147 = vpop.permute.xlu0 %3146
    %3148 = vrot.lane.b32.xlu0 %v3113, 108
    %v3149 = vpop.permute.xlu0 %3148
    %3150 = vrot.lane.b32.xlu0 %v3114, 108
    %v3151 = vpop.permute.xlu0 %3150
    %3152 = vrot.lane.b32.xlu0 %v3115, 108
    %v3153 = vpop.permute.xlu0 %3152
    %3154 = vrot.lane.b32.xlu0 %v3116, 108
    %v3155 = vpop.permute.xlu0 %3154
    %3156 = vrot.lane.b32.xlu0 %v3117, 108
    %v3157 = vpop.permute.xlu0 %3156
    %3158 = vrot.lane.b32.xlu0 %v3118, 108
    %v3159 = vpop.permute.xlu0 %3158
    %3160 = vrot.lane.b32.xlu0 %v3119, 108
    %v3161 = vpop.permute.xlu0 %3160
    %3162 = vrot.lane.b32.xlu0 %v3120, 108
    %v3163 = vpop.permute.xlu0 %3162
    %3164 = vrot.lane.b32.xlu0 %v3121, 108
    %v3165 = vpop.permute.xlu0 %3164
    %3166 = vrot.lane.b32.xlu0 %v3122, 108
    %v3167 = vpop.permute.xlu0 %3166
    %3168 = vrot.lane.b32.xlu0 %v3123, 108
    %v3169 = vpop.permute.xlu0 %3168
    %3170 = vrot.lane.b32.xlu0 %v3124, 108
    %v3171 = vpop.permute.xlu0 %3170
    %3172 = vrot.lane.b32.xlu0 %v3125, 108
    %v3173 = vpop.permute.xlu0 %3172
    %vm3174 = vcmask 883712
    %v3175 = vsel %vm3174, %v3143, %v3145
    %v3176 = vsel %vm3174, %v3147, %v3149
    %v3177 = vsel %vm3174, %v3151, %v3153
    %v3178 = vsel %vm3174, %v3155, %v3157
    %v3179 = vsel %vm3174, %v3159, %v3161
    %v3180 = vsel %vm3174, %v3163, %v3165
    %v3181 = vsel %vm3174, %v3167, %v3169
    %v3182 = vsel %vm3174, %v3171, %v3173
    %v3207 = vsel %vm3174, %v3145, %v3143
    %v3208 = vsel %vm3174, %v3149, %v3147
    %v3209 = vsel %vm3174, %v3153, %v3151
    %v3210 = vsel %vm3174, %v3157, %v3155
    %v3211 = vsel %vm3174, %v3161, %v3159
    %v3212 = vsel %vm3174, %v3165, %v3163
    %v3213 = vsel %vm3174, %v3169, %v3167
    %v3214 = vsel %vm3174, %v3173, %v3171
    %v3215 = vmax.f32 %v3110, %v3175
    %v3216 = vmax.f32 %v3111, %v3207
    %v3217 = vmax.f32 %v3112, %v3176
    %v3218 = vmax.f32 %v3113, %v3208
    %v3219 = vmax.f32 %v3114, %v3177
    %v3220 = vmax.f32 %v3115, %v3209
    %v3221 = vmax.f32 %v3116, %v3178
    %v3222 = vmax.f32 %v3117, %v3210
    %v3223 = vmax.f32 %v3118, %v3179
    %v3224 = vmax.f32 %v3119, %v3211
    %v3225 = vmax.f32 %v3120, %v3180
    %v3226 = vmax.f32 %v3121, %v3212
    %v3227 = vmax.f32 %v3122, %v3181
    %v3228 = vmax.f32 %v3123, %v3213
    %v3229 = vmax.f32 %v3124, %v3182
    %v3230 = vmax.f32 %v3125, %v3214
    %v3231 = vmax.f32 %v3215, 0.0
    %v3232 = vmax.f32 %v3216, 0.0
    %v3233 = vmax.f32 %v3217, 0.0
    %v3234 = vmax.f32 %v3218, 0.0
    %v3235 = vmax.f32 %v3219, 0.0
    %v3236 = vmax.f32 %v3220, 0.0
    %v3237 = vmax.f32 %v3221, 0.0
    %v3238 = vmax.f32 %v3222, 0.0
    %v3239 = vmax.f32 %v3223, 0.0
    %v3240 = vmax.f32 %v3224, 0.0
    %v3241 = vmax.f32 %v3225, 0.0
    %v3242 = vmax.f32 %v3226, 0.0
    %v3243 = vmax.f32 %v3227, 0.0
    %v3244 = vmax.f32 %v3228, 0.0
    %v3245 = vmax.f32 %v3229, 0.0
    %v3246 = vmax.f32 %v3230, 0.0
    %v3247 = vpack.c.bf16 %v3233, %v3231
    %v3248 = vpack.c.bf16 %v3234, %v3232
    %v3249 = vpack.c.bf16 %v3237, %v3235
    %v3250 = vpack.c.bf16 %v3238, %v3236
    %v3251 = vpack.c.bf16 %v3241, %v3239
    %v3252 = vpack.c.bf16 %v3242, %v3240
    %v3253 = vpack.c.bf16 %v3245, %v3243
    %v3254 = vpack.c.bf16 %v3246, %v3244
    %v3255 = vld [vmem:[#allocation4] sm:$0xf]
    %v3256 = vld [vmem:[#allocation4 + $0x4] sm:$0xf]
    %v3257 = vld [vmem:[#allocation4 + $0x8] sm:$0xf]
    %v3258 = vld [vmem:[#allocation4 + $0xc] sm:$0xf]
    %v3259 = vld [vmem:[#allocation4 + $0x10] sm:$0xf]
    %v3260 = vld [vmem:[#allocation4 + $0x14] sm:$0xf]
    %v3261 = vld [vmem:[#allocation4 + $0x18] sm:$0xf]
    %v3262 = vld [vmem:[#allocation4 + $0x1c] sm:$0xf]
    %v3263 = vld [vmem:[#allocation4 + $0x20] sm:$0xf]
    %v3264 = vld [vmem:[#allocation4 + $0x24] sm:$0xf]
    %v3265 = vld [vmem:[#allocation4 + $0x28] sm:$0xf]
    %v3266 = vld [vmem:[#allocation4 + $0x2c] sm:$0xf]
    %v3267 = vld [vmem:[#allocation4 + $0x30] sm:$0xf]
    %v3268 = vld [vmem:[#allocation4 + $0x34] sm:$0xf]
    %v3269 = vld [vmem:[#allocation4 + $0x38] sm:$0xf]
    %v3270 = vld [vmem:[#allocation4 + $0x3c] sm:$0xf]
    %v3271 = vld [vmem:[#allocation4 + $0x40] sm:$0xf]
    %v3272 = vld [vmem:[#allocation4 + $0x44] sm:$0xf]
    %v3273 = vld [vmem:[#allocation4 + $0x48] sm:$0xf]
    %v3274 = vld [vmem:[#allocation4 + $0x4c] sm:$0xf]
    %v3275 = vld [vmem:[#allocation4 + $0x50] sm:$0xf]
    %v3276 = vld [vmem:[#allocation4 + $0x54] sm:$0xf]
    %v3277 = vld [vmem:[#allocation4 + $0x58] sm:$0xf]
    %v3278 = vld [vmem:[#allocation4 + $0x5c] sm:$0xf]
    %v3279 = vld [vmem:[#allocation4 + $0x60] sm:$0xf]
    %v3280 = vld [vmem:[#allocation4 + $0x64] sm:$0xf]
    %v3281 = vld [vmem:[#allocation4 + $0x68] sm:$0xf]
    %v3282 = vld [vmem:[#allocation4 + $0x6c] sm:$0xf]
    %v3283 = vld [vmem:[#allocation4 + $0x70] sm:$0xf]
    %v3284 = vld [vmem:[#allocation4 + $0x74] sm:$0xf]
    %v3285 = vld [vmem:[#allocation4 + $0x78] sm:$0xf]
    %v3286 = vld [vmem:[#allocation4 + $0x7c] sm:$0xf]
    %v3287 = vld [vmem:[#allocation4 + $0x80] sm:$0xf]
    %v3288 = vld [vmem:[#allocation4 + $0x84] sm:$0xf]
    %v3289 = vld [vmem:[#allocation4 + $0x88] sm:$0xf]
    %v3290 = vld [vmem:[#allocation4 + $0x8c] sm:$0xf]
    %v3291 = vld [vmem:[#allocation4 + $0x90] sm:$0xf]
    %v3292 = vld [vmem:[#allocation4 + $0x94] sm:$0xf]
    %v3293 = vld [vmem:[#allocation4 + $0x98] sm:$0xf]
    %v3294 = vld [vmem:[#allocation4 + $0x9c] sm:$0xf]
    %v3295 = vld [vmem:[#allocation4 + $0xa0] sm:$0xf]
    %v3296 = vld [vmem:[#allocation4 + $0xa4] sm:$0xf]
    %v3297 = vld [vmem:[#allocation4 + $0xa8] sm:$0xf]
    %v3298 = vld [vmem:[#allocation4 + $0xac] sm:$0xf]
    %v3299 = vld [vmem:[#allocation4 + $0xb0] sm:$0xf]
    %v3300 = vld [vmem:[#allocation4 + $0xb4] sm:$0xf]
    %v3301 = vld [vmem:[#allocation4 + $0xb8] sm:$0xf]
    %v3302 = vld [vmem:[#allocation4 + $0xbc] sm:$0xf]
    %v3303 = vld [vmem:[#allocation4 + $0xc0] sm:$0xf]
    %v3304 = vld [vmem:[#allocation4 + $0xc4] sm:$0xf]
    %v3305 = vld [vmem:[#allocation4 + $0xc8] sm:$0xf]
    %v3306 = vld [vmem:[#allocation4 + $0xcc] sm:$0xf]
    %v3307 = vld [vmem:[#allocation4 + $0xd0] sm:$0xf]
    %v3308 = vld [vmem:[#allocation4 + $0xd4] sm:$0xf]
    %v3309 = vld [vmem:[#allocation4 + $0xd8] sm:$0xf]
    %v3310 = vld [vmem:[#allocation4 + $0xdc] sm:$0xf]
    %v3311 = vld [vmem:[#allocation4 + $0xe0] sm:$0xf]
    %v3312 = vld [vmem:[#allocation4 + $0xe4] sm:$0xf]
    %v3313 = vld [vmem:[#allocation4 + $0xe8] sm:$0xf]
    %v3314 = vld [vmem:[#allocation4 + $0xec] sm:$0xf]
    %v3315 = vld [vmem:[#allocation4 + $0xf0] sm:$0xf]
    %v3316 = vld [vmem:[#allocation4 + $0xf4] sm:$0xf]
    %v3317 = vld [vmem:[#allocation4 + $0xf8] sm:$0xf]
    %v3318 = vld [vmem:[#allocation4 + $0xfc] sm:$0xf]
    %v3319 = vld [vmem:[#allocation4 + $0x100] sm:$0xf]
    %v3320 = vld [vmem:[#allocation4 + $0x104] sm:$0xf]
    %v3321 = vld [vmem:[#allocation4 + $0x108] sm:$0xf]
    %v3322 = vld [vmem:[#allocation4 + $0x10c] sm:$0xf]
    %v3323 = vld [vmem:[#allocation4 + $0x110] sm:$0xf]
    %v3324 = vld [vmem:[#allocation4 + $0x114] sm:$0xf]
    %v3325 = vld [vmem:[#allocation4 + $0x118] sm:$0xf]
    %v3326 = vld [vmem:[#allocation4 + $0x11c] sm:$0xf]
    %v3327 = vld [vmem:[#allocation4 + $0x120] sm:$0xf]
    %v3328 = vld [vmem:[#allocation4 + $0x124] sm:$0xf]
    %v3329 = vld [vmem:[#allocation4 + $0x128] sm:$0xf]
    %v3330 = vld [vmem:[#allocation4 + $0x12c] sm:$0xf]
    %v3331 = vld [vmem:[#allocation4 + $0x130] sm:$0xf]
    %v3332 = vld [vmem:[#allocation4 + $0x134] sm:$0xf]
    %v3333 = vld [vmem:[#allocation4 + $0x138] sm:$0xf]
    %v3334 = vld [vmem:[#allocation4 + $0x13c] sm:$0xf]
    %v3335 = vld [vmem:[#allocation4 + $0x140] sm:$0xf]
    %v3336 = vld [vmem:[#allocation4 + $0x144] sm:$0xf]
    %v3337 = vld [vmem:[#allocation4 + $0x148] sm:$0xf]
    %v3338 = vld [vmem:[#allocation4 + $0x14c] sm:$0xf]
    %v3339 = vld [vmem:[#allocation4 + $0x150] sm:$0xf]
    %v3340 = vld [vmem:[#allocation4 + $0x154] sm:$0xf]
    %v3341 = vld [vmem:[#allocation4 + $0x158] sm:$0xf]
    %v3342 = vld [vmem:[#allocation4 + $0x15c] sm:$0xf]
    %v3343 = vld [vmem:[#allocation4 + $0x160] sm:$0xf]
    %v3344 = vld [vmem:[#allocation4 + $0x164] sm:$0xf]
    %v3345 = vld [vmem:[#allocation4 + $0x168] sm:$0xf]
    %v3346 = vld [vmem:[#allocation4 + $0x16c] sm:$0xf]
    %v3347 = vld [vmem:[#allocation4 + $0x170] sm:$0xf]
    %v3348 = vld [vmem:[#allocation4 + $0x174] sm:$0xf]
    %v3349 = vld [vmem:[#allocation4 + $0x178] sm:$0xf]
    %v3350 = vld [vmem:[#allocation4 + $0x17c] sm:$0xf]
    %v3351 = vld [vmem:[#allocation4 + $0x180] sm:$0xf]
    %v3352 = vld [vmem:[#allocation4 + $0x184] sm:$0xf]
    %v3353 = vld [vmem:[#allocation4 + $0x188] sm:$0xf]
    %v3354 = vld [vmem:[#allocation4 + $0x18c] sm:$0xf]
    %v3355 = vld [vmem:[#allocation4 + $0x190] sm:$0xf]
    %v3356 = vld [vmem:[#allocation4 + $0x194] sm:$0xf]
    %v3357 = vld [vmem:[#allocation4 + $0x198] sm:$0xf]
    %v3358 = vld [vmem:[#allocation4 + $0x19c] sm:$0xf]
    %v3359 = vld [vmem:[#allocation4 + $0x1a0] sm:$0xf]
    %v3360 = vld [vmem:[#allocation4 + $0x1a4] sm:$0xf]
    %v3361 = vld [vmem:[#allocation4 + $0x1a8] sm:$0xf]
    %v3362 = vld [vmem:[#allocation4 + $0x1ac] sm:$0xf]
    %v3363 = vld [vmem:[#allocation4 + $0x1b0] sm:$0xf]
    %v3364 = vld [vmem:[#allocation4 + $0x1b4] sm:$0xf]
    %v3365 = vld [vmem:[#allocation4 + $0x1b8] sm:$0xf]
    %v3366 = vld [vmem:[#allocation4 + $0x1bc] sm:$0xf]
    %v3367 = vld [vmem:[#allocation4 + $0x1c0] sm:$0xf]
    %v3368 = vld [vmem:[#allocation4 + $0x1c4] sm:$0xf]
    %v3369 = vld [vmem:[#allocation4 + $0x1c8] sm:$0xf]
    %v3370 = vld [vmem:[#allocation4 + $0x1cc] sm:$0xf]
    %v3371 = vld [vmem:[#allocation4 + $0x1d0] sm:$0xf]
    %v3372 = vld [vmem:[#allocation4 + $0x1d4] sm:$0xf]
    %v3373 = vld [vmem:[#allocation4 + $0x1d8] sm:$0xf]
    %v3374 = vld [vmem:[#allocation4 + $0x1dc] sm:$0xf]
    %v3375 = vld [vmem:[#allocation4 + $0x1e0] sm:$0xf]
    %v3376 = vld [vmem:[#allocation4 + $0x1e4] sm:$0xf]
    %v3377 = vld [vmem:[#allocation4 + $0x1e8] sm:$0xf]
    %v3378 = vld [vmem:[#allocation4 + $0x1ec] sm:$0xf]
    %v3379 = vld [vmem:[#allocation4 + $0x1f0] sm:$0xf]
    %v3380 = vld [vmem:[#allocation4 + $0x1f4] sm:$0xf]
    %v3381 = vld [vmem:[#allocation4 + $0x1f8] sm:$0xf]
    %v3382 = vld [vmem:[#allocation4 + $0x1fc] sm:$0xf]
    %v3383 = vld [vmem:[%s6] sm:$0x1]
    %v3385 = vlaneseq
    %v3386 = vshrl.u32 %v3385, 7
    %v3387 = vsub.s32 0, %v3386
    %v3388 = vrot.slane %v3383, %v3387
    %v3518 = vunpack.c.l.b16 %v3255
    %v3519 = vunpack.c.l.b16 %v3256
    %v3520 = vunpack.c.l.b16 %v3257
    %v3521 = vunpack.c.l.b16 %v3258
    %v3522 = vunpack.c.l.b16 %v3259
    %v3523 = vunpack.c.l.b16 %v3260
    %v3524 = vunpack.c.l.b16 %v3261
    %v3525 = vunpack.c.l.b16 %v3262
    %v3526 = vunpack.c.l.b16 %v3263
    %v3527 = vunpack.c.l.b16 %v3264
    %v3528 = vunpack.c.l.b16 %v3265
    %v3529 = vunpack.c.l.b16 %v3266
    %v3530 = vunpack.c.l.b16 %v3267
    %v3531 = vunpack.c.l.b16 %v3268
    %v3532 = vunpack.c.l.b16 %v3269
    %v3533 = vunpack.c.l.b16 %v3270
    %v3534 = vunpack.c.l.b16 %v3271
    %v3535 = vunpack.c.l.b16 %v3272
    %v3536 = vunpack.c.l.b16 %v3273
    %v3537 = vunpack.c.l.b16 %v3274
    %v3538 = vunpack.c.l.b16 %v3275
    %v3539 = vunpack.c.l.b16 %v3276
    %v3540 = vunpack.c.l.b16 %v3277
    %v3541 = vunpack.c.l.b16 %v3278
    %v3542 = vunpack.c.l.b16 %v3279
    %v3543 = vunpack.c.l.b16 %v3280
    %v3544 = vunpack.c.l.b16 %v3281
    %v3545 = vunpack.c.l.b16 %v3282
    %v3546 = vunpack.c.l.b16 %v3283
    %v3547 = vunpack.c.l.b16 %v3284
    %v3548 = vunpack.c.l.b16 %v3285
    %v3549 = vunpack.c.l.b16 %v3286
    %v3550 = vunpack.c.l.b16 %v3287
    %v3551 = vunpack.c.l.b16 %v3288
    %v3552 = vunpack.c.l.b16 %v3289
    %v3553 = vunpack.c.l.b16 %v3290
    %v3554 = vunpack.c.l.b16 %v3291
    %v3555 = vunpack.c.l.b16 %v3292
    %v3556 = vunpack.c.l.b16 %v3293
    %v3557 = vunpack.c.l.b16 %v3294
    %v3558 = vunpack.c.l.b16 %v3295
    %v3559 = vunpack.c.l.b16 %v3296
    %v3560 = vunpack.c.l.b16 %v3297
    %v3561 = vunpack.c.l.b16 %v3298
    %v3562 = vunpack.c.l.b16 %v3299
    %v3563 = vunpack.c.l.b16 %v3300
    %v3564 = vunpack.c.l.b16 %v3301
    %v3565 = vunpack.c.l.b16 %v3302
    %v3566 = vunpack.c.l.b16 %v3303
    %v3567 = vunpack.c.l.b16 %v3304
    %v3568 = vunpack.c.l.b16 %v3305
    %v3569 = vunpack.c.l.b16 %v3306
    %v3570 = vunpack.c.l.b16 %v3307
    %v3571 = vunpack.c.l.b16 %v3308
    %v3572 = vunpack.c.l.b16 %v3309
    %v3573 = vunpack.c.l.b16 %v3310
    %v3574 = vunpack.c.l.b16 %v3311
    %v3575 = vunpack.c.l.b16 %v3312
    %v3576 = vunpack.c.l.b16 %v3313
    %v3577 = vunpack.c.l.b16 %v3314
    %v3578 = vunpack.c.l.b16 %v3315
    %v3579 = vunpack.c.l.b16 %v3316
    %v3580 = vunpack.c.l.b16 %v3317
    %v3581 = vunpack.c.l.b16 %v3318
    %v3582 = vunpack.c.l.b16 %v3319
    %v3583 = vunpack.c.l.b16 %v3320
    %v3584 = vunpack.c.l.b16 %v3321
    %v3585 = vunpack.c.l.b16 %v3322
    %v3586 = vunpack.c.l.b16 %v3323
    %v3587 = vunpack.c.l.b16 %v3324
    %v3588 = vunpack.c.l.b16 %v3325
    %v3589 = vunpack.c.l.b16 %v3326
    %v3590 = vunpack.c.l.b16 %v3327
    %v3591 = vunpack.c.l.b16 %v3328
    %v3592 = vunpack.c.l.b16 %v3329
    %v3593 = vunpack.c.l.b16 %v3330
    %v3594 = vunpack.c.l.b16 %v3331
    %v3595 = vunpack.c.l.b16 %v3332
    %v3596 = vunpack.c.l.b16 %v3333
    %v3597 = vunpack.c.l.b16 %v3334
    %v3598 = vunpack.c.l.b16 %v3335
    %v3599 = vunpack.c.l.b16 %v3336
    %v3600 = vunpack.c.l.b16 %v3337
    %v3601 = vunpack.c.l.b16 %v3338
    %v3602 = vunpack.c.l.b16 %v3339
    %v3603 = vunpack.c.l.b16 %v3340
    %v3604 = vunpack.c.l.b16 %v3341
    %v3605 = vunpack.c.l.b16 %v3342
    %v3606 = vunpack.c.l.b16 %v3343
    %v3607 = vunpack.c.l.b16 %v3344
    %v3608 = vunpack.c.l.b16 %v3345
    %v3609 = vunpack.c.l.b16 %v3346
    %v3610 = vunpack.c.l.b16 %v3347
    %v3611 = vunpack.c.l.b16 %v3348
    %v3612 = vunpack.c.l.b16 %v3349
    %v3613 = vunpack.c.l.b16 %v3350
    %v3614 = vunpack.c.l.b16 %v3351
    %v3615 = vunpack.c.l.b16 %v3352
    %v3616 = vunpack.c.l.b16 %v3353
    %v3617 = vunpack.c.l.b16 %v3354
    %v3618 = vunpack.c.l.b16 %v3355
    %v3619 = vunpack.c.l.b16 %v3356
    %v3620 = vunpack.c.l.b16 %v3357
    %v3621 = vunpack.c.l.b16 %v3358
    %v3622 = vunpack.c.l.b16 %v3359
    %v3623 = vunpack.c.l.b16 %v3360
    %v3624 = vunpack.c.l.b16 %v3361
    %v3625 = vunpack.c.l.b16 %v3362
    %v3626 = vunpack.c.l.b16 %v3363
    %v3627 = vunpack.c.l.b16 %v3364
    %v3628 = vunpack.c.l.b16 %v3365
    %v3629 = vunpack.c.l.b16 %v3366
    %v3630 = vunpack.c.l.b16 %v3367
    %v3631 = vunpack.c.l.b16 %v3368
    %v3632 = vunpack.c.l.b16 %v3369
    %v3633 = vunpack.c.l.b16 %v3370
    %v3634 = vunpack.c.l.b16 %v3371
    %v3635 = vunpack.c.l.b16 %v3372
    %v3636 = vunpack.c.l.b16 %v3373
    %v3637 = vunpack.c.l.b16 %v3374
    %v3638 = vunpack.c.l.b16 %v3375
    %v3639 = vunpack.c.l.b16 %v3376
    %v3640 = vunpack.c.l.b16 %v3377
    %v3641 = vunpack.c.l.b16 %v3378
    %v3642 = vunpack.c.l.b16 %v3379
    %v3643 = vunpack.c.l.b16 %v3380
    %v3644 = vunpack.c.l.b16 %v3381
    %v3645 = vunpack.c.l.b16 %v3382
    %v3646 = vpack.c.b16 %v3519, %v3518
    %v3647 = vpack.c.b16 %v3521, %v3520
    %v3648 = vpack.c.b16 %v3523, %v3522
    %v3649 = vpack.c.b16 %v3525, %v3524
    %v3650 = vpack.c.b16 %v3527, %v3526
    %v3651 = vpack.c.b16 %v3529, %v3528
    %v3652 = vpack.c.b16 %v3531, %v3530
    %v3653 = vpack.c.b16 %v3533, %v3532
    %v3654 = vpack.c.b16 %v3535, %v3534
    %v3655 = vpack.c.b16 %v3537, %v3536
    %v3656 = vpack.c.b16 %v3539, %v3538
    %v3657 = vpack.c.b16 %v3541, %v3540
    %v3658 = vpack.c.b16 %v3543, %v3542
    %v3659 = vpack.c.b16 %v3545, %v3544
    %v3660 = vpack.c.b16 %v3547, %v3546
    %v3661 = vpack.c.b16 %v3549, %v3548
    %v3662 = vpack.c.b16 %v3551, %v3550
    %v3663 = vpack.c.b16 %v3553, %v3552
    %v3664 = vpack.c.b16 %v3555, %v3554
    %v3665 = vpack.c.b16 %v3557, %v3556
    %v3666 = vpack.c.b16 %v3559, %v3558
    %v3667 = vpack.c.b16 %v3561, %v3560
    %v3668 = vpack.c.b16 %v3563, %v3562
    %v3669 = vpack.c.b16 %v3565, %v3564
    %v3670 = vpack.c.b16 %v3567, %v3566
    %v3671 = vpack.c.b16 %v3569, %v3568
    %v3672 = vpack.c.b16 %v3571, %v3570
    %v3673 = vpack.c.b16 %v3573, %v3572
    %v3674 = vpack.c.b16 %v3575, %v3574
    %v3675 = vpack.c.b16 %v3577, %v3576
    %v3676 = vpack.c.b16 %v3579, %v3578
    %v3677 = vpack.c.b16 %v3581, %v3580
    %v3678 = vpack.c.b16 %v3583, %v3582
    %v3679 = vpack.c.b16 %v3585, %v3584
    %v3680 = vpack.c.b16 %v3587, %v3586
    %v3681 = vpack.c.b16 %v3589, %v3588
    %v3682 = vpack.c.b16 %v3591, %v3590
    %v3683 = vpack.c.b16 %v3593, %v3592
    %v3684 = vpack.c.b16 %v3595, %v3594
    %v3685 = vpack.c.b16 %v3597, %v3596
    %v3686 = vpack.c.b16 %v3599, %v3598
    %v3687 = vpack.c.b16 %v3601, %v3600
    %v3688 = vpack.c.b16 %v3603, %v3602
    %v3689 = vpack.c.b16 %v3605, %v3604
    %v3690 = vpack.c.b16 %v3607, %v3606
    %v3691 = vpack.c.b16 %v3609, %v3608
    %v3692 = vpack.c.b16 %v3611, %v3610
    %v3693 = vpack.c.b16 %v3613, %v3612
    %v3694 = vpack.c.b16 %v3615, %v3614
    %v3695 = vpack.c.b16 %v3617, %v3616
    %v3696 = vpack.c.b16 %v3619, %v3618
    %v3697 = vpack.c.b16 %v3621, %v3620
    %v3698 = vpack.c.b16 %v3623, %v3622
    %v3699 = vpack.c.b16 %v3625, %v3624
    %v3700 = vpack.c.b16 %v3627, %v3626
    %v3701 = vpack.c.b16 %v3629, %v3628
    %v3702 = vpack.c.b16 %v3631, %v3630
    %v3703 = vpack.c.b16 %v3633, %v3632
    %v3704 = vpack.c.b16 %v3635, %v3634
    %v3705 = vpack.c.b16 %v3637, %v3636
    %v3706 = vpack.c.b16 %v3639, %v3638
    %v3707 = vpack.c.b16 %v3641, %v3640
    %v3708 = vpack.c.b16 %v3643, %v3642
    %v3709 = vpack.c.b16 %v3645, %v3644
    %3774 = vmatprep.subr.bf16.mxu0 0
    %3775 = vmatpush1.bf16.msra.mxu0 %v3646
    %3776 = vmatprep.subr.bf16.mxu0 0
    %3777 = vmatpush1.bf16.msra.mxu0 %v3647
    %3778 = vmatprep.subr.bf16.mxu0 0
    %3779 = vmatpush1.bf16.msra.mxu0 %v3648
    %3780 = vmatprep.subr.bf16.mxu0 0
    %3781 = vmatpush1.bf16.msra.mxu0 %v3649
    %3782 = vmatprep.subr.bf16.mxu0 0
    %3783 = vmatpush1.bf16.msra.mxu0 %v3650
    %3784 = vmatprep.subr.bf16.mxu0 0
    %3785 = vmatpush1.bf16.msra.mxu0 %v3651
    %3786 = vmatprep.subr.bf16.mxu0 0
    %3787 = vmatpush1.bf16.msra.mxu0 %v3652
    %3788 = vmatprep.subr.bf16.mxu0 0
    %3789 = vmatpush1.bf16.msra.mxu0 %v3653
    %3790 = vmatprep.subr.bf16.mxu0 0
    %3791 = vmatpush1.bf16.msra.mxu0 %v3654
    %3792 = vmatprep.subr.bf16.mxu0 0
    %3793 = vmatpush1.bf16.msra.mxu0 %v3655
    %3794 = vmatprep.subr.bf16.mxu0 0
    %3795 = vmatpush1.bf16.msra.mxu0 %v3656
    %3796 = vmatprep.subr.bf16.mxu0 0
    %3797 = vmatpush1.bf16.msra.mxu0 %v3657
    %3798 = vmatprep.subr.bf16.mxu0 0
    %3799 = vmatpush1.bf16.msra.mxu0 %v3658
    %3800 = vmatprep.subr.bf16.mxu0 0
    %3801 = vmatpush1.bf16.msra.mxu0 %v3659
    %3802 = vmatprep.subr.bf16.mxu0 0
    %3803 = vmatpush1.bf16.msra.mxu0 %v3660
    %3804 = vmatprep.subr.bf16.mxu0 0
    %3805 = vmatpush1.bf16.msra.mxu0 %v3661
    %3806 = vmatprep.mubr.bf16.mxu0 %v3248
    %3807 = vmatmul.mubr.bf16.gmra.mrb[0].mxu0 %v3247
    %v3808 = vpop.f32.mrb[0].mxu0
    %v3809 = vadd.f32 %v3388, %v3808
    %v3810 = vpop.f32.mrb[0].mxu0
    %v3811 = vpop.f32.mrb[0].mxu0
    %v3812 = vadd.f32 %v3388, %v3811
    %v3813 = vpop.f32.mrb[0].mxu0
    %3814 = vdwg.mxu0
    %3815 = vmatprep.subr.bf16.mxu0 0
    %3816 = vmatpush1.bf16.msra.mxu0 %v3662
    %3817 = vmatprep.subr.bf16.mxu0 0
    %3818 = vmatpush1.bf16.msra.mxu0 %v3663
    %3819 = vmatprep.subr.bf16.mxu0 0
    %3820 = vmatpush1.bf16.msra.mxu0 %v3664
    %3821 = vmatprep.subr.bf16.mxu0 0
    %3822 = vmatpush1.bf16.msra.mxu0 %v3665
    %3823 = vmatprep.subr.bf16.mxu0 0
    %3824 = vmatpush1.bf16.msra.mxu0 %v3666
    %3825 = vmatprep.subr.bf16.mxu0 0
    %3826 = vmatpush1.bf16.msra.mxu0 %v3667
    %3827 = vmatprep.subr.bf16.mxu0 0
    %3828 = vmatpush1.bf16.msra.mxu0 %v3668
    %3829 = vmatprep.subr.bf16.mxu0 0
    %3830 = vmatpush1.bf16.msra.mxu0 %v3669
    %3831 = vmatprep.subr.bf16.mxu0 0
    %3832 = vmatpush1.bf16.msra.mxu0 %v3670
    %3833 = vmatprep.subr.bf16.mxu0 0
    %3834 = vmatpush1.bf16.msra.mxu0 %v3671
    %3835 = vmatprep.subr.bf16.mxu0 0
    %3836 = vmatpush1.bf16.msra.mxu0 %v3672
    %3837 = vmatprep.subr.bf16.mxu0 0
    %3838 = vmatpush1.bf16.msra.mxu0 %v3673
    %3839 = vmatprep.subr.bf16.mxu0 0
    %3840 = vmatpush1.bf16.msra.mxu0 %v3674
    %3841 = vmatprep.subr.bf16.mxu0 0
    %3842 = vmatpush1.bf16.msra.mxu0 %v3675
    %3843 = vmatprep.subr.bf16.mxu0 0
    %3844 = vmatpush1.bf16.msra.mxu0 %v3676
    %3845 = vmatprep.subr.bf16.mxu0 0
    %3846 = vmatpush1.bf16.msra.mxu0 %v3677
    %3847 = vmatprep.mubr.bf16.mxu0 %v3250
    %3848 = vmatmul.mubr.bf16.gmra.mrb[0].mxu0 %v3249
    %v3849 = vpop.f32.mrb[0].mxu0
    %v3850 = vadd.f32 %v3809, %v3849
    %v3851 = vpop.f32.mrb[0].mxu0
    %v3852 = vpop.f32.mrb[0].mxu0
    %v3853 = vadd.f32 %v3812, %v3852
    %v3854 = vpop.f32.mrb[0].mxu0
    %3855 = vdwg.mxu0
    %3856 = vmatprep.subr.bf16.mxu0 0
    %3857 = vmatpush1.bf16.msra.mxu0 %v3678
    %3858 = vmatprep.subr.bf16.mxu0 0
    %3859 = vmatpush1.bf16.msra.mxu0 %v3679
    %3860 = vmatprep.subr.bf16.mxu0 0
    %3861 = vmatpush1.bf16.msra.mxu0 %v3680
    %3862 = vmatprep.subr.bf16.mxu0 0
    %3863 = vmatpush1.bf16.msra.mxu0 %v3681
    %3864 = vmatprep.subr.bf16.mxu0 0
    %3865 = vmatpush1.bf16.msra.mxu0 %v3682
    %3866 = vmatprep.subr.bf16.mxu0 0
    %3867 = vmatpush1.bf16.msra.mxu0 %v3683
    %3868 = vmatprep.subr.bf16.mxu0 0
    %3869 = vmatpush1.bf16.msra.mxu0 %v3684
    %3870 = vmatprep.subr.bf16.mxu0 0
    %3871 = vmatpush1.bf16.msra.mxu0 %v3685
    %3872 = vmatprep.subr.bf16.mxu0 0
    %3873 = vmatpush1.bf16.msra.mxu0 %v3686
    %3874 = vmatprep.subr.bf16.mxu0 0
    %3875 = vmatpush1.bf16.msra.mxu0 %v3687
    %3876 = vmatprep.subr.bf16.mxu0 0
    %3877 = vmatpush1.bf16.msra.mxu0 %v3688
    %3878 = vmatprep.subr.bf16.mxu0 0
    %3879 = vmatpush1.bf16.msra.mxu0 %v3689
    %3880 = vmatprep.subr.bf16.mxu0 0
    %3881 = vmatpush1.bf16.msra.mxu0 %v3690
    %3882 = vmatprep.subr.bf16.mxu0 0
    %3883 = vmatpush1.bf16.msra.mxu0 %v3691
    %3884 = vmatprep.subr.bf16.mxu0 0
    %3885 = vmatpush1.bf16.msra.mxu0 %v3692
    %3886 = vmatprep.subr.bf16.mxu0 0
    %3887 = vmatpush1.bf16.msra.mxu0 %v3693
    %3888 = vmatprep.mubr.bf16.mxu0 %v3252
    %3889 = vmatmul.mubr.bf16.gmra.mrb[0].mxu0 %v3251
    %v3890 = vpop.f32.mrb[0].mxu0
    %v3891 = vadd.f32 %v3850, %v3890
    %v3892 = vpop.f32.mrb[0].mxu0
    %v3893 = vpop.f32.mrb[0].mxu0
    %v3894 = vadd.f32 %v3853, %v3893
    %v3895 = vpop.f32.mrb[0].mxu0
    %3896 = vdwg.mxu0
    %3897 = vmatprep.subr.bf16.mxu0 0
    %3898 = vmatpush1.bf16.msra.mxu0 %v3694
    %3899 = vmatprep.subr.bf16.mxu0 0
    %3900 = vmatpush1.bf16.msra.mxu0 %v3695
    %3901 = vmatprep.subr.bf16.mxu0 0
    %3902 = vmatpush1.bf16.msra.mxu0 %v3696
    %3903 = vmatprep.subr.bf16.mxu0 0
    %3904 = vmatpush1.bf16.msra.mxu0 %v3697
    %3905 = vmatprep.subr.bf16.mxu0 0
    %3906 = vmatpush1.bf16.msra.mxu0 %v3698
    %3907 = vmatprep.subr.bf16.mxu0 0
    %3908 = vmatpush1.bf16.msra.mxu0 %v3699
    %3909 = vmatprep.subr.bf16.mxu0 0
    %3910 = vmatpush1.bf16.msra.mxu0 %v3700
    %3911 = vmatprep.subr.bf16.mxu0 0
    %3912 = vmatpush1.bf16.msra.mxu0 %v3701
    %3913 = vmatprep.subr.bf16.mxu0 0
    %3914 = vmatpush1.bf16.msra.mxu0 %v3702
    %3915 = vmatprep.subr.bf16.mxu0 0
    %3916 = vmatpush1.bf16.msra.mxu0 %v3703
    %3917 = vmatprep.subr.bf16.mxu0 0
    %3918 = vmatpush1.bf16.msra.mxu0 %v3704
    %3919 = vmatprep.subr.bf16.mxu0 0
    %3920 = vmatpush1.bf16.msra.mxu0 %v3705
    %3921 = vmatprep.subr.bf16.mxu0 0
    %3922 = vmatpush1.bf16.msra.mxu0 %v3706
    %3923 = vmatprep.subr.bf16.mxu0 0
    %3924 = vmatpush1.bf16.msra.mxu0 %v3707
    %3925 = vmatprep.subr.bf16.mxu0 0
    %3926 = vmatpush1.bf16.msra.mxu0 %v3708
    %3927 = vmatprep.subr.bf16.mxu0 0
    %3928 = vmatpush1.bf16.msra.mxu0 %v3709
    %3929 = vmatprep.mubr.bf16.mxu0 %v3254
    %3930 = vmatmul.mubr.bf16.gmra.mrb[0].mxu0 %v3253
    %v3931 = vpop.f32.mrb[0].mxu0
    %v3932 = vadd.f32 %v3891, %v3931
    %v3933 = vpop.f32.mrb[0].mxu0
    %v3934 = vpop.f32.mrb[0].mxu0
    %v3935 = vadd.f32 %v3894, %v3934
    %v3936 = vpop.f32.mrb[0].mxu0
    %3937 = vdwg.mxu0
    %v3938 = vmax.f32 %v3932, 0.0
    %v3939 = vmax.f32 %v3935, 0.0
    %v3940 = vpack.c.bf16 %v3939, %v3938
    %v3941 = vld [vmem:[%s7] sm:$0xf]
    %v3942 = vld [vmem:[%s7 + $0x4] sm:$0xf]
    %v3943 = vld [vmem:[%s7 + $0x8] sm:$0xf]
    %v3944 = vld [vmem:[%s7 + $0xc] sm:$0xf]
    %v3945 = vld [vmem:[%s7 + $0x10] sm:$0xf]
    %v3946 = vld [vmem:[%s7 + $0x14] sm:$0xf]
    %v3947 = vld [vmem:[%s7 + $0x18] sm:$0xf]
    %v3948 = vld [vmem:[%s7 + $0x1c] sm:$0xf]
    %v3949 = vld [vmem:[%s7 + $0x20] sm:$0xf]
    %v3950 = vld [vmem:[%s7 + $0x24] sm:$0xf]
    %v3951 = vld [vmem:[%s7 + $0x28] sm:$0xf]
    %v3952 = vld [vmem:[%s7 + $0x2c] sm:$0xf]
    %v3953 = vld [vmem:[%s7 + $0x30] sm:$0xf]
    %v3954 = vld [vmem:[%s7 + $0x34] sm:$0xf]
    %v3955 = vld [vmem:[%s7 + $0x38] sm:$0xf]
    %v3956 = vld [vmem:[%s7 + $0x3c] sm:$0xf]
    %v3957 = vld [vmem:[%s8] sm:$0x1]
    %v3959 = vlaneseq
    %v3960 = vshrl.u32 %v3959, 7
    %v3961 = vsub.s32 0, %v3960
    %v3962 = vrot.slane %v3957, %v3961
    %v3980 = vunpack.c.l.b16 %v3941
    %v3981 = vunpack.c.l.b16 %v3942
    %v3982 = vunpack.c.l.b16 %v3943
    %v3983 = vunpack.c.l.b16 %v3944
    %v3984 = vunpack.c.l.b16 %v3945
    %v3985 = vunpack.c.l.b16 %v3946
    %v3986 = vunpack.c.l.b16 %v3947
    %v3987 = vunpack.c.l.b16 %v3948
    %v3988 = vunpack.c.l.b16 %v3949
    %v3989 = vunpack.c.l.b16 %v3950
    %v3990 = vunpack.c.l.b16 %v3951
    %v3991 = vunpack.c.l.b16 %v3952
    %v3992 = vunpack.c.l.b16 %v3953
    %v3993 = vunpack.c.l.b16 %v3954
    %v3994 = vunpack.c.l.b16 %v3955
    %v3995 = vunpack.c.l.b16 %v3956
    %v3996 = vpack.c.b16 %v3981, %v3980
    %v3997 = vpack.c.b16 %v3983, %v3982
    %v3998 = vpack.c.b16 %v3985, %v3984
    %v3999 = vpack.c.b16 %v3987, %v3986
    %v4000 = vpack.c.b16 %v3989, %v3988
    %v4001 = vpack.c.b16 %v3991, %v3990
    %v4002 = vpack.c.b16 %v3993, %v3992
    %v4003 = vpack.c.b16 %v3995, %v3994
    %4012 = vmatprep.subr.bf16.mxu0 0
    %4013 = vmatpush1.bf16.msra.mxu0 %v3996
    %4014 = vmatprep.subr.bf16.mxu0 0
    %4015 = vmatpush1.bf16.msra.mxu0 %v3997
    %4016 = vmatprep.subr.bf16.mxu0 0
    %4017 = vmatpush1.bf16.msra.mxu0 %v3998
    %4018 = vmatprep.subr.bf16.mxu0 0
    %4019 = vmatpush1.bf16.msra.mxu0 %v3999
    %4020 = vmatprep.subr.bf16.mxu0 0
    %4021 = vmatpush1.bf16.msra.mxu0 %v4000
    %4022 = vmatprep.subr.bf16.mxu0 0
    %4023 = vmatpush1.bf16.msra.mxu0 %v4001
    %4024 = vmatprep.subr.bf16.mxu0 0
    %4025 = vmatpush1.bf16.msra.mxu0 %v4002
    %4026 = vmatprep.subr.bf16.mxu0 0
    %4027 = vmatpush1.bf16.msra.mxu0 %v4003
    %4028 = vmatprep.subr.bf16.mxu0 0
    %4029 = vmatpush1.bf16.msra.mxu0 0
    %4030 = vmatprep.subr.bf16.mxu0 0
    %4031 = vmatpush1.bf16.msra.mxu0 0
    %4032 = vmatprep.subr.bf16.mxu0 0
    %4033 = vmatpush1.bf16.msra.mxu0 0
    %4034 = vmatprep.subr.bf16.mxu0 0
    %4035 = vmatpush1.bf16.msra.mxu0 0
    %4036 = vmatprep.subr.bf16.mxu0 0
    %4037 = vmatpush1.bf16.msra.mxu0 0
    %4038 = vmatprep.subr.bf16.mxu0 0
    %4039 = vmatpush1.bf16.msra.mxu0 0
    %4040 = vmatprep.subr.bf16.mxu0 0
    %4041 = vmatpush1.bf16.msra.mxu0 0
    %4042 = vmatprep.subr.bf16.mxu0 0
    %4043 = vmatpush1.bf16.msra.mxu0 0
    %4044 = vmatprep.mubr.bf16.mxu0 0
    %4045 = vmatmul.mubr.bf16.gmra.mrb[0].mxu0 %v3940
    %v4046 = vpop.f32.mrb[0].mxu0
    %v4047 = vadd.f32 %v3962, %v4046
    %v4048 = vpop.f32.mrb[0].mxu0
    %v4049 = vpop.f32.mrb[0].mxu0
    %v4050 = vadd.f32 %v3962, %v4049
    %v4051 = vpop.f32.mrb[0].mxu0
    %4052 = vdwg.mxu0
    %4053 = vmax.xlane.f32.xlu0 %v4047
    %v4054 = vpop.xlane.xlu0 %4053
    %4055 = vmax.xlane.f32.xlu0 %v4050
    %v4056 = vpop.xlane.xlu0 %4055
    %v4057 = vsub.f32 %v4047, %v4054
    %v4058 = vsub.f32 %v4050, %v4056
    %v4059 = vmul.f32 %v4057, 1.442695
    %v4060 = vpow.pop %v4059
    %v4061 = vmul.f32 %v4058, 1.442695
    %v4062 = vpow.pop %v4061
    %4063 = vadd.xlane.f32.xlu0 %v4060
    %v4064 = vpop.xlane.xlu0 %4063
    %4065 = vadd.xlane.f32.xlu0 %v4062
    %v4066 = vpop.xlane.xlu0 %4065
    %v4067 = vrcp.pop %v4064
    %v4068 = vrcp.pop %v4066
    %v4069 = vmul.f32 %v4060, %v4067
    %v4070 = vmul.f32 %v4062, %v4068
    %4071 = vst [vmem:[%s9] sm:$0xff] %v4069
    %4072 = vst [vmem:[%s9 + $0x8] sm:$0xff] %v4070
    // Predicated region
    $region46: #{mnistnet_forward.1} parent=1 // pred_check
      _
    $region47: #{mnistnet_forward.1} parent=1 // pred_check_branch
      %4074 = sbr.rel (0) target = $region49
    $region48: #{mnistnet_forward.1} parent=1 // pred_region
      _
    $region49: #{mnistnet_forward.1} parent=1 // pred_fallthru
      _
    // Predicated region
    $region50: #{mnistnet_forward.1} parent=1 // pred_check
      _
    $region51: #{mnistnet_forward.1} parent=1 // pred_check_branch
      %4076 = sbr.rel (0) target = $region53
    $region52: #{mnistnet_forward.1} parent=1 // pred_region
      _
    $region53: #{mnistnet_forward.1} parent=1 // pred_fallthru
      _
    %4077 = vsyncpa [#allocation3], 1
    %4078 = vsyncpa [#allocation5], 1

</llo_original>
